<compile_context>
chip_gen: v5e
topology: v5e:2x2
jax: 0.10.0
libtpu: 0.0.40
codegen_flags: <defaults>
</compile_context>

<pallas_src>
import jax
import jax.numpy as jnp
from jax import lax
from jax.experimental import pallas as pl
from jax.experimental.pallas import tpu as pltpu

# ----- small synthetic shapes consistent with the module -----
B, S, D = 2, 8, 32        # batch, context length, transformer width
V = 64                    # vocab size (real CLIP: 49408 -> keep table in HBM then)
H = 4                     # attention heads
DH = D // H               # head dim
F_HID = 4 * D             # MLP hidden width
N_LAYERS = 2              # transformer layers

NEG_INF = -1e30           # safe: diagonal is always unmasked (fp32 scores)
SCALE = 1.0 / float(DH) ** 0.5
EPS = 1e-5


def _layer_norm(x, gamma, beta, eps=EPS):
    mu = jnp.mean(x, axis=-1, keepdims=True)
    var = jnp.mean((x - mu) ** 2, axis=-1, keepdims=True)
    return (x - mu) * lax.rsqrt(var + eps) * gamma + beta


# ----------------------------- fused kernel -----------------------------

def text_encoder_kernel(prompts_ref,                        # (B*S, 1) int32
                        table_ref, pos_ref,                 # (V, D) bf16, (S, D) f32
                        ln1_g_ref, ln1_b_ref,               # (L, 1, D) f32
                        wqkv_ref, bqkv_ref,                 # (L, 3, H, D, DH) bf16, (L, 3, H, 1, DH) f32
                        wo_ref, bo_ref,                     # (L, H, DH, D) bf16, (L, 1, D) f32
                        ln2_g_ref, ln2_b_ref,               # (L, 1, D) f32
                        w1_ref, b1_ref,                     # (L, D, F) bf16, (L, 1, F) f32
                        w2_ref, b2_ref,                     # (L, F, D) bf16, (L, 1, D) f32
                        lnf_g_ref, lnf_b_ref,               # (1, D) f32
                        out_ref):                           # (B*S, D) f32
    # ---- token embedding: vectorized one-hot gather on the MXU ----
    tok = prompts_ref[...]                                            # (B*S, 1) int32
    iota_v = lax.broadcasted_iota(jnp.int32, (B * S, V), 1)
    onehot = (iota_v == tok).astype(jnp.bfloat16)                     # (B*S, V)
    emb = jnp.dot(onehot, table_ref[...],
                  preferred_element_type=jnp.float32)                 # (B*S, D) f32

    # ---- positional embedding (broadcast over batch) ----
    x = (emb.reshape(B, S, D) + pos_ref[...]).reshape(B * S, D)       # (B*S, D) f32

    # ---- causal mask as an additive bias, built once ----
    row = lax.broadcasted_iota(jnp.int32, (S, S), 0)
    col = lax.broadcasted_iota(jnp.int32, (S, S), 1)
    mask_bias = jnp.where(col <= row, 0.0, NEG_INF).astype(jnp.float32)[None]  # (1, S, S)

    # ---- transformer: N_LAYERS x CLIP ResidualAttentionBlock ----
    for l in range(N_LAYERS):                                         # static, weights indexed statically
        # --- attention sub-block: x = x + MHA(ln_1(x)) ---
        h_in = _layer_norm(x, ln1_g_ref[l], ln1_b_ref[l]).astype(jnp.bfloat16)

        attn = None
        for hh in range(H):                                           # per-head weights: no lane slices/concats
            q = jnp.dot(h_in, wqkv_ref[l, 0, hh],
                        preferred_element_type=jnp.float32) + bqkv_ref[l, 0, hh]   # (B*S, DH)
            k = jnp.dot(h_in, wqkv_ref[l, 1, hh],
                        preferred_element_type=jnp.float32) + bqkv_ref[l, 1, hh]
            v = jnp.dot(h_in, wqkv_ref[l, 2, hh],
                        preferred_element_type=jnp.float32) + bqkv_ref[l, 2, hh]
            # NOTE: 1/sqrt(DH) is pre-folded into wqkv[:,0]/bqkv[:,0] at init time.
            qb = q.reshape(B, S, DH)
            kb = k.reshape(B, S, DH)
            vb = v.reshape(B, S, DH)

            sc = jnp.einsum('bqd,bkd->bqk', qb, kb,
                            preferred_element_type=jnp.float32) + mask_bias        # (B, S, S)
            sc = sc - jnp.max(sc, axis=-1, keepdims=True)
            p = jnp.exp(sc)
            p = p * pl.reciprocal(jnp.sum(p, axis=-1, keepdims=True), approx=True)
            ao = jnp.einsum('bqk,bkd->bqd', p, vb,
                            preferred_element_type=jnp.float32)                    # (B, S, DH)

            contrib = jnp.dot(ao.reshape(B * S, DH).astype(jnp.bfloat16),
                              wo_ref[l, hh],
                              preferred_element_type=jnp.float32)                  # (B*S, D)
            attn = contrib if hh == 0 else attn + contrib

        x = x + attn + bo_ref[l]

        # --- MLP sub-block: x = x + mlp(ln_2(x)), QuickGELU ---
        h2 = _layer_norm(x, ln2_g_ref[l], ln2_b_ref[l]).astype(jnp.bfloat16)
        m = jnp.dot(h2, w1_ref[l], preferred_element_type=jnp.float32) + b1_ref[l]
        m = m * jax.nn.sigmoid(1.702 * m)                              # QuickGELU (fp32)
        m = jnp.dot(m.astype(jnp.bfloat16), w2_ref[l],
                    preferred_element_type=jnp.float32) + b2_ref[l]
        x = x + m

    # ---- ln_final; fp16 cast happens once, in the wrapper ----
    out_ref[...] = _layer_norm(x, lnf_g_ref[...], lnf_b_ref[...])


# ----------------------------- parameters -----------------------------

def init_params(key):
    ks = iter(jax.random.split(key, 8))

    def nrm(shape, scale=0.02):
        return scale * jax.random.normal(next(ks), shape, dtype=jnp.float32)

    # Per-head packing of the standard (D, D) projections:
    #   wqkv[l, i, h] == W_i[:, h*DH:(h+1)*DH],  wo[l, h] == W_o[h*DH:(h+1)*DH, :]
    wqkv = nrm((N_LAYERS, 3, H, D, DH))
    wqkv = wqkv.at[:, 0].multiply(SCALE)            # fold 1/sqrt(DH) into q projection
    bqkv = jnp.zeros((N_LAYERS, 3, H, 1, DH), jnp.float32)   # (q-slice scale folded too; zero here)

    return {
        # bf16 MXU operands
        "token_embedding": nrm((V, D)).astype(jnp.bfloat16),
        "wqkv": wqkv.astype(jnp.bfloat16),
        "wo":   nrm((N_LAYERS, H, DH, D)).astype(jnp.bfloat16),
        "w1":   nrm((N_LAYERS, D, F_HID)).astype(jnp.bfloat16),
        "w2":   nrm((N_LAYERS, F_HID, D)).astype(jnp.bfloat16),
        # fp32 small params
        "positional_embedding": nrm((S, D), 0.01),
        "bqkv": bqkv,
        "bo":   jnp.zeros((N_LAYERS, 1, D), jnp.float32),
        "b1":   jnp.zeros((N_LAYERS, 1, F_HID), jnp.float32),
        "b2":   jnp.zeros((N_LAYERS, 1, D), jnp.float32),
        "ln1_g": jnp.ones((N_LAYERS, 1, D), jnp.float32),
        "ln1_b": jnp.zeros((N_LAYERS, 1, D), jnp.float32),
        "ln2_g": jnp.ones((N_LAYERS, 1, D), jnp.float32),
        "ln2_b": jnp.zeros((N_LAYERS, 1, D), jnp.float32),
        "lnf_g": jnp.ones((1, D), jnp.float32),
        "lnf_b": jnp.zeros((1, D), jnp.float32),
    }


# ----------------------------- forward (single pallas_call) -----------------------------

@jax.jit
def text_encoder_forward(prompts, params):
    prompts2d = prompts.reshape(B * S, 1).astype(jnp.int32)

    vmem_specs = [pl.BlockSpec(memory_space=pltpu.MemorySpace.VMEM) for _ in range(17)]

    out_flat = pl.pallas_call(
        text_encoder_kernel,
        out_shape=jax.ShapeDtypeStruct((B * S, D), jnp.float32),
        in_specs=vmem_specs,
        out_specs=pl.BlockSpec(memory_space=pltpu.MemorySpace.VMEM),
    )(prompts2d,
      params["token_embedding"], params["positional_embedding"],
      params["ln1_g"], params["ln1_b"],
      params["wqkv"], params["bqkv"],
      params["wo"], params["bo"],
      params["ln2_g"], params["ln2_b"],
      params["w1"], params["b1"],
      params["w2"], params["b2"],
      params["lnf_g"], params["lnf_b"])

    # (B*S, D) row-major is already (B, S, D) contiguous; single fp16 cast here.
    return out_flat.reshape(B, S, D).astype(jnp.float16)


if __name__ == "__main__":
    key = jax.random.PRNGKey(0)
    pkey, tkey = jax.random.split(key)
    params = init_params(pkey)
    prompts = jax.random.randint(tkey, (B, S), 0, V, dtype=jnp.int32)

    out = text_encoder_forward(prompts, params)
    out = jax.block_until_ready(out)

    assert out.shape == (B, S, D), out.shape
    assert out.dtype == jnp.float16, out.dtype
    assert bool(jnp.all(jnp.isfinite(out.astype(jnp.float32))))
    print("KERNEL_OK")
</pallas_src>

<mosaic_0001>
module attributes {stable_mosaic.version = 11 : i64} {
  func.func @text_encoder_kernel(%arg0: memref<16x1xi32, #tpu.memory_space<vmem>>, %arg1: memref<64x32xbf16, #tpu.memory_space<vmem>>, %arg2: memref<8x32xf32, #tpu.memory_space<vmem>>, %arg3: memref<2x1x32xf32, #tpu.memory_space<vmem>>, %arg4: memref<2x1x32xf32, #tpu.memory_space<vmem>>, %arg5: memref<2x3x4x32x8xbf16, #tpu.memory_space<vmem>>, %arg6: memref<2x3x4x1x8xf32, #tpu.memory_space<vmem>>, %arg7: memref<2x4x8x32xbf16, #tpu.memory_space<vmem>>, %arg8: memref<2x1x32xf32, #tpu.memory_space<vmem>>, %arg9: memref<2x1x32xf32, #tpu.memory_space<vmem>>, %arg10: memref<2x1x32xf32, #tpu.memory_space<vmem>>, %arg11: memref<2x32x128xbf16, #tpu.memory_space<vmem>>, %arg12: memref<2x1x128xf32, #tpu.memory_space<vmem>>, %arg13: memref<2x128x32xbf16, #tpu.memory_space<vmem>>, %arg14: memref<2x1x32xf32, #tpu.memory_space<vmem>>, %arg15: memref<1x32xf32, #tpu.memory_space<vmem>>, %arg16: memref<1x32xf32, #tpu.memory_space<vmem>>, %arg17: memref<16x32xf32, #tpu.memory_space<vmem>>) attributes {dimension_semantics = [], scalar_prefetch = 0 : i64, scratch_operands = 0 : i64, tpu.core_type = #tpu.core_type<tc>} {
    %c0 = arith.constant 0 : index
    %c0_0 = arith.constant 0 : index
    %0 = vector.load %arg0[%c0, %c0_0] : memref<16x1xi32, #tpu.memory_space<vmem>>, vector<16x1xi32>
    %1 = tpu.iota {dimensions = array<i32: 1>} : vector<16x64xi32>
    %2 = vector.broadcast %0 : vector<16x1xi32> to vector<16x64xi32>
    %3 = arith.cmpi eq, %1, %2 : vector<16x64xi32>
    %4 = arith.extui %3 : vector<16x64xi1> to vector<16x64xi32>
    %5 = arith.sitofp %4 : vector<16x64xi32> to vector<16x64xf32>
    %6 = arith.truncf %5 : vector<16x64xf32> to vector<16x64xbf16>
    %c0_1 = arith.constant 0 : index
    %c0_2 = arith.constant 0 : index
    %7 = vector.load %arg1[%c0_1, %c0_2] : memref<64x32xbf16, #tpu.memory_space<vmem>>, vector<64x32xbf16>
    %cst = arith.constant dense<0.000000e+00> : vector<16x32xf32>
    %8 = tpu.matmul %6, %7, %cst {dimension_numbers = #tpu.dot_dimension_numbers<[1], [0], [0], [1], [0, 0, 1, 1], [], []>} : vector<16x64xbf16>, vector<64x32xbf16>, vector<16x32xf32> -> vector<16x32xf32>
    %9 = vector.shape_cast %8 : vector<16x32xf32> to vector<2x8x32xf32>
    %c0_3 = arith.constant 0 : index
    %c0_4 = arith.constant 0 : index
    %10 = vector.load %arg2[%c0_3, %c0_4] : memref<8x32xf32, #tpu.memory_space<vmem>>, vector<8x32xf32>
    %11 = vector.shape_cast %10 : vector<8x32xf32> to vector<1x8x32xf32>
    %12 = vector.broadcast %11 : vector<1x8x32xf32> to vector<2x8x32xf32>
    %13 = arith.addf %9, %12 : vector<2x8x32xf32>
    %14 = vector.shape_cast %13 : vector<2x8x32xf32> to vector<16x32xf32>
    %15 = tpu.iota {dimensions = array<i32: 0>} : vector<8x8xi32>
    %16 = tpu.iota {dimensions = array<i32: 1>} : vector<8x8xi32>
    %17 = arith.cmpi sle, %16, %15 : vector<8x8xi32>
    %cst_5 = arith.constant 0.000000e+00 : f32
    %cst_6 = arith.constant -1.000000e+30 : f32
    %18 = vector.broadcast %cst_5 : f32 to vector<8x8xf32>
    %19 = vector.broadcast %cst_6 : f32 to vector<8x8xf32>
    %20 = arith.select %17, %18, %19 : vector<8x8xi1>, vector<8x8xf32>
    %21 = vector.shape_cast %20 : vector<8x8xf32> to vector<1x8x8xf32>
    %c0_7 = arith.constant 0 : index
    %c0_8 = arith.constant 0 : index
    %c0_9 = arith.constant 0 : index
    %22 = vector.load %arg3[%c0_7, %c0_8, %c0_9] : memref<2x1x32xf32, #tpu.memory_space<vmem>>, vector<1x1x32xf32>
    %23 = vector.shape_cast %22 : vector<1x1x32xf32> to vector<1x32xf32>
    %c0_10 = arith.constant 0 : index
    %c0_11 = arith.constant 0 : index
    %c0_12 = arith.constant 0 : index
    %24 = vector.load %arg4[%c0_10, %c0_11, %c0_12] : memref<2x1x32xf32, #tpu.memory_space<vmem>>, vector<1x1x32xf32>
    %25 = vector.shape_cast %24 : vector<1x1x32xf32> to vector<1x32xf32>
    %cst_13 = arith.constant dense<0.000000e+00> : vector<16xf32>
    %26 = vector.multi_reduction <add>, %14, %cst_13 [1] : vector<16x32xf32> to vector<16xf32>
    %27 = vector.shape_cast %26 : vector<16xf32> to vector<16x1xf32>
    %cst_14 = arith.constant 3.200000e+01 : f32
    %28 = vector.broadcast %cst_14 : f32 to vector<16x1xf32>
    %29 = arith.divf %27, %28 : vector<16x1xf32>
    %30 = vector.broadcast %29 : vector<16x1xf32> to vector<16x32xf32>
    %31 = arith.subf %14, %30 : vector<16x32xf32>
    %32 = arith.mulf %31, %31 : vector<16x32xf32>
    %cst_15 = arith.constant dense<0.000000e+00> : vector<16xf32>
    %33 = vector.multi_reduction <add>, %32, %cst_15 [1] : vector<16x32xf32> to vector<16xf32>
    %34 = vector.shape_cast %33 : vector<16xf32> to vector<16x1xf32>
    %cst_16 = arith.constant 3.200000e+01 : f32
    %35 = vector.broadcast %cst_16 : f32 to vector<16x1xf32>
    %36 = arith.divf %34, %35 : vector<16x1xf32>
    %37 = vector.broadcast %29 : vector<16x1xf32> to vector<16x32xf32>
    %38 = arith.subf %14, %37 : vector<16x32xf32>
    %cst_17 = arith.constant 9.99999974E-6 : f32
    %39 = vector.broadcast %cst_17 : f32 to vector<16x1xf32>
    %40 = arith.addf %36, %39 : vector<16x1xf32>
    %41 = math.rsqrt %40 : vector<16x1xf32>
    %42 = vector.broadcast %41 : vector<16x1xf32> to vector<16x32xf32>
    %43 = arith.mulf %38, %42 : vector<16x32xf32>
    %44 = vector.broadcast %23 : vector<1x32xf32> to vector<16x32xf32>
    %45 = arith.mulf %43, %44 : vector<16x32xf32>
    %46 = vector.broadcast %25 : vector<1x32xf32> to vector<16x32xf32>
    %47 = arith.addf %45, %46 : vector<16x32xf32>
    %48 = arith.truncf %47 : vector<16x32xf32> to vector<16x32xbf16>
    %c0_18 = arith.constant 0 : index
    %c0_19 = arith.constant 0 : index
    %c0_20 = arith.constant 0 : index
    %c0_21 = arith.constant 0 : index
    %c0_22 = arith.constant 0 : index
    %49 = vector.load %arg5[%c0_18, %c0_19, %c0_20, %c0_21, %c0_22] : memref<2x3x4x32x8xbf16, #tpu.memory_space<vmem>>, vector<1x1x1x32x8xbf16>
    %50 = vector.shape_cast %49 : vector<1x1x1x32x8xbf16> to vector<32x8xbf16>
    %cst_23 = arith.constant dense<0.000000e+00> : vector<16x8xf32>
    %51 = tpu.matmul %48, %50, %cst_23 {dimension_numbers = #tpu.dot_dimension_numbers<[1], [0], [0], [1], [0, 0, 1, 1], [], []>} : vector<16x32xbf16>, vector<32x8xbf16>, vector<16x8xf32> -> vector<16x8xf32>
    %c0_24 = arith.constant 0 : index
    %c0_25 = arith.constant 0 : index
    %c0_26 = arith.constant 0 : index
    %c0_27 = arith.constant 0 : index
    %c0_28 = arith.constant 0 : index
    %52 = vector.load %arg6[%c0_24, %c0_25, %c0_26, %c0_27, %c0_28] : memref<2x3x4x1x8xf32, #tpu.memory_space<vmem>>, vector<1x1x1x1x8xf32>
    %53 = vector.shape_cast %52 : vector<1x1x1x1x8xf32> to vector<1x8xf32>
    %54 = vector.broadcast %53 : vector<1x8xf32> to vector<16x8xf32>
    %55 = arith.addf %51, %54 : vector<16x8xf32>
    %c0_29 = arith.constant 0 : index
    %c1 = arith.constant 1 : index
    %c0_30 = arith.constant 0 : index
    %c0_31 = arith.constant 0 : index
    %c0_32 = arith.constant 0 : index
    %56 = vector.load %arg5[%c0_29, %c1, %c0_30, %c0_31, %c0_32] : memref<2x3x4x32x8xbf16, #tpu.memory_space<vmem>>, vector<1x1x1x32x8xbf16>
    %57 = vector.shape_cast %56 : vector<1x1x1x32x8xbf16> to vector<32x8xbf16>
    %cst_33 = arith.constant dense<0.000000e+00> : vector<16x8xf32>
    %58 = tpu.matmul %48, %57, %cst_33 {dimension_numbers = #tpu.dot_dimension_numbers<[1], [0], [0], [1], [0, 0, 1, 1], [], []>} : vector<16x32xbf16>, vector<32x8xbf16>, vector<16x8xf32> -> vector<16x8xf32>
    %c0_34 = arith.constant 0 : index
    %c1_35 = arith.constant 1 : index
    %c0_36 = arith.constant 0 : index
    %c0_37 = arith.constant 0 : index
    %c0_38 = arith.constant 0 : index
    %59 = vector.load %arg6[%c0_34, %c1_35, %c0_36, %c0_37, %c0_38] : memref<2x3x4x1x8xf32, #tpu.memory_space<vmem>>, vector<1x1x1x1x8xf32>
    %60 = vector.shape_cast %59 : vector<1x1x1x1x8xf32> to vector<1x8xf32>
    %61 = vector.broadcast %60 : vector<1x8xf32> to vector<16x8xf32>
    %62 = arith.addf %58, %61 : vector<16x8xf32>
    %c0_39 = arith.constant 0 : index
    %c2 = arith.constant 2 : index
    %c0_40 = arith.constant 0 : index
    %c0_41 = arith.constant 0 : index
    %c0_42 = arith.constant 0 : index
    %63 = vector.load %arg5[%c0_39, %c2, %c0_40, %c0_41, %c0_42] : memref<2x3x4x32x8xbf16, #tpu.memory_space<vmem>>, vector<1x1x1x32x8xbf16>
    %64 = vector.shape_cast %63 : vector<1x1x1x32x8xbf16> to vector<32x8xbf16>
    %cst_43 = arith.constant dense<0.000000e+00> : vector<16x8xf32>
    %65 = tpu.matmul %48, %64, %cst_43 {dimension_numbers = #tpu.dot_dimension_numbers<[1], [0], [0], [1], [0, 0, 1, 1], [], []>} : vector<16x32xbf16>, vector<32x8xbf16>, vector<16x8xf32> -> vector<16x8xf32>
    %c0_44 = arith.constant 0 : index
    %c2_45 = arith.constant 2 : index
    %c0_46 = arith.constant 0 : index
    %c0_47 = arith.constant 0 : index
    %c0_48 = arith.constant 0 : index
    %66 = vector.load %arg6[%c0_44, %c2_45, %c0_46, %c0_47, %c0_48] : memref<2x3x4x1x8xf32, #tpu.memory_space<vmem>>, vector<1x1x1x1x8xf32>
    %67 = vector.shape_cast %66 : vector<1x1x1x1x8xf32> to vector<1x8xf32>
    %68 = vector.broadcast %67 : vector<1x8xf32> to vector<16x8xf32>
    %69 = arith.addf %65, %68 : vector<16x8xf32>
    %70 = vector.shape_cast %55 : vector<16x8xf32> to vector<2x8x8xf32>
    %71 = vector.shape_cast %62 : vector<16x8xf32> to vector<2x8x8xf32>
    %72 = vector.shape_cast %69 : vector<16x8xf32> to vector<2x8x8xf32>
    "tpu.trace_start"() <{level = 10 : i32, message = "bqd,bkd->bqk"}> : () -> ()
    %cst_49 = arith.constant dense<0.000000e+00> : vector<2x8x8xf32>
    %73 = tpu.matmul %70, %71, %cst_49 {dimension_numbers = #tpu.dot_dimension_numbers<[2], [2], [1], [1], [0, 0, 0, 1, 1, 1], [0], [0]>} : vector<2x8x8xf32>, vector<2x8x8xf32>, vector<2x8x8xf32> -> vector<2x8x8xf32>
    "tpu.trace_stop"() : () -> ()
    %74 = vector.broadcast %21 : vector<1x8x8xf32> to vector<2x8x8xf32>
    %75 = arith.addf %73, %74 : vector<2x8x8xf32>
    %cst_50 = arith.constant dense<0xFF800000> : vector<2x8xf32>
    %76 = vector.multi_reduction <maximumf>, %75, %cst_50 [2] : vector<2x8x8xf32> to vector<2x8xf32>
    %77 = vector.shape_cast %76 : vector<2x8xf32> to vector<2x8x1xf32>
    %78 = vector.broadcast %77 : vector<2x8x1xf32> to vector<2x8x8xf32>
    %79 = arith.subf %75, %78 : vector<2x8x8xf32>
    %80 = math.exp %79 : vector<2x8x8xf32>
    %cst_51 = arith.constant dense<0.000000e+00> : vector<2x8xf32>
    %81 = vector.multi_reduction <add>, %80, %cst_51 [2] : vector<2x8x8xf32> to vector<2x8xf32>
    %82 = vector.shape_cast %81 : vector<2x8xf32> to vector<2x8x1xf32>
    %83 = tpu.reciprocal %82 {approx = true} : vector<2x8x1xf32> -> vector<2x8x1xf32>
    %84 = vector.broadcast %83 : vector<2x8x1xf32> to vector<2x8x8xf32>
    %85 = arith.mulf %80, %84 : vector<2x8x8xf32>
    "tpu.trace_start"() <{level = 10 : i32, message = "bqk,bkd->bqd"}> : () -> ()
    %cst_52 = arith.constant dense<0.000000e+00> : vector<2x8x8xf32>
    %86 = tpu.matmul %85, %72, %cst_52 {dimension_numbers = #tpu.dot_dimension_numbers<[2], [1], [1], [2], [0, 0, 0, 1, 1, 2], [0], [0]>} : vector<2x8x8xf32>, vector<2x8x8xf32>, vector<2x8x8xf32> -> vector<2x8x8xf32>
    "tpu.trace_stop"() : () -> ()
    %87 = vector.shape_cast %86 : vector<2x8x8xf32> to vector<16x8xf32>
    %88 = arith.truncf %87 : vector<16x8xf32> to vector<16x8xbf16>
    %c0_53 = arith.constant 0 : index
    %c0_54 = arith.constant 0 : index
    %c0_55 = arith.constant 0 : index
    %c0_56 = arith.constant 0 : index
    %89 = vector.load %arg7[%c0_53, %c0_54, %c0_55, %c0_56] : memref<2x4x8x32xbf16, #tpu.memory_space<vmem>>, vector<1x1x8x32xbf16>
    %90 = vector.shape_cast %89 : vector<1x1x8x32xbf16> to vector<8x32xbf16>
    %cst_57 = arith.constant dense<0.000000e+00> : vector<16x32xf32>
    %91 = tpu.matmul %88, %90, %cst_57 {dimension_numbers = #tpu.dot_dimension_numbers<[1], [0], [0], [1], [0, 0, 1, 1], [], []>} : vector<16x8xbf16>, vector<8x32xbf16>, vector<16x32xf32> -> vector<16x32xf32>
    %c0_58 = arith.constant 0 : index
    %c0_59 = arith.constant 0 : index
    %c1_60 = arith.constant 1 : index
    %c0_61 = arith.constant 0 : index
    %c0_62 = arith.constant 0 : index
    %92 = vector.load %arg5[%c0_58, %c0_59, %c1_60, %c0_61, %c0_62] : memref<2x3x4x32x8xbf16, #tpu.memory_space<vmem>>, vector<1x1x1x32x8xbf16>
    %93 = vector.shape_cast %92 : vector<1x1x1x32x8xbf16> to vector<32x8xbf16>
    %cst_63 = arith.constant dense<0.000000e+00> : vector<16x8xf32>
    %94 = tpu.matmul %48, %93, %cst_63 {dimension_numbers = #tpu.dot_dimension_numbers<[1], [0], [0], [1], [0, 0, 1, 1], [], []>} : vector<16x32xbf16>, vector<32x8xbf16>, vector<16x8xf32> -> vector<16x8xf32>
    %c0_64 = arith.constant 0 : index
    %c0_65 = arith.constant 0 : index
    %c1_66 = arith.constant 1 : index
    %c0_67 = arith.constant 0 : index
    %c0_68 = arith.constant 0 : index
    %95 = vector.load %arg6[%c0_64, %c0_65, %c1_66, %c0_67, %c0_68] : memref<2x3x4x1x8xf32, #tpu.memory_space<vmem>>, vector<1x1x1x1x8xf32>
    %96 = vector.shape_cast %95 : vector<1x1x1x1x8xf32> to vector<1x8xf32>
    %97 = vector.broadcast %96 : vector<1x8xf32> to vector<16x8xf32>
    %98 = arith.addf %94, %97 : vector<16x8xf32>
    %c0_69 = arith.constant 0 : index
    %c1_70 = arith.constant 1 : index
    %c1_71 = arith.constant 1 : index
    %c0_72 = arith.constant 0 : index
    %c0_73 = arith.constant 0 : index
    %99 = vector.load %arg5[%c0_69, %c1_70, %c1_71, %c0_72, %c0_73] : memref<2x3x4x32x8xbf16, #tpu.memory_space<vmem>>, vector<1x1x1x32x8xbf16>
    %100 = vector.shape_cast %99 : vector<1x1x1x32x8xbf16> to vector<32x8xbf16>
    %cst_74 = arith.constant dense<0.000000e+00> : vector<16x8xf32>
    %101 = tpu.matmul %48, %100, %cst_74 {dimension_numbers = #tpu.dot_dimension_numbers<[1], [0], [0], [1], [0, 0, 1, 1], [], []>} : vector<16x32xbf16>, vector<32x8xbf16>, vector<16x8xf32> -> vector<16x8xf32>
    %c0_75 = arith.constant 0 : index
    %c1_76 = arith.constant 1 : index
    %c1_77 = arith.constant 1 : index
    %c0_78 = arith.constant 0 : index
    %c0_79 = arith.constant 0 : index
    %102 = vector.load %arg6[%c0_75, %c1_76, %c1_77, %c0_78, %c0_79] : memref<2x3x4x1x8xf32, #tpu.memory_space<vmem>>, vector<1x1x1x1x8xf32>
    %103 = vector.shape_cast %102 : vector<1x1x1x1x8xf32> to vector<1x8xf32>
    %104 = vector.broadcast %103 : vector<1x8xf32> to vector<16x8xf32>
    %105 = arith.addf %101, %104 : vector<16x8xf32>
    %c0_80 = arith.constant 0 : index
    %c2_81 = arith.constant 2 : index
    %c1_82 = arith.constant 1 : index
    %c0_83 = arith.constant 0 : index
    %c0_84 = arith.constant 0 : index
    %106 = vector.load %arg5[%c0_80, %c2_81, %c1_82, %c0_83, %c0_84] : memref<2x3x4x32x8xbf16, #tpu.memory_space<vmem>>, vector<1x1x1x32x8xbf16>
    %107 = vector.shape_cast %106 : vector<1x1x1x32x8xbf16> to vector<32x8xbf16>
    %cst_85 = arith.constant dense<0.000000e+00> : vector<16x8xf32>
    %108 = tpu.matmul %48, %107, %cst_85 {dimension_numbers = #tpu.dot_dimension_numbers<[1], [0], [0], [1], [0, 0, 1, 1], [], []>} : vector<16x32xbf16>, vector<32x8xbf16>, vector<16x8xf32> -> vector<16x8xf32>
    %c0_86 = arith.constant 0 : index
    %c2_87 = arith.constant 2 : index
    %c1_88 = arith.constant 1 : index
    %c0_89 = arith.constant 0 : index
    %c0_90 = arith.constant 0 : index
    %109 = vector.load %arg6[%c0_86, %c2_87, %c1_88, %c0_89, %c0_90] : memref<2x3x4x1x8xf32, #tpu.memory_space<vmem>>, vector<1x1x1x1x8xf32>
    %110 = vector.shape_cast %109 : vector<1x1x1x1x8xf32> to vector<1x8xf32>
    %111 = vector.broadcast %110 : vector<1x8xf32> to vector<16x8xf32>
    %112 = arith.addf %108, %111 : vector<16x8xf32>
    %113 = vector.shape_cast %98 : vector<16x8xf32> to vector<2x8x8xf32>
    %114 = vector.shape_cast %105 : vector<16x8xf32> to vector<2x8x8xf32>
    %115 = vector.shape_cast %112 : vector<16x8xf32> to vector<2x8x8xf32>
    "tpu.trace_start"() <{level = 10 : i32, message = "bqd,bkd->bqk"}> : () -> ()
    %cst_91 = arith.constant dense<0.000000e+00> : vector<2x8x8xf32>
    %116 = tpu.matmul %113, %114, %cst_91 {dimension_numbers = #tpu.dot_dimension_numbers<[2], [2], [1], [1], [0, 0, 0, 1, 1, 1], [0], [0]>} : vector<2x8x8xf32>, vector<2x8x8xf32>, vector<2x8x8xf32> -> vector<2x8x8xf32>
    "tpu.trace_stop"() : () -> ()
    %117 = vector.broadcast %21 : vector<1x8x8xf32> to vector<2x8x8xf32>
    %118 = arith.addf %116, %117 : vector<2x8x8xf32>
    %cst_92 = arith.constant dense<0xFF800000> : vector<2x8xf32>
    %119 = vector.multi_reduction <maximumf>, %118, %cst_92 [2] : vector<2x8x8xf32> to vector<2x8xf32>
    %120 = vector.shape_cast %119 : vector<2x8xf32> to vector<2x8x1xf32>
    %121 = vector.broadcast %120 : vector<2x8x1xf32> to vector<2x8x8xf32>
    %122 = arith.subf %118, %121 : vector<2x8x8xf32>
    %123 = math.exp %122 : vector<2x8x8xf32>
    %cst_93 = arith.constant dense<0.000000e+00> : vector<2x8xf32>
    %124 = vector.multi_reduction <add>, %123, %cst_93 [2] : vector<2x8x8xf32> to vector<2x8xf32>
    %125 = vector.shape_cast %124 : vector<2x8xf32> to vector<2x8x1xf32>
    %126 = tpu.reciprocal %125 {approx = true} : vector<2x8x1xf32> -> vector<2x8x1xf32>
    %127 = vector.broadcast %126 : vector<2x8x1xf32> to vector<2x8x8xf32>
    %128 = arith.mulf %123, %127 : vector<2x8x8xf32>
    "tpu.trace_start"() <{level = 10 : i32, message = "bqk,bkd->bqd"}> : () -> ()
    %cst_94 = arith.constant dense<0.000000e+00> : vector<2x8x8xf32>
    %129 = tpu.matmul %128, %115, %cst_94 {dimension_numbers = #tpu.dot_dimension_numbers<[2], [1], [1], [2], [0, 0, 0, 1, 1, 2], [0], [0]>} : vector<2x8x8xf32>, vector<2x8x8xf32>, vector<2x8x8xf32> -> vector<2x8x8xf32>
    "tpu.trace_stop"() : () -> ()
    %130 = vector.shape_cast %129 : vector<2x8x8xf32> to vector<16x8xf32>
    %131 = arith.truncf %130 : vector<16x8xf32> to vector<16x8xbf16>
    %c0_95 = arith.constant 0 : index
    %c1_96 = arith.constant 1 : index
    %c0_97 = arith.constant 0 : index
    %c0_98 = arith.constant 0 : index
    %132 = vector.load %arg7[%c0_95, %c1_96, %c0_97, %c0_98] : memref<2x4x8x32xbf16, #tpu.memory_space<vmem>>, vector<1x1x8x32xbf16>
    %133 = vector.shape_cast %132 : vector<1x1x8x32xbf16> to vector<8x32xbf16>
    %cst_99 = arith.constant dense<0.000000e+00> : vector<16x32xf32>
    %134 = tpu.matmul %131, %133, %cst_99 {dimension_numbers = #tpu.dot_dimension_numbers<[1], [0], [0], [1], [0, 0, 1, 1], [], []>} : vector<16x8xbf16>, vector<8x32xbf16>, vector<16x32xf32> -> vector<16x32xf32>
    %135 = arith.addf %91, %134 : vector<16x32xf32>
    %c0_100 = arith.constant 0 : index
    %c0_101 = arith.constant 0 : index
    %c2_102 = arith.constant 2 : index
    %c0_103 = arith.constant 0 : index
    %c0_104 = arith.constant 0 : index
    %136 = vector.load %arg5[%c0_100, %c0_101, %c2_102, %c0_103, %c0_104] : memref<2x3x4x32x8xbf16, #tpu.memory_space<vmem>>, vector<1x1x1x32x8xbf16>
    %137 = vector.shape_cast %136 : vector<1x1x1x32x8xbf16> to vector<32x8xbf16>
    %cst_105 = arith.constant dense<0.000000e+00> : vector<16x8xf32>
    %138 = tpu.matmul %48, %137, %cst_105 {dimension_numbers = #tpu.dot_dimension_numbers<[1], [0], [0], [1], [0, 0, 1, 1], [], []>} : vector<16x32xbf16>, vector<32x8xbf16>, vector<16x8xf32> -> vector<16x8xf32>
    %c0_106 = arith.constant 0 : index
    %c0_107 = arith.constant 0 : index
    %c2_108 = arith.constant 2 : index
    %c0_109 = arith.constant 0 : index
    %c0_110 = arith.constant 0 : index
    %139 = vector.load %arg6[%c0_106, %c0_107, %c2_108, %c0_109, %c0_110] : memref<2x3x4x1x8xf32, #tpu.memory_space<vmem>>, vector<1x1x1x1x8xf32>
    %140 = vector.shape_cast %139 : vector<1x1x1x1x8xf32> to vector<1x8xf32>
    %141 = vector.broadcast %140 : vector<1x8xf32> to vector<16x8xf32>
    %142 = arith.addf %138, %141 : vector<16x8xf32>
    %c0_111 = arith.constant 0 : index
    %c1_112 = arith.constant 1 : index
    %c2_113 = arith.constant 2 : index
    %c0_114 = arith.constant 0 : index
    %c0_115 = arith.constant 0 : index
    %143 = vector.load %arg5[%c0_111, %c1_112, %c2_113, %c0_114, %c0_115] : memref<2x3x4x32x8xbf16, #tpu.memory_space<vmem>>, vector<1x1x1x32x8xbf16>
    %144 = vector.shape_cast %143 : vector<1x1x1x32x8xbf16> to vector<32x8xbf16>
    %cst_116 = arith.constant dense<0.000000e+00> : vector<16x8xf32>
    %145 = tpu.matmul %48, %144, %cst_116 {dimension_numbers = #tpu.dot_dimension_numbers<[1], [0], [0], [1], [0, 0, 1, 1], [], []>} : vector<16x32xbf16>, vector<32x8xbf16>, vector<16x8xf32> -> vector<16x8xf32>
    %c0_117 = arith.constant 0 : index
    %c1_118 = arith.constant 1 : index
    %c2_119 = arith.constant 2 : index
    %c0_120 = arith.constant 0 : index
    %c0_121 = arith.constant 0 : index
    %146 = vector.load %arg6[%c0_117, %c1_118, %c2_119, %c0_120, %c0_121] : memref<2x3x4x1x8xf32, #tpu.memory_space<vmem>>, vector<1x1x1x1x8xf32>
    %147 = vector.shape_cast %146 : vector<1x1x1x1x8xf32> to vector<1x8xf32>
    %148 = vector.broadcast %147 : vector<1x8xf32> to vector<16x8xf32>
    %149 = arith.addf %145, %148 : vector<16x8xf32>
    %c0_122 = arith.constant 0 : index
    %c2_123 = arith.constant 2 : index
    %c2_124 = arith.constant 2 : index
    %c0_125 = arith.constant 0 : index
    %c0_126 = arith.constant 0 : index
    %150 = vector.load %arg5[%c0_122, %c2_123, %c2_124, %c0_125, %c0_126] : memref<2x3x4x32x8xbf16, #tpu.memory_space<vmem>>, vector<1x1x1x32x8xbf16>
    %151 = vector.shape_cast %150 : vector<1x1x1x32x8xbf16> to vector<32x8xbf16>
    %cst_127 = arith.constant dense<0.000000e+00> : vector<16x8xf32>
    %152 = tpu.matmul %48, %151, %cst_127 {dimension_numbers = #tpu.dot_dimension_numbers<[1], [0], [0], [1], [0, 0, 1, 1], [], []>} : vector<16x32xbf16>, vector<32x8xbf16>, vector<16x8xf32> -> vector<16x8xf32>
    %c0_128 = arith.constant 0 : index
    %c2_129 = arith.constant 2 : index
    %c2_130 = arith.constant 2 : index
    %c0_131 = arith.constant 0 : index
    %c0_132 = arith.constant 0 : index
    %153 = vector.load %arg6[%c0_128, %c2_129, %c2_130, %c0_131, %c0_132] : memref<2x3x4x1x8xf32, #tpu.memory_space<vmem>>, vector<1x1x1x1x8xf32>
    %154 = vector.shape_cast %153 : vector<1x1x1x1x8xf32> to vector<1x8xf32>
    %155 = vector.broadcast %154 : vector<1x8xf32> to vector<16x8xf32>
    %156 = arith.addf %152, %155 : vector<16x8xf32>
    %157 = vector.shape_cast %142 : vector<16x8xf32> to vector<2x8x8xf32>
    %158 = vector.shape_cast %149 : vector<16x8xf32> to vector<2x8x8xf32>
    %159 = vector.shape_cast %156 : vector<16x8xf32> to vector<2x8x8xf32>
    "tpu.trace_start"() <{level = 10 : i32, message = "bqd,bkd->bqk"}> : () -> ()
    %cst_133 = arith.constant dense<0.000000e+00> : vector<2x8x8xf32>
    %160 = tpu.matmul %157, %158, %cst_133 {dimension_numbers = #tpu.dot_dimension_numbers<[2], [2], [1], [1], [0, 0, 0, 1, 1, 1], [0], [0]>} : vector<2x8x8xf32>, vector<2x8x8xf32>, vector<2x8x8xf32> -> vector<2x8x8xf32>
    "tpu.trace_stop"() : () -> ()
    %161 = vector.broadcast %21 : vector<1x8x8xf32> to vector<2x8x8xf32>
    %162 = arith.addf %160, %161 : vector<2x8x8xf32>
    %cst_134 = arith.constant dense<0xFF800000> : vector<2x8xf32>
    %163 = vector.multi_reduction <maximumf>, %162, %cst_134 [2] : vector<2x8x8xf32> to vector<2x8xf32>
    %164 = vector.shape_cast %163 : vector<2x8xf32> to vector<2x8x1xf32>
    %165 = vector.broadcast %164 : vector<2x8x1xf32> to vector<2x8x8xf32>
    %166 = arith.subf %162, %165 : vector<2x8x8xf32>
    %167 = math.exp %166 : vector<2x8x8xf32>
    %cst_135 = arith.constant dense<0.000000e+00> : vector<2x8xf32>
    %168 = vector.multi_reduction <add>, %167, %cst_135 [2] : vector<2x8x8xf32> to vector<2x8xf32>
    %169 = vector.shape_cast %168 : vector<2x8xf32> to vector<2x8x1xf32>
    %170 = tpu.reciprocal %169 {approx = true} : vector<2x8x1xf32> -> vector<2x8x1xf32>
    %171 = vector.broadcast %170 : vector<2x8x1xf32> to vector<2x8x8xf32>
    %172 = arith.mulf %167, %171 : vector<2x8x8xf32>
    "tpu.trace_start"() <{level = 10 : i32, message = "bqk,bkd->bqd"}> : () -> ()
    %cst_136 = arith.constant dense<0.000000e+00> : vector<2x8x8xf32>
    %173 = tpu.matmul %172, %159, %cst_136 {dimension_numbers = #tpu.dot_dimension_numbers<[2], [1], [1], [2], [0, 0, 0, 1, 1, 2], [0], [0]>} : vector<2x8x8xf32>, vector<2x8x8xf32>, vector<2x8x8xf32> -> vector<2x8x8xf32>
    "tpu.trace_stop"() : () -> ()
    %174 = vector.shape_cast %173 : vector<2x8x8xf32> to vector<16x8xf32>
    %175 = arith.truncf %174 : vector<16x8xf32> to vector<16x8xbf16>
    %c0_137 = arith.constant 0 : index
    %c2_138 = arith.constant 2 : index
    %c0_139 = arith.constant 0 : index
    %c0_140 = arith.constant 0 : index
    %176 = vector.load %arg7[%c0_137, %c2_138, %c0_139, %c0_140] : memref<2x4x8x32xbf16, #tpu.memory_space<vmem>>, vector<1x1x8x32xbf16>
    %177 = vector.shape_cast %176 : vector<1x1x8x32xbf16> to vector<8x32xbf16>
    %cst_141 = arith.constant dense<0.000000e+00> : vector<16x32xf32>
    %178 = tpu.matmul %175, %177, %cst_141 {dimension_numbers = #tpu.dot_dimension_numbers<[1], [0], [0], [1], [0, 0, 1, 1], [], []>} : vector<16x8xbf16>, vector<8x32xbf16>, vector<16x32xf32> -> vector<16x32xf32>
    %179 = arith.addf %135, %178 : vector<16x32xf32>
    %c0_142 = arith.constant 0 : index
    %c0_143 = arith.constant 0 : index
    %c3 = arith.constant 3 : index
    %c0_144 = arith.constant 0 : index
    %c0_145 = arith.constant 0 : index
    %180 = vector.load %arg5[%c0_142, %c0_143, %c3, %c0_144, %c0_145] : memref<2x3x4x32x8xbf16, #tpu.memory_space<vmem>>, vector<1x1x1x32x8xbf16>
    %181 = vector.shape_cast %180 : vector<1x1x1x32x8xbf16> to vector<32x8xbf16>
    %cst_146 = arith.constant dense<0.000000e+00> : vector<16x8xf32>
    %182 = tpu.matmul %48, %181, %cst_146 {dimension_numbers = #tpu.dot_dimension_numbers<[1], [0], [0], [1], [0, 0, 1, 1], [], []>} : vector<16x32xbf16>, vector<32x8xbf16>, vector<16x8xf32> -> vector<16x8xf32>
    %c0_147 = arith.constant 0 : index
    %c0_148 = arith.constant 0 : index
    %c3_149 = arith.constant 3 : index
    %c0_150 = arith.constant 0 : index
    %c0_151 = arith.constant 0 : index
    %183 = vector.load %arg6[%c0_147, %c0_148, %c3_149, %c0_150, %c0_151] : memref<2x3x4x1x8xf32, #tpu.memory_space<vmem>>, vector<1x1x1x1x8xf32>
    %184 = vector.shape_cast %183 : vector<1x1x1x1x8xf32> to vector<1x8xf32>
    %185 = vector.broadcast %184 : vector<1x8xf32> to vector<16x8xf32>
    %186 = arith.addf %182, %185 : vector<16x8xf32>
    %c0_152 = arith.constant 0 : index
    %c1_153 = arith.constant 1 : index
    %c3_154 = arith.constant 3 : index
    %c0_155 = arith.constant 0 : index
    %c0_156 = arith.constant 0 : index
    %187 = vector.load %arg5[%c0_152, %c1_153, %c3_154, %c0_155, %c0_156] : memref<2x3x4x32x8xbf16, #tpu.memory_space<vmem>>, vector<1x1x1x32x8xbf16>
    %188 = vector.shape_cast %187 : vector<1x1x1x32x8xbf16> to vector<32x8xbf16>
    %cst_157 = arith.constant dense<0.000000e+00> : vector<16x8xf32>
    %189 = tpu.matmul %48, %188, %cst_157 {dimension_numbers = #tpu.dot_dimension_numbers<[1], [0], [0], [1], [0, 0, 1, 1], [], []>} : vector<16x32xbf16>, vector<32x8xbf16>, vector<16x8xf32> -> vector<16x8xf32>
    %c0_158 = arith.constant 0 : index
    %c1_159 = arith.constant 1 : index
    %c3_160 = arith.constant 3 : index
    %c0_161 = arith.constant 0 : index
    %c0_162 = arith.constant 0 : index
    %190 = vector.load %arg6[%c0_158, %c1_159, %c3_160, %c0_161, %c0_162] : memref<2x3x4x1x8xf32, #tpu.memory_space<vmem>>, vector<1x1x1x1x8xf32>
    %191 = vector.shape_cast %190 : vector<1x1x1x1x8xf32> to vector<1x8xf32>
    %192 = vector.broadcast %191 : vector<1x8xf32> to vector<16x8xf32>
    %193 = arith.addf %189, %192 : vector<16x8xf32>
    %c0_163 = arith.constant 0 : index
    %c2_164 = arith.constant 2 : index
    %c3_165 = arith.constant 3 : index
    %c0_166 = arith.constant 0 : index
    %c0_167 = arith.constant 0 : index
    %194 = vector.load %arg5[%c0_163, %c2_164, %c3_165, %c0_166, %c0_167] : memref<2x3x4x32x8xbf16, #tpu.memory_space<vmem>>, vector<1x1x1x32x8xbf16>
    %195 = vector.shape_cast %194 : vector<1x1x1x32x8xbf16> to vector<32x8xbf16>
    %cst_168 = arith.constant dense<0.000000e+00> : vector<16x8xf32>
    %196 = tpu.matmul %48, %195, %cst_168 {dimension_numbers = #tpu.dot_dimension_numbers<[1], [0], [0], [1], [0, 0, 1, 1], [], []>} : vector<16x32xbf16>, vector<32x8xbf16>, vector<16x8xf32> -> vector<16x8xf32>
    %c0_169 = arith.constant 0 : index
    %c2_170 = arith.constant 2 : index
    %c3_171 = arith.constant 3 : index
    %c0_172 = arith.constant 0 : index
    %c0_173 = arith.constant 0 : index
    %197 = vector.load %arg6[%c0_169, %c2_170, %c3_171, %c0_172, %c0_173] : memref<2x3x4x1x8xf32, #tpu.memory_space<vmem>>, vector<1x1x1x1x8xf32>
    %198 = vector.shape_cast %197 : vector<1x1x1x1x8xf32> to vector<1x8xf32>
    %199 = vector.broadcast %198 : vector<1x8xf32> to vector<16x8xf32>
    %200 = arith.addf %196, %199 : vector<16x8xf32>
    %201 = vector.shape_cast %186 : vector<16x8xf32> to vector<2x8x8xf32>
    %202 = vector.shape_cast %193 : vector<16x8xf32> to vector<2x8x8xf32>
    %203 = vector.shape_cast %200 : vector<16x8xf32> to vector<2x8x8xf32>
    "tpu.trace_start"() <{level = 10 : i32, message = "bqd,bkd->bqk"}> : () -> ()
    %cst_174 = arith.constant dense<0.000000e+00> : vector<2x8x8xf32>
    %204 = tpu.matmul %201, %202, %cst_174 {dimension_numbers = #tpu.dot_dimension_numbers<[2], [2], [1], [1], [0, 0, 0, 1, 1, 1], [0], [0]>} : vector<2x8x8xf32>, vector<2x8x8xf32>, vector<2x8x8xf32> -> vector<2x8x8xf32>
    "tpu.trace_stop"() : () -> ()
    %205 = vector.broadcast %21 : vector<1x8x8xf32> to vector<2x8x8xf32>
    %206 = arith.addf %204, %205 : vector<2x8x8xf32>
    %cst_175 = arith.constant dense<0xFF800000> : vector<2x8xf32>
    %207 = vector.multi_reduction <maximumf>, %206, %cst_175 [2] : vector<2x8x8xf32> to vector<2x8xf32>
    %208 = vector.shape_cast %207 : vector<2x8xf32> to vector<2x8x1xf32>
    %209 = vector.broadcast %208 : vector<2x8x1xf32> to vector<2x8x8xf32>
    %210 = arith.subf %206, %209 : vector<2x8x8xf32>
    %211 = math.exp %210 : vector<2x8x8xf32>
    %cst_176 = arith.constant dense<0.000000e+00> : vector<2x8xf32>
    %212 = vector.multi_reduction <add>, %211, %cst_176 [2] : vector<2x8x8xf32> to vector<2x8xf32>
    %213 = vector.shape_cast %212 : vector<2x8xf32> to vector<2x8x1xf32>
    %214 = tpu.reciprocal %213 {approx = true} : vector<2x8x1xf32> -> vector<2x8x1xf32>
    %215 = vector.broadcast %214 : vector<2x8x1xf32> to vector<2x8x8xf32>
    %216 = arith.mulf %211, %215 : vector<2x8x8xf32>
    "tpu.trace_start"() <{level = 10 : i32, message = "bqk,bkd->bqd"}> : () -> ()
    %cst_177 = arith.constant dense<0.000000e+00> : vector<2x8x8xf32>
    %217 = tpu.matmul %216, %203, %cst_177 {dimension_numbers = #tpu.dot_dimension_numbers<[2], [1], [1], [2], [0, 0, 0, 1, 1, 2], [0], [0]>} : vector<2x8x8xf32>, vector<2x8x8xf32>, vector<2x8x8xf32> -> vector<2x8x8xf32>
    "tpu.trace_stop"() : () -> ()
    %218 = vector.shape_cast %217 : vector<2x8x8xf32> to vector<16x8xf32>
    %219 = arith.truncf %218 : vector<16x8xf32> to vector<16x8xbf16>
    %c0_178 = arith.constant 0 : index
    %c3_179 = arith.constant 3 : index
    %c0_180 = arith.constant 0 : index
    %c0_181 = arith.constant 0 : index
    %220 = vector.load %arg7[%c0_178, %c3_179, %c0_180, %c0_181] : memref<2x4x8x32xbf16, #tpu.memory_space<vmem>>, vector<1x1x8x32xbf16>
    %221 = vector.shape_cast %220 : vector<1x1x8x32xbf16> to vector<8x32xbf16>
    %cst_182 = arith.constant dense<0.000000e+00> : vector<16x32xf32>
    %222 = tpu.matmul %219, %221, %cst_182 {dimension_numbers = #tpu.dot_dimension_numbers<[1], [0], [0], [1], [0, 0, 1, 1], [], []>} : vector<16x8xbf16>, vector<8x32xbf16>, vector<16x32xf32> -> vector<16x32xf32>
    %223 = arith.addf %179, %222 : vector<16x32xf32>
    %224 = arith.addf %14, %223 : vector<16x32xf32>
    %c0_183 = arith.constant 0 : index
    %c0_184 = arith.constant 0 : index
    %c0_185 = arith.constant 0 : index
    %225 = vector.load %arg8[%c0_183, %c0_184, %c0_185] : memref<2x1x32xf32, #tpu.memory_space<vmem>>, vector<1x1x32xf32>
    %226 = vector.shape_cast %225 : vector<1x1x32xf32> to vector<1x32xf32>
    %227 = vector.broadcast %226 : vector<1x32xf32> to vector<16x32xf32>
    %228 = arith.addf %224, %227 : vector<16x32xf32>
    %c0_186 = arith.constant 0 : index
    %c0_187 = arith.constant 0 : index
    %c0_188 = arith.constant 0 : index
    %229 = vector.load %arg9[%c0_186, %c0_187, %c0_188] : memref<2x1x32xf32, #tpu.memory_space<vmem>>, vector<1x1x32xf32>
    %230 = vector.shape_cast %229 : vector<1x1x32xf32> to vector<1x32xf32>
    %c0_189 = arith.constant 0 : index
    %c0_190 = arith.constant 0 : index
    %c0_191 = arith.constant 0 : index
    %231 = vector.load %arg10[%c0_189, %c0_190, %c0_191] : memref<2x1x32xf32, #tpu.memory_space<vmem>>, vector<1x1x32xf32>
    %232 = vector.shape_cast %231 : vector<1x1x32xf32> to vector<1x32xf32>
    %cst_192 = arith.constant dense<0.000000e+00> : vector<16xf32>
    %233 = vector.multi_reduction <add>, %228, %cst_192 [1] : vector<16x32xf32> to vector<16xf32>
    %234 = vector.shape_cast %233 : vector<16xf32> to vector<16x1xf32>
    %cst_193 = arith.constant 3.200000e+01 : f32
    %235 = vector.broadcast %cst_193 : f32 to vector<16x1xf32>
    %236 = arith.divf %234, %235 : vector<16x1xf32>
    %237 = vector.broadcast %236 : vector<16x1xf32> to vector<16x32xf32>
    %238 = arith.subf %228, %237 : vector<16x32xf32>
    %239 = arith.mulf %238, %238 : vector<16x32xf32>
    %cst_194 = arith.constant dense<0.000000e+00> : vector<16xf32>
    %240 = vector.multi_reduction <add>, %239, %cst_194 [1] : vector<16x32xf32> to vector<16xf32>
    %241 = vector.shape_cast %240 : vector<16xf32> to vector<16x1xf32>
    %cst_195 = arith.constant 3.200000e+01 : f32
    %242 = vector.broadcast %cst_195 : f32 to vector<16x1xf32>
    %243 = arith.divf %241, %242 : vector<16x1xf32>
    %244 = vector.broadcast %236 : vector<16x1xf32> to vector<16x32xf32>
    %245 = arith.subf %228, %244 : vector<16x32xf32>
    %cst_196 = arith.constant 9.99999974E-6 : f32
    %246 = vector.broadcast %cst_196 : f32 to vector<16x1xf32>
    %247 = arith.addf %243, %246 : vector<16x1xf32>
    %248 = math.rsqrt %247 : vector<16x1xf32>
    %249 = vector.broadcast %248 : vector<16x1xf32> to vector<16x32xf32>
    %250 = arith.mulf %245, %249 : vector<16x32xf32>
    %251 = vector.broadcast %230 : vector<1x32xf32> to vector<16x32xf32>
    %252 = arith.mulf %250, %251 : vector<16x32xf32>
    %253 = vector.broadcast %232 : vector<1x32xf32> to vector<16x32xf32>
    %254 = arith.addf %252, %253 : vector<16x32xf32>
    %255 = arith.truncf %254 : vector<16x32xf32> to vector<16x32xbf16>
    %c0_197 = arith.constant 0 : index
    %c0_198 = arith.constant 0 : index
    %c0_199 = arith.constant 0 : index
    %256 = vector.load %arg11[%c0_197, %c0_198, %c0_199] : memref<2x32x128xbf16, #tpu.memory_space<vmem>>, vector<1x32x128xbf16>
    %257 = vector.shape_cast %256 : vector<1x32x128xbf16> to vector<32x128xbf16>
    %cst_200 = arith.constant dense<0.000000e+00> : vector<16x128xf32>
    %258 = tpu.matmul %255, %257, %cst_200 {dimension_numbers = #tpu.dot_dimension_numbers<[1], [0], [0], [1], [0, 0, 1, 1], [], []>} : vector<16x32xbf16>, vector<32x128xbf16>, vector<16x128xf32> -> vector<16x128xf32>
    %c0_201 = arith.constant 0 : index
    %c0_202 = arith.constant 0 : index
    %c0_203 = arith.constant 0 : index
    %259 = vector.load %arg12[%c0_201, %c0_202, %c0_203] : memref<2x1x128xf32, #tpu.memory_space<vmem>>, vector<1x1x128xf32>
    %260 = vector.shape_cast %259 : vector<1x1x128xf32> to vector<1x128xf32>
    %261 = vector.broadcast %260 : vector<1x128xf32> to vector<16x128xf32>
    %262 = arith.addf %258, %261 : vector<16x128xf32>
    %cst_204 = arith.constant 1.702000e+00 : f32
    %263 = vector.broadcast %cst_204 : f32 to vector<16x128xf32>
    %264 = arith.mulf %263, %262 : vector<16x128xf32>
    %265 = arith.negf %264 : vector<16x128xf32>
    %266 = math.exp %265 : vector<16x128xf32>
    %cst_205 = arith.constant 1.000000e+00 : f32
    %267 = vector.broadcast %cst_205 : f32 to vector<16x128xf32>
    %268 = arith.addf %267, %266 : vector<16x128xf32>
    %269 = arith.divf %267, %268 : vector<16x128xf32>
    %270 = arith.mulf %262, %269 : vector<16x128xf32>
    %271 = arith.truncf %270 : vector<16x128xf32> to vector<16x128xbf16>
    %c0_206 = arith.constant 0 : index
    %c0_207 = arith.constant 0 : index
    %c0_208 = arith.constant 0 : index
    %272 = vector.load %arg13[%c0_206, %c0_207, %c0_208] : memref<2x128x32xbf16, #tpu.memory_space<vmem>>, vector<1x128x32xbf16>
    %273 = vector.shape_cast %272 : vector<1x128x32xbf16> to vector<128x32xbf16>
    %cst_209 = arith.constant dense<0.000000e+00> : vector<16x32xf32>
    %274 = tpu.matmul %271, %273, %cst_209 {dimension_numbers = #tpu.dot_dimension_numbers<[1], [0], [0], [1], [0, 0, 1, 1], [], []>} : vector<16x128xbf16>, vector<128x32xbf16>, vector<16x32xf32> -> vector<16x32xf32>
    %c0_210 = arith.constant 0 : index
    %c0_211 = arith.constant 0 : index
    %c0_212 = arith.constant 0 : index
    %275 = vector.load %arg14[%c0_210, %c0_211, %c0_212] : memref<2x1x32xf32, #tpu.memory_space<vmem>>, vector<1x1x32xf32>
    %276 = vector.shape_cast %275 : vector<1x1x32xf32> to vector<1x32xf32>
    %277 = vector.broadcast %276 : vector<1x32xf32> to vector<16x32xf32>
    %278 = arith.addf %274, %277 : vector<16x32xf32>
    %279 = arith.addf %228, %278 : vector<16x32xf32>
    %c1_213 = arith.constant 1 : index
    %c0_214 = arith.constant 0 : index
    %c0_215 = arith.constant 0 : index
    %280 = vector.load %arg3[%c1_213, %c0_214, %c0_215] : memref<2x1x32xf32, #tpu.memory_space<vmem>>, vector<1x1x32xf32>
    %281 = vector.shape_cast %280 : vector<1x1x32xf32> to vector<1x32xf32>
    %c1_216 = arith.constant 1 : index
    %c0_217 = arith.constant 0 : index
    %c0_218 = arith.constant 0 : index
    %282 = vector.load %arg4[%c1_216, %c0_217, %c0_218] : memref<2x1x32xf32, #tpu.memory_space<vmem>>, vector<1x1x32xf32>
    %283 = vector.shape_cast %282 : vector<1x1x32xf32> to vector<1x32xf32>
    %cst_219 = arith.constant dense<0.000000e+00> : vector<16xf32>
    %284 = vector.multi_reduction <add>, %279, %cst_219 [1] : vector<16x32xf32> to vector<16xf32>
    %285 = vector.shape_cast %284 : vector<16xf32> to vector<16x1xf32>
    %cst_220 = arith.constant 3.200000e+01 : f32
    %286 = vector.broadcast %cst_220 : f32 to vector<16x1xf32>
    %287 = arith.divf %285, %286 : vector<16x1xf32>
    %288 = vector.broadcast %287 : vector<16x1xf32> to vector<16x32xf32>
    %289 = arith.subf %279, %288 : vector<16x32xf32>
    %290 = arith.mulf %289, %289 : vector<16x32xf32>
    %cst_221 = arith.constant dense<0.000000e+00> : vector<16xf32>
    %291 = vector.multi_reduction <add>, %290, %cst_221 [1] : vector<16x32xf32> to vector<16xf32>
    %292 = vector.shape_cast %291 : vector<16xf32> to vector<16x1xf32>
    %cst_222 = arith.constant 3.200000e+01 : f32
    %293 = vector.broadcast %cst_222 : f32 to vector<16x1xf32>
    %294 = arith.divf %292, %293 : vector<16x1xf32>
    %295 = vector.broadcast %287 : vector<16x1xf32> to vector<16x32xf32>
    %296 = arith.subf %279, %295 : vector<16x32xf32>
    %cst_223 = arith.constant 9.99999974E-6 : f32
    %297 = vector.broadcast %cst_223 : f32 to vector<16x1xf32>
    %298 = arith.addf %294, %297 : vector<16x1xf32>
    %299 = math.rsqrt %298 : vector<16x1xf32>
    %300 = vector.broadcast %299 : vector<16x1xf32> to vector<16x32xf32>
    %301 = arith.mulf %296, %300 : vector<16x32xf32>
    %302 = vector.broadcast %281 : vector<1x32xf32> to vector<16x32xf32>
    %303 = arith.mulf %301, %302 : vector<16x32xf32>
    %304 = vector.broadcast %283 : vector<1x32xf32> to vector<16x32xf32>
    %305 = arith.addf %303, %304 : vector<16x32xf32>
    %306 = arith.truncf %305 : vector<16x32xf32> to vector<16x32xbf16>
    %c1_224 = arith.constant 1 : index
    %c0_225 = arith.constant 0 : index
    %c0_226 = arith.constant 0 : index
    %c0_227 = arith.constant 0 : index
    %c0_228 = arith.constant 0 : index
    %307 = vector.load %arg5[%c1_224, %c0_225, %c0_226, %c0_227, %c0_228] : memref<2x3x4x32x8xbf16, #tpu.memory_space<vmem>>, vector<1x1x1x32x8xbf16>
    %308 = vector.shape_cast %307 : vector<1x1x1x32x8xbf16> to vector<32x8xbf16>
    %cst_229 = arith.constant dense<0.000000e+00> : vector<16x8xf32>
    %309 = tpu.matmul %306, %308, %cst_229 {dimension_numbers = #tpu.dot_dimension_numbers<[1], [0], [0], [1], [0, 0, 1, 1], [], []>} : vector<16x32xbf16>, vector<32x8xbf16>, vector<16x8xf32> -> vector<16x8xf32>
    %c1_230 = arith.constant 1 : index
    %c0_231 = arith.constant 0 : index
    %c0_232 = arith.constant 0 : index
    %c0_233 = arith.constant 0 : index
    %c0_234 = arith.constant 0 : index
    %310 = vector.load %arg6[%c1_230, %c0_231, %c0_232, %c0_233, %c0_234] : memref<2x3x4x1x8xf32, #tpu.memory_space<vmem>>, vector<1x1x1x1x8xf32>
    %311 = vector.shape_cast %310 : vector<1x1x1x1x8xf32> to vector<1x8xf32>
    %312 = vector.broadcast %311 : vector<1x8xf32> to vector<16x8xf32>
    %313 = arith.addf %309, %312 : vector<16x8xf32>
    %c1_235 = arith.constant 1 : index
    %c1_236 = arith.constant 1 : index
    %c0_237 = arith.constant 0 : index
    %c0_238 = arith.constant 0 : index
    %c0_239 = arith.constant 0 : index
    %314 = vector.load %arg5[%c1_235, %c1_236, %c0_237, %c0_238, %c0_239] : memref<2x3x4x32x8xbf16, #tpu.memory_space<vmem>>, vector<1x1x1x32x8xbf16>
    %315 = vector.shape_cast %314 : vector<1x1x1x32x8xbf16> to vector<32x8xbf16>
    %cst_240 = arith.constant dense<0.000000e+00> : vector<16x8xf32>
    %316 = tpu.matmul %306, %315, %cst_240 {dimension_numbers = #tpu.dot_dimension_numbers<[1], [0], [0], [1], [0, 0, 1, 1], [], []>} : vector<16x32xbf16>, vector<32x8xbf16>, vector<16x8xf32> -> vector<16x8xf32>
    %c1_241 = arith.constant 1 : index
    %c1_242 = arith.constant 1 : index
    %c0_243 = arith.constant 0 : index
    %c0_244 = arith.constant 0 : index
    %c0_245 = arith.constant 0 : index
    %317 = vector.load %arg6[%c1_241, %c1_242, %c0_243, %c0_244, %c0_245] : memref<2x3x4x1x8xf32, #tpu.memory_space<vmem>>, vector<1x1x1x1x8xf32>
    %318 = vector.shape_cast %317 : vector<1x1x1x1x8xf32> to vector<1x8xf32>
    %319 = vector.broadcast %318 : vector<1x8xf32> to vector<16x8xf32>
    %320 = arith.addf %316, %319 : vector<16x8xf32>
    %c1_246 = arith.constant 1 : index
    %c2_247 = arith.constant 2 : index
    %c0_248 = arith.constant 0 : index
    %c0_249 = arith.constant 0 : index
    %c0_250 = arith.constant 0 : index
    %321 = vector.load %arg5[%c1_246, %c2_247, %c0_248, %c0_249, %c0_250] : memref<2x3x4x32x8xbf16, #tpu.memory_space<vmem>>, vector<1x1x1x32x8xbf16>
    %322 = vector.shape_cast %321 : vector<1x1x1x32x8xbf16> to vector<32x8xbf16>
    %cst_251 = arith.constant dense<0.000000e+00> : vector<16x8xf32>
    %323 = tpu.matmul %306, %322, %cst_251 {dimension_numbers = #tpu.dot_dimension_numbers<[1], [0], [0], [1], [0, 0, 1, 1], [], []>} : vector<16x32xbf16>, vector<32x8xbf16>, vector<16x8xf32> -> vector<16x8xf32>
    %c1_252 = arith.constant 1 : index
    %c2_253 = arith.constant 2 : index
    %c0_254 = arith.constant 0 : index
    %c0_255 = arith.constant 0 : index
    %c0_256 = arith.constant 0 : index
    %324 = vector.load %arg6[%c1_252, %c2_253, %c0_254, %c0_255, %c0_256] : memref<2x3x4x1x8xf32, #tpu.memory_space<vmem>>, vector<1x1x1x1x8xf32>
    %325 = vector.shape_cast %324 : vector<1x1x1x1x8xf32> to vector<1x8xf32>
    %326 = vector.broadcast %325 : vector<1x8xf32> to vector<16x8xf32>
    %327 = arith.addf %323, %326 : vector<16x8xf32>
    %328 = vector.shape_cast %313 : vector<16x8xf32> to vector<2x8x8xf32>
    %329 = vector.shape_cast %320 : vector<16x8xf32> to vector<2x8x8xf32>
    %330 = vector.shape_cast %327 : vector<16x8xf32> to vector<2x8x8xf32>
    "tpu.trace_start"() <{level = 10 : i32, message = "bqd,bkd->bqk"}> : () -> ()
    %cst_257 = arith.constant dense<0.000000e+00> : vector<2x8x8xf32>
    %331 = tpu.matmul %328, %329, %cst_257 {dimension_numbers = #tpu.dot_dimension_numbers<[2], [2], [1], [1], [0, 0, 0, 1, 1, 1], [0], [0]>} : vector<2x8x8xf32>, vector<2x8x8xf32>, vector<2x8x8xf32> -> vector<2x8x8xf32>
    "tpu.trace_stop"() : () -> ()
    %332 = vector.broadcast %21 : vector<1x8x8xf32> to vector<2x8x8xf32>
    %333 = arith.addf %331, %332 : vector<2x8x8xf32>
    %cst_258 = arith.constant dense<0xFF800000> : vector<2x8xf32>
    %334 = vector.multi_reduction <maximumf>, %333, %cst_258 [2] : vector<2x8x8xf32> to vector<2x8xf32>
    %335 = vector.shape_cast %334 : vector<2x8xf32> to vector<2x8x1xf32>
    %336 = vector.broadcast %335 : vector<2x8x1xf32> to vector<2x8x8xf32>
    %337 = arith.subf %333, %336 : vector<2x8x8xf32>
    %338 = math.exp %337 : vector<2x8x8xf32>
    %cst_259 = arith.constant dense<0.000000e+00> : vector<2x8xf32>
    %339 = vector.multi_reduction <add>, %338, %cst_259 [2] : vector<2x8x8xf32> to vector<2x8xf32>
    %340 = vector.shape_cast %339 : vector<2x8xf32> to vector<2x8x1xf32>
    %341 = tpu.reciprocal %340 {approx = true} : vector<2x8x1xf32> -> vector<2x8x1xf32>
    %342 = vector.broadcast %341 : vector<2x8x1xf32> to vector<2x8x8xf32>
    %343 = arith.mulf %338, %342 : vector<2x8x8xf32>
    "tpu.trace_start"() <{level = 10 : i32, message = "bqk,bkd->bqd"}> : () -> ()
    %cst_260 = arith.constant dense<0.000000e+00> : vector<2x8x8xf32>
    %344 = tpu.matmul %343, %330, %cst_260 {dimension_numbers = #tpu.dot_dimension_numbers<[2], [1], [1], [2], [0, 0, 0, 1, 1, 2], [0], [0]>} : vector<2x8x8xf32>, vector<2x8x8xf32>, vector<2x8x8xf32> -> vector<2x8x8xf32>
    "tpu.trace_stop"() : () -> ()
    %345 = vector.shape_cast %344 : vector<2x8x8xf32> to vector<16x8xf32>
    %346 = arith.truncf %345 : vector<16x8xf32> to vector<16x8xbf16>
    %c1_261 = arith.constant 1 : index
    %c0_262 = arith.constant 0 : index
    %c0_263 = arith.constant 0 : index
    %c0_264 = arith.constant 0 : index
    %347 = vector.load %arg7[%c1_261, %c0_262, %c0_263, %c0_264] : memref<2x4x8x32xbf16, #tpu.memory_space<vmem>>, vector<1x1x8x32xbf16>
    %348 = vector.shape_cast %347 : vector<1x1x8x32xbf16> to vector<8x32xbf16>
    %cst_265 = arith.constant dense<0.000000e+00> : vector<16x32xf32>
    %349 = tpu.matmul %346, %348, %cst_265 {dimension_numbers = #tpu.dot_dimension_numbers<[1], [0], [0], [1], [0, 0, 1, 1], [], []>} : vector<16x8xbf16>, vector<8x32xbf16>, vector<16x32xf32> -> vector<16x32xf32>
    %c1_266 = arith.constant 1 : index
    %c0_267 = arith.constant 0 : index
    %c1_268 = arith.constant 1 : index
    %c0_269 = arith.constant 0 : index
    %c0_270 = arith.constant 0 : index
    %350 = vector.load %arg5[%c1_266, %c0_267, %c1_268, %c0_269, %c0_270] : memref<2x3x4x32x8xbf16, #tpu.memory_space<vmem>>, vector<1x1x1x32x8xbf16>
    %351 = vector.shape_cast %350 : vector<1x1x1x32x8xbf16> to vector<32x8xbf16>
    %cst_271 = arith.constant dense<0.000000e+00> : vector<16x8xf32>
    %352 = tpu.matmul %306, %351, %cst_271 {dimension_numbers = #tpu.dot_dimension_numbers<[1], [0], [0], [1], [0, 0, 1, 1], [], []>} : vector<16x32xbf16>, vector<32x8xbf16>, vector<16x8xf32> -> vector<16x8xf32>
    %c1_272 = arith.constant 1 : index
    %c0_273 = arith.constant 0 : index
    %c1_274 = arith.constant 1 : index
    %c0_275 = arith.constant 0 : index
    %c0_276 = arith.constant 0 : index
    %353 = vector.load %arg6[%c1_272, %c0_273, %c1_274, %c0_275, %c0_276] : memref<2x3x4x1x8xf32, #tpu.memory_space<vmem>>, vector<1x1x1x1x8xf32>
    %354 = vector.shape_cast %353 : vector<1x1x1x1x8xf32> to vector<1x8xf32>
    %355 = vector.broadcast %354 : vector<1x8xf32> to vector<16x8xf32>
    %356 = arith.addf %352, %355 : vector<16x8xf32>
    %c1_277 = arith.constant 1 : index
    %c1_278 = arith.constant 1 : index
    %c1_279 = arith.constant 1 : index
    %c0_280 = arith.constant 0 : index
    %c0_281 = arith.constant 0 : index
    %357 = vector.load %arg5[%c1_277, %c1_278, %c1_279, %c0_280, %c0_281] : memref<2x3x4x32x8xbf16, #tpu.memory_space<vmem>>, vector<1x1x1x32x8xbf16>
    %358 = vector.shape_cast %357 : vector<1x1x1x32x8xbf16> to vector<32x8xbf16>
    %cst_282 = arith.constant dense<0.000000e+00> : vector<16x8xf32>
    %359 = tpu.matmul %306, %358, %cst_282 {dimension_numbers = #tpu.dot_dimension_numbers<[1], [0], [0], [1], [0, 0, 1, 1], [], []>} : vector<16x32xbf16>, vector<32x8xbf16>, vector<16x8xf32> -> vector<16x8xf32>
    %c1_283 = arith.constant 1 : index
    %c1_284 = arith.constant 1 : index
    %c1_285 = arith.constant 1 : index
    %c0_286 = arith.constant 0 : index
    %c0_287 = arith.constant 0 : index
    %360 = vector.load %arg6[%c1_283, %c1_284, %c1_285, %c0_286, %c0_287] : memref<2x3x4x1x8xf32, #tpu.memory_space<vmem>>, vector<1x1x1x1x8xf32>
    %361 = vector.shape_cast %360 : vector<1x1x1x1x8xf32> to vector<1x8xf32>
    %362 = vector.broadcast %361 : vector<1x8xf32> to vector<16x8xf32>
    %363 = arith.addf %359, %362 : vector<16x8xf32>
    %c1_288 = arith.constant 1 : index
    %c2_289 = arith.constant 2 : index
    %c1_290 = arith.constant 1 : index
    %c0_291 = arith.constant 0 : index
    %c0_292 = arith.constant 0 : index
    %364 = vector.load %arg5[%c1_288, %c2_289, %c1_290, %c0_291, %c0_292] : memref<2x3x4x32x8xbf16, #tpu.memory_space<vmem>>, vector<1x1x1x32x8xbf16>
    %365 = vector.shape_cast %364 : vector<1x1x1x32x8xbf16> to vector<32x8xbf16>
    %cst_293 = arith.constant dense<0.000000e+00> : vector<16x8xf32>
    %366 = tpu.matmul %306, %365, %cst_293 {dimension_numbers = #tpu.dot_dimension_numbers<[1], [0], [0], [1], [0, 0, 1, 1], [], []>} : vector<16x32xbf16>, vector<32x8xbf16>, vector<16x8xf32> -> vector<16x8xf32>
    %c1_294 = arith.constant 1 : index
    %c2_295 = arith.constant 2 : index
    %c1_296 = arith.constant 1 : index
    %c0_297 = arith.constant 0 : index
    %c0_298 = arith.constant 0 : index
    %367 = vector.load %arg6[%c1_294, %c2_295, %c1_296, %c0_297, %c0_298] : memref<2x3x4x1x8xf32, #tpu.memory_space<vmem>>, vector<1x1x1x1x8xf32>
    %368 = vector.shape_cast %367 : vector<1x1x1x1x8xf32> to vector<1x8xf32>
    %369 = vector.broadcast %368 : vector<1x8xf32> to vector<16x8xf32>
    %370 = arith.addf %366, %369 : vector<16x8xf32>
    %371 = vector.shape_cast %356 : vector<16x8xf32> to vector<2x8x8xf32>
    %372 = vector.shape_cast %363 : vector<16x8xf32> to vector<2x8x8xf32>
    %373 = vector.shape_cast %370 : vector<16x8xf32> to vector<2x8x8xf32>
    "tpu.trace_start"() <{level = 10 : i32, message = "bqd,bkd->bqk"}> : () -> ()
    %cst_299 = arith.constant dense<0.000000e+00> : vector<2x8x8xf32>
    %374 = tpu.matmul %371, %372, %cst_299 {dimension_numbers = #tpu.dot_dimension_numbers<[2], [2], [1], [1], [0, 0, 0, 1, 1, 1], [0], [0]>} : vector<2x8x8xf32>, vector<2x8x8xf32>, vector<2x8x8xf32> -> vector<2x8x8xf32>
    "tpu.trace_stop"() : () -> ()
    %375 = vector.broadcast %21 : vector<1x8x8xf32> to vector<2x8x8xf32>
    %376 = arith.addf %374, %375 : vector<2x8x8xf32>
    %cst_300 = arith.constant dense<0xFF800000> : vector<2x8xf32>
    %377 = vector.multi_reduction <maximumf>, %376, %cst_300 [2] : vector<2x8x8xf32> to vector<2x8xf32>
    %378 = vector.shape_cast %377 : vector<2x8xf32> to vector<2x8x1xf32>
    %379 = vector.broadcast %378 : vector<2x8x1xf32> to vector<2x8x8xf32>
    %380 = arith.subf %376, %379 : vector<2x8x8xf32>
    %381 = math.exp %380 : vector<2x8x8xf32>
    %cst_301 = arith.constant dense<0.000000e+00> : vector<2x8xf32>
    %382 = vector.multi_reduction <add>, %381, %cst_301 [2] : vector<2x8x8xf32> to vector<2x8xf32>
    %383 = vector.shape_cast %382 : vector<2x8xf32> to vector<2x8x1xf32>
    %384 = tpu.reciprocal %383 {approx = true} : vector<2x8x1xf32> -> vector<2x8x1xf32>
    %385 = vector.broadcast %384 : vector<2x8x1xf32> to vector<2x8x8xf32>
    %386 = arith.mulf %381, %385 : vector<2x8x8xf32>
    "tpu.trace_start"() <{level = 10 : i32, message = "bqk,bkd->bqd"}> : () -> ()
    %cst_302 = arith.constant dense<0.000000e+00> : vector<2x8x8xf32>
    %387 = tpu.matmul %386, %373, %cst_302 {dimension_numbers = #tpu.dot_dimension_numbers<[2], [1], [1], [2], [0, 0, 0, 1, 1, 2], [0], [0]>} : vector<2x8x8xf32>, vector<2x8x8xf32>, vector<2x8x8xf32> -> vector<2x8x8xf32>
    "tpu.trace_stop"() : () -> ()
    %388 = vector.shape_cast %387 : vector<2x8x8xf32> to vector<16x8xf32>
    %389 = arith.truncf %388 : vector<16x8xf32> to vector<16x8xbf16>
    %c1_303 = arith.constant 1 : index
    %c1_304 = arith.constant 1 : index
    %c0_305 = arith.constant 0 : index
    %c0_306 = arith.constant 0 : index
    %390 = vector.load %arg7[%c1_303, %c1_304, %c0_305, %c0_306] : memref<2x4x8x32xbf16, #tpu.memory_space<vmem>>, vector<1x1x8x32xbf16>
    %391 = vector.shape_cast %390 : vector<1x1x8x32xbf16> to vector<8x32xbf16>
    %cst_307 = arith.constant dense<0.000000e+00> : vector<16x32xf32>
    %392 = tpu.matmul %389, %391, %cst_307 {dimension_numbers = #tpu.dot_dimension_numbers<[1], [0], [0], [1], [0, 0, 1, 1], [], []>} : vector<16x8xbf16>, vector<8x32xbf16>, vector<16x32xf32> -> vector<16x32xf32>
    %393 = arith.addf %349, %392 : vector<16x32xf32>
    %c1_308 = arith.constant 1 : index
    %c0_309 = arith.constant 0 : index
    %c2_310 = arith.constant 2 : index
    %c0_311 = arith.constant 0 : index
    %c0_312 = arith.constant 0 : index
    %394 = vector.load %arg5[%c1_308, %c0_309, %c2_310, %c0_311, %c0_312] : memref<2x3x4x32x8xbf16, #tpu.memory_space<vmem>>, vector<1x1x1x32x8xbf16>
    %395 = vector.shape_cast %394 : vector<1x1x1x32x8xbf16> to vector<32x8xbf16>
    %cst_313 = arith.constant dense<0.000000e+00> : vector<16x8xf32>
    %396 = tpu.matmul %306, %395, %cst_313 {dimension_numbers = #tpu.dot_dimension_numbers<[1], [0], [0], [1], [0, 0, 1, 1], [], []>} : vector<16x32xbf16>, vector<32x8xbf16>, vector<16x8xf32> -> vector<16x8xf32>
    %c1_314 = arith.constant 1 : index
    %c0_315 = arith.constant 0 : index
    %c2_316 = arith.constant 2 : index
    %c0_317 = arith.constant 0 : index
    %c0_318 = arith.constant 0 : index
    %397 = vector.load %arg6[%c1_314, %c0_315, %c2_316, %c0_317, %c0_318] : memref<2x3x4x1x8xf32, #tpu.memory_space<vmem>>, vector<1x1x1x1x8xf32>
    %398 = vector.shape_cast %397 : vector<1x1x1x1x8xf32> to vector<1x8xf32>
    %399 = vector.broadcast %398 : vector<1x8xf32> to vector<16x8xf32>
    %400 = arith.addf %396, %399 : vector<16x8xf32>
    %c1_319 = arith.constant 1 : index
    %c1_320 = arith.constant 1 : index
    %c2_321 = arith.constant 2 : index
    %c0_322 = arith.constant 0 : index
    %c0_323 = arith.constant 0 : index
    %401 = vector.load %arg5[%c1_319, %c1_320, %c2_321, %c0_322, %c0_323] : memref<2x3x4x32x8xbf16, #tpu.memory_space<vmem>>, vector<1x1x1x32x8xbf16>
    %402 = vector.shape_cast %401 : vector<1x1x1x32x8xbf16> to vector<32x8xbf16>
    %cst_324 = arith.constant dense<0.000000e+00> : vector<16x8xf32>
    %403 = tpu.matmul %306, %402, %cst_324 {dimension_numbers = #tpu.dot_dimension_numbers<[1], [0], [0], [1], [0, 0, 1, 1], [], []>} : vector<16x32xbf16>, vector<32x8xbf16>, vector<16x8xf32> -> vector<16x8xf32>
    %c1_325 = arith.constant 1 : index
    %c1_326 = arith.constant 1 : index
    %c2_327 = arith.constant 2 : index
    %c0_328 = arith.constant 0 : index
    %c0_329 = arith.constant 0 : index
    %404 = vector.load %arg6[%c1_325, %c1_326, %c2_327, %c0_328, %c0_329] : memref<2x3x4x1x8xf32, #tpu.memory_space<vmem>>, vector<1x1x1x1x8xf32>
    %405 = vector.shape_cast %404 : vector<1x1x1x1x8xf32> to vector<1x8xf32>
    %406 = vector.broadcast %405 : vector<1x8xf32> to vector<16x8xf32>
    %407 = arith.addf %403, %406 : vector<16x8xf32>
    %c1_330 = arith.constant 1 : index
    %c2_331 = arith.constant 2 : index
    %c2_332 = arith.constant 2 : index
    %c0_333 = arith.constant 0 : index
    %c0_334 = arith.constant 0 : index
    %408 = vector.load %arg5[%c1_330, %c2_331, %c2_332, %c0_333, %c0_334] : memref<2x3x4x32x8xbf16, #tpu.memory_space<vmem>>, vector<1x1x1x32x8xbf16>
    %409 = vector.shape_cast %408 : vector<1x1x1x32x8xbf16> to vector<32x8xbf16>
    %cst_335 = arith.constant dense<0.000000e+00> : vector<16x8xf32>
    %410 = tpu.matmul %306, %409, %cst_335 {dimension_numbers = #tpu.dot_dimension_numbers<[1], [0], [0], [1], [0, 0, 1, 1], [], []>} : vector<16x32xbf16>, vector<32x8xbf16>, vector<16x8xf32> -> vector<16x8xf32>
    %c1_336 = arith.constant 1 : index
    %c2_337 = arith.constant 2 : index
    %c2_338 = arith.constant 2 : index
    %c0_339 = arith.constant 0 : index
    %c0_340 = arith.constant 0 : index
    %411 = vector.load %arg6[%c1_336, %c2_337, %c2_338, %c0_339, %c0_340] : memref<2x3x4x1x8xf32, #tpu.memory_space<vmem>>, vector<1x1x1x1x8xf32>
    %412 = vector.shape_cast %411 : vector<1x1x1x1x8xf32> to vector<1x8xf32>
    %413 = vector.broadcast %412 : vector<1x8xf32> to vector<16x8xf32>
    %414 = arith.addf %410, %413 : vector<16x8xf32>
    %415 = vector.shape_cast %400 : vector<16x8xf32> to vector<2x8x8xf32>
    %416 = vector.shape_cast %407 : vector<16x8xf32> to vector<2x8x8xf32>
    %417 = vector.shape_cast %414 : vector<16x8xf32> to vector<2x8x8xf32>
    "tpu.trace_start"() <{level = 10 : i32, message = "bqd,bkd->bqk"}> : () -> ()
    %cst_341 = arith.constant dense<0.000000e+00> : vector<2x8x8xf32>
    %418 = tpu.matmul %415, %416, %cst_341 {dimension_numbers = #tpu.dot_dimension_numbers<[2], [2], [1], [1], [0, 0, 0, 1, 1, 1], [0], [0]>} : vector<2x8x8xf32>, vector<2x8x8xf32>, vector<2x8x8xf32> -> vector<2x8x8xf32>
    "tpu.trace_stop"() : () -> ()
    %419 = vector.broadcast %21 : vector<1x8x8xf32> to vector<2x8x8xf32>
    %420 = arith.addf %418, %419 : vector<2x8x8xf32>
    %cst_342 = arith.constant dense<0xFF800000> : vector<2x8xf32>
    %421 = vector.multi_reduction <maximumf>, %420, %cst_342 [2] : vector<2x8x8xf32> to vector<2x8xf32>
    %422 = vector.shape_cast %421 : vector<2x8xf32> to vector<2x8x1xf32>
    %423 = vector.broadcast %422 : vector<2x8x1xf32> to vector<2x8x8xf32>
    %424 = arith.subf %420, %423 : vector<2x8x8xf32>
    %425 = math.exp %424 : vector<2x8x8xf32>
    %cst_343 = arith.constant dense<0.000000e+00> : vector<2x8xf32>
    %426 = vector.multi_reduction <add>, %425, %cst_343 [2] : vector<2x8x8xf32> to vector<2x8xf32>
    %427 = vector.shape_cast %426 : vector<2x8xf32> to vector<2x8x1xf32>
    %428 = tpu.reciprocal %427 {approx = true} : vector<2x8x1xf32> -> vector<2x8x1xf32>
    %429 = vector.broadcast %428 : vector<2x8x1xf32> to vector<2x8x8xf32>
    %430 = arith.mulf %425, %429 : vector<2x8x8xf32>
    "tpu.trace_start"() <{level = 10 : i32, message = "bqk,bkd->bqd"}> : () -> ()
    %cst_344 = arith.constant dense<0.000000e+00> : vector<2x8x8xf32>
    %431 = tpu.matmul %430, %417, %cst_344 {dimension_numbers = #tpu.dot_dimension_numbers<[2], [1], [1], [2], [0, 0, 0, 1, 1, 2], [0], [0]>} : vector<2x8x8xf32>, vector<2x8x8xf32>, vector<2x8x8xf32> -> vector<2x8x8xf32>
    "tpu.trace_stop"() : () -> ()
    %432 = vector.shape_cast %431 : vector<2x8x8xf32> to vector<16x8xf32>
    %433 = arith.truncf %432 : vector<16x8xf32> to vector<16x8xbf16>
    %c1_345 = arith.constant 1 : index
    %c2_346 = arith.constant 2 : index
    %c0_347 = arith.constant 0 : index
    %c0_348 = arith.constant 0 : index
    %434 = vector.load %arg7[%c1_345, %c2_346, %c0_347, %c0_348] : memref<2x4x8x32xbf16, #tpu.memory_space<vmem>>, vector<1x1x8x32xbf16>
    %435 = vector.shape_cast %434 : vector<1x1x8x32xbf16> to vector<8x32xbf16>
    %cst_349 = arith.constant dense<0.000000e+00> : vector<16x32xf32>
    %436 = tpu.matmul %433, %435, %cst_349 {dimension_numbers = #tpu.dot_dimension_numbers<[1], [0], [0], [1], [0, 0, 1, 1], [], []>} : vector<16x8xbf16>, vector<8x32xbf16>, vector<16x32xf32> -> vector<16x32xf32>
    %437 = arith.addf %393, %436 : vector<16x32xf32>
    %c1_350 = arith.constant 1 : index
    %c0_351 = arith.constant 0 : index
    %c3_352 = arith.constant 3 : index
    %c0_353 = arith.constant 0 : index
    %c0_354 = arith.constant 0 : index
    %438 = vector.load %arg5[%c1_350, %c0_351, %c3_352, %c0_353, %c0_354] : memref<2x3x4x32x8xbf16, #tpu.memory_space<vmem>>, vector<1x1x1x32x8xbf16>
    %439 = vector.shape_cast %438 : vector<1x1x1x32x8xbf16> to vector<32x8xbf16>
    %cst_355 = arith.constant dense<0.000000e+00> : vector<16x8xf32>
    %440 = tpu.matmul %306, %439, %cst_355 {dimension_numbers = #tpu.dot_dimension_numbers<[1], [0], [0], [1], [0, 0, 1, 1], [], []>} : vector<16x32xbf16>, vector<32x8xbf16>, vector<16x8xf32> -> vector<16x8xf32>
    %c1_356 = arith.constant 1 : index
    %c0_357 = arith.constant 0 : index
    %c3_358 = arith.constant 3 : index
    %c0_359 = arith.constant 0 : index
    %c0_360 = arith.constant 0 : index
    %441 = vector.load %arg6[%c1_356, %c0_357, %c3_358, %c0_359, %c0_360] : memref<2x3x4x1x8xf32, #tpu.memory_space<vmem>>, vector<1x1x1x1x8xf32>
    %442 = vector.shape_cast %441 : vector<1x1x1x1x8xf32> to vector<1x8xf32>
    %443 = vector.broadcast %442 : vector<1x8xf32> to vector<16x8xf32>
    %444 = arith.addf %440, %443 : vector<16x8xf32>
    %c1_361 = arith.constant 1 : index
    %c1_362 = arith.constant 1 : index
    %c3_363 = arith.constant 3 : index
    %c0_364 = arith.constant 0 : index
    %c0_365 = arith.constant 0 : index
    %445 = vector.load %arg5[%c1_361, %c1_362, %c3_363, %c0_364, %c0_365] : memref<2x3x4x32x8xbf16, #tpu.memory_space<vmem>>, vector<1x1x1x32x8xbf16>
    %446 = vector.shape_cast %445 : vector<1x1x1x32x8xbf16> to vector<32x8xbf16>
    %cst_366 = arith.constant dense<0.000000e+00> : vector<16x8xf32>
    %447 = tpu.matmul %306, %446, %cst_366 {dimension_numbers = #tpu.dot_dimension_numbers<[1], [0], [0], [1], [0, 0, 1, 1], [], []>} : vector<16x32xbf16>, vector<32x8xbf16>, vector<16x8xf32> -> vector<16x8xf32>
    %c1_367 = arith.constant 1 : index
    %c1_368 = arith.constant 1 : index
    %c3_369 = arith.constant 3 : index
    %c0_370 = arith.constant 0 : index
    %c0_371 = arith.constant 0 : index
    %448 = vector.load %arg6[%c1_367, %c1_368, %c3_369, %c0_370, %c0_371] : memref<2x3x4x1x8xf32, #tpu.memory_space<vmem>>, vector<1x1x1x1x8xf32>
    %449 = vector.shape_cast %448 : vector<1x1x1x1x8xf32> to vector<1x8xf32>
    %450 = vector.broadcast %449 : vector<1x8xf32> to vector<16x8xf32>
    %451 = arith.addf %447, %450 : vector<16x8xf32>
    %c1_372 = arith.constant 1 : index
    %c2_373 = arith.constant 2 : index
    %c3_374 = arith.constant 3 : index
    %c0_375 = arith.constant 0 : index
    %c0_376 = arith.constant 0 : index
    %452 = vector.load %arg5[%c1_372, %c2_373, %c3_374, %c0_375, %c0_376] : memref<2x3x4x32x8xbf16, #tpu.memory_space<vmem>>, vector<1x1x1x32x8xbf16>
    %453 = vector.shape_cast %452 : vector<1x1x1x32x8xbf16> to vector<32x8xbf16>
    %cst_377 = arith.constant dense<0.000000e+00> : vector<16x8xf32>
    %454 = tpu.matmul %306, %453, %cst_377 {dimension_numbers = #tpu.dot_dimension_numbers<[1], [0], [0], [1], [0, 0, 1, 1], [], []>} : vector<16x32xbf16>, vector<32x8xbf16>, vector<16x8xf32> -> vector<16x8xf32>
    %c1_378 = arith.constant 1 : index
    %c2_379 = arith.constant 2 : index
    %c3_380 = arith.constant 3 : index
    %c0_381 = arith.constant 0 : index
    %c0_382 = arith.constant 0 : index
    %455 = vector.load %arg6[%c1_378, %c2_379, %c3_380, %c0_381, %c0_382] : memref<2x3x4x1x8xf32, #tpu.memory_space<vmem>>, vector<1x1x1x1x8xf32>
    %456 = vector.shape_cast %455 : vector<1x1x1x1x8xf32> to vector<1x8xf32>
    %457 = vector.broadcast %456 : vector<1x8xf32> to vector<16x8xf32>
    %458 = arith.addf %454, %457 : vector<16x8xf32>
    %459 = vector.shape_cast %444 : vector<16x8xf32> to vector<2x8x8xf32>
    %460 = vector.shape_cast %451 : vector<16x8xf32> to vector<2x8x8xf32>
    %461 = vector.shape_cast %458 : vector<16x8xf32> to vector<2x8x8xf32>
    "tpu.trace_start"() <{level = 10 : i32, message = "bqd,bkd->bqk"}> : () -> ()
    %cst_383 = arith.constant dense<0.000000e+00> : vector<2x8x8xf32>
    %462 = tpu.matmul %459, %460, %cst_383 {dimension_numbers = #tpu.dot_dimension_numbers<[2], [2], [1], [1], [0, 0, 0, 1, 1, 1], [0], [0]>} : vector<2x8x8xf32>, vector<2x8x8xf32>, vector<2x8x8xf32> -> vector<2x8x8xf32>
    "tpu.trace_stop"() : () -> ()
    %463 = vector.broadcast %21 : vector<1x8x8xf32> to vector<2x8x8xf32>
    %464 = arith.addf %462, %463 : vector<2x8x8xf32>
    %cst_384 = arith.constant dense<0xFF800000> : vector<2x8xf32>
    %465 = vector.multi_reduction <maximumf>, %464, %cst_384 [2] : vector<2x8x8xf32> to vector<2x8xf32>
    %466 = vector.shape_cast %465 : vector<2x8xf32> to vector<2x8x1xf32>
    %467 = vector.broadcast %466 : vector<2x8x1xf32> to vector<2x8x8xf32>
    %468 = arith.subf %464, %467 : vector<2x8x8xf32>
    %469 = math.exp %468 : vector<2x8x8xf32>
    %cst_385 = arith.constant dense<0.000000e+00> : vector<2x8xf32>
    %470 = vector.multi_reduction <add>, %469, %cst_385 [2] : vector<2x8x8xf32> to vector<2x8xf32>
    %471 = vector.shape_cast %470 : vector<2x8xf32> to vector<2x8x1xf32>
    %472 = tpu.reciprocal %471 {approx = true} : vector<2x8x1xf32> -> vector<2x8x1xf32>
    %473 = vector.broadcast %472 : vector<2x8x1xf32> to vector<2x8x8xf32>
    %474 = arith.mulf %469, %473 : vector<2x8x8xf32>
    "tpu.trace_start"() <{level = 10 : i32, message = "bqk,bkd->bqd"}> : () -> ()
    %cst_386 = arith.constant dense<0.000000e+00> : vector<2x8x8xf32>
    %475 = tpu.matmul %474, %461, %cst_386 {dimension_numbers = #tpu.dot_dimension_numbers<[2], [1], [1], [2], [0, 0, 0, 1, 1, 2], [0], [0]>} : vector<2x8x8xf32>, vector<2x8x8xf32>, vector<2x8x8xf32> -> vector<2x8x8xf32>
    "tpu.trace_stop"() : () -> ()
    %476 = vector.shape_cast %475 : vector<2x8x8xf32> to vector<16x8xf32>
    %477 = arith.truncf %476 : vector<16x8xf32> to vector<16x8xbf16>
    %c1_387 = arith.constant 1 : index
    %c3_388 = arith.constant 3 : index
    %c0_389 = arith.constant 0 : index
    %c0_390 = arith.constant 0 : index
    %478 = vector.load %arg7[%c1_387, %c3_388, %c0_389, %c0_390] : memref<2x4x8x32xbf16, #tpu.memory_space<vmem>>, vector<1x1x8x32xbf16>
    %479 = vector.shape_cast %478 : vector<1x1x8x32xbf16> to vector<8x32xbf16>
    %cst_391 = arith.constant dense<0.000000e+00> : vector<16x32xf32>
    %480 = tpu.matmul %477, %479, %cst_391 {dimension_numbers = #tpu.dot_dimension_numbers<[1], [0], [0], [1], [0, 0, 1, 1], [], []>} : vector<16x8xbf16>, vector<8x32xbf16>, vector<16x32xf32> -> vector<16x32xf32>
    %481 = arith.addf %437, %480 : vector<16x32xf32>
    %482 = arith.addf %279, %481 : vector<16x32xf32>
    %c1_392 = arith.constant 1 : index
    %c0_393 = arith.constant 0 : index
    %c0_394 = arith.constant 0 : index
    %483 = vector.load %arg8[%c1_392, %c0_393, %c0_394] : memref<2x1x32xf32, #tpu.memory_space<vmem>>, vector<1x1x32xf32>
    %484 = vector.shape_cast %483 : vector<1x1x32xf32> to vector<1x32xf32>
    %485 = vector.broadcast %484 : vector<1x32xf32> to vector<16x32xf32>
    %486 = arith.addf %482, %485 : vector<16x32xf32>
    %c1_395 = arith.constant 1 : index
    %c0_396 = arith.constant 0 : index
    %c0_397 = arith.constant 0 : index
    %487 = vector.load %arg9[%c1_395, %c0_396, %c0_397] : memref<2x1x32xf32, #tpu.memory_space<vmem>>, vector<1x1x32xf32>
    %488 = vector.shape_cast %487 : vector<1x1x32xf32> to vector<1x32xf32>
    %c1_398 = arith.constant 1 : index
    %c0_399 = arith.constant 0 : index
    %c0_400 = arith.constant 0 : index
    %489 = vector.load %arg10[%c1_398, %c0_399, %c0_400] : memref<2x1x32xf32, #tpu.memory_space<vmem>>, vector<1x1x32xf32>
    %490 = vector.shape_cast %489 : vector<1x1x32xf32> to vector<1x32xf32>
    %cst_401 = arith.constant dense<0.000000e+00> : vector<16xf32>
    %491 = vector.multi_reduction <add>, %486, %cst_401 [1] : vector<16x32xf32> to vector<16xf32>
    %492 = vector.shape_cast %491 : vector<16xf32> to vector<16x1xf32>
    %cst_402 = arith.constant 3.200000e+01 : f32
    %493 = vector.broadcast %cst_402 : f32 to vector<16x1xf32>
    %494 = arith.divf %492, %493 : vector<16x1xf32>
    %495 = vector.broadcast %494 : vector<16x1xf32> to vector<16x32xf32>
    %496 = arith.subf %486, %495 : vector<16x32xf32>
    %497 = arith.mulf %496, %496 : vector<16x32xf32>
    %cst_403 = arith.constant dense<0.000000e+00> : vector<16xf32>
    %498 = vector.multi_reduction <add>, %497, %cst_403 [1] : vector<16x32xf32> to vector<16xf32>
    %499 = vector.shape_cast %498 : vector<16xf32> to vector<16x1xf32>
    %cst_404 = arith.constant 3.200000e+01 : f32
    %500 = vector.broadcast %cst_404 : f32 to vector<16x1xf32>
    %501 = arith.divf %499, %500 : vector<16x1xf32>
    %502 = vector.broadcast %494 : vector<16x1xf32> to vector<16x32xf32>
    %503 = arith.subf %486, %502 : vector<16x32xf32>
    %cst_405 = arith.constant 9.99999974E-6 : f32
    %504 = vector.broadcast %cst_405 : f32 to vector<16x1xf32>
    %505 = arith.addf %501, %504 : vector<16x1xf32>
    %506 = math.rsqrt %505 : vector<16x1xf32>
    %507 = vector.broadcast %506 : vector<16x1xf32> to vector<16x32xf32>
    %508 = arith.mulf %503, %507 : vector<16x32xf32>
    %509 = vector.broadcast %488 : vector<1x32xf32> to vector<16x32xf32>
    %510 = arith.mulf %508, %509 : vector<16x32xf32>
    %511 = vector.broadcast %490 : vector<1x32xf32> to vector<16x32xf32>
    %512 = arith.addf %510, %511 : vector<16x32xf32>
    %513 = arith.truncf %512 : vector<16x32xf32> to vector<16x32xbf16>
    %c1_406 = arith.constant 1 : index
    %c0_407 = arith.constant 0 : index
    %c0_408 = arith.constant 0 : index
    %514 = vector.load %arg11[%c1_406, %c0_407, %c0_408] : memref<2x32x128xbf16, #tpu.memory_space<vmem>>, vector<1x32x128xbf16>
    %515 = vector.shape_cast %514 : vector<1x32x128xbf16> to vector<32x128xbf16>
    %cst_409 = arith.constant dense<0.000000e+00> : vector<16x128xf32>
    %516 = tpu.matmul %513, %515, %cst_409 {dimension_numbers = #tpu.dot_dimension_numbers<[1], [0], [0], [1], [0, 0, 1, 1], [], []>} : vector<16x32xbf16>, vector<32x128xbf16>, vector<16x128xf32> -> vector<16x128xf32>
    %c1_410 = arith.constant 1 : index
    %c0_411 = arith.constant 0 : index
    %c0_412 = arith.constant 0 : index
    %517 = vector.load %arg12[%c1_410, %c0_411, %c0_412] : memref<2x1x128xf32, #tpu.memory_space<vmem>>, vector<1x1x128xf32>
    %518 = vector.shape_cast %517 : vector<1x1x128xf32> to vector<1x128xf32>
    %519 = vector.broadcast %518 : vector<1x128xf32> to vector<16x128xf32>
    %520 = arith.addf %516, %519 : vector<16x128xf32>
    %cst_413 = arith.constant 1.702000e+00 : f32
    %521 = vector.broadcast %cst_413 : f32 to vector<16x128xf32>
    %522 = arith.mulf %521, %520 : vector<16x128xf32>
    %523 = arith.negf %522 : vector<16x128xf32>
    %524 = math.exp %523 : vector<16x128xf32>
    %cst_414 = arith.constant 1.000000e+00 : f32
    %525 = vector.broadcast %cst_414 : f32 to vector<16x128xf32>
    %526 = arith.addf %525, %524 : vector<16x128xf32>
    %527 = arith.divf %525, %526 : vector<16x128xf32>
    %528 = arith.mulf %520, %527 : vector<16x128xf32>
    %529 = arith.truncf %528 : vector<16x128xf32> to vector<16x128xbf16>
    %c1_415 = arith.constant 1 : index
    %c0_416 = arith.constant 0 : index
    %c0_417 = arith.constant 0 : index
    %530 = vector.load %arg13[%c1_415, %c0_416, %c0_417] : memref<2x128x32xbf16, #tpu.memory_space<vmem>>, vector<1x128x32xbf16>
    %531 = vector.shape_cast %530 : vector<1x128x32xbf16> to vector<128x32xbf16>
    %cst_418 = arith.constant dense<0.000000e+00> : vector<16x32xf32>
    %532 = tpu.matmul %529, %531, %cst_418 {dimension_numbers = #tpu.dot_dimension_numbers<[1], [0], [0], [1], [0, 0, 1, 1], [], []>} : vector<16x128xbf16>, vector<128x32xbf16>, vector<16x32xf32> -> vector<16x32xf32>
    %c1_419 = arith.constant 1 : index
    %c0_420 = arith.constant 0 : index
    %c0_421 = arith.constant 0 : index
    %533 = vector.load %arg14[%c1_419, %c0_420, %c0_421] : memref<2x1x32xf32, #tpu.memory_space<vmem>>, vector<1x1x32xf32>
    %534 = vector.shape_cast %533 : vector<1x1x32xf32> to vector<1x32xf32>
    %535 = vector.broadcast %534 : vector<1x32xf32> to vector<16x32xf32>
    %536 = arith.addf %532, %535 : vector<16x32xf32>
    %537 = arith.addf %486, %536 : vector<16x32xf32>
    %c0_422 = arith.constant 0 : index
    %c0_423 = arith.constant 0 : index
    %538 = vector.load %arg15[%c0_422, %c0_423] : memref<1x32xf32, #tpu.memory_space<vmem>>, vector<1x32xf32>
    %c0_424 = arith.constant 0 : index
    %c0_425 = arith.constant 0 : index
    %539 = vector.load %arg16[%c0_424, %c0_425] : memref<1x32xf32, #tpu.memory_space<vmem>>, vector<1x32xf32>
    %cst_426 = arith.constant dense<0.000000e+00> : vector<16xf32>
    %540 = vector.multi_reduction <add>, %537, %cst_426 [1] : vector<16x32xf32> to vector<16xf32>
    %541 = vector.shape_cast %540 : vector<16xf32> to vector<16x1xf32>
    %cst_427 = arith.constant 3.200000e+01 : f32
    %542 = vector.broadcast %cst_427 : f32 to vector<16x1xf32>
    %543 = arith.divf %541, %542 : vector<16x1xf32>
    %544 = vector.broadcast %543 : vector<16x1xf32> to vector<16x32xf32>
    %545 = arith.subf %537, %544 : vector<16x32xf32>
    %546 = arith.mulf %545, %545 : vector<16x32xf32>
    %cst_428 = arith.constant dense<0.000000e+00> : vector<16xf32>
    %547 = vector.multi_reduction <add>, %546, %cst_428 [1] : vector<16x32xf32> to vector<16xf32>
    %548 = vector.shape_cast %547 : vector<16xf32> to vector<16x1xf32>
    %cst_429 = arith.constant 3.200000e+01 : f32
    %549 = vector.broadcast %cst_429 : f32 to vector<16x1xf32>
    %550 = arith.divf %548, %549 : vector<16x1xf32>
    %551 = vector.broadcast %543 : vector<16x1xf32> to vector<16x32xf32>
    %552 = arith.subf %537, %551 : vector<16x32xf32>
    %cst_430 = arith.constant 9.99999974E-6 : f32
    %553 = vector.broadcast %cst_430 : f32 to vector<16x1xf32>
    %554 = arith.addf %550, %553 : vector<16x1xf32>
    %555 = math.rsqrt %554 : vector<16x1xf32>
    %556 = vector.broadcast %555 : vector<16x1xf32> to vector<16x32xf32>
    %557 = arith.mulf %552, %556 : vector<16x32xf32>
    %558 = vector.broadcast %538 : vector<1x32xf32> to vector<16x32xf32>
    %559 = arith.mulf %557, %558 : vector<16x32xf32>
    %560 = vector.broadcast %539 : vector<1x32xf32> to vector<16x32xf32>
    %561 = arith.addf %559, %560 : vector<16x32xf32>
    %c0_431 = arith.constant 0 : index
    %c0_432 = arith.constant 0 : index
    %562 = vector.load %arg17[%c0_431, %c0_432] : memref<16x32xf32, #tpu.memory_space<vmem>>, vector<16x32xf32>
    tpu.vector_store %arg17[%c0_431, %c0_432], %561 {strides = array<i32>} : memref<16x32xf32, #tpu.memory_space<vmem>>, vector<16x32xf32>,
    return
  }
}

</mosaic_0001>

<llo_original>
// kernel: text_encoder_forward.1
$region0: #{text_encoder_forward.1}
  #allocation0 [shape = 'u32[]', space=smem, size = 0x4, offset = 0x4, fixed_abs, tag = 'smem constant byte address 0x4 - core index']
  #allocation1 [shape = 'u32[72,128]{1,0:T(1,128)}', space=vmem, size = 0x9000, scoped, tag = 'internal scratch']
  %s0 = inlined_call_operand.vmem [shape: s32[16,1], index: 0, kind: input, shape index: {}]
  %s1 = inlined_call_operand.vmem [shape: bf16[64,32], index: 1, kind: input, shape index: {}]
  %s2 = inlined_call_operand.vmem [shape: f32[8,32], index: 2, kind: input, shape index: {}]
  %s3 = inlined_call_operand.vmem [shape: f32[2,1,32], index: 3, kind: input, shape index: {}]
  %s4 = inlined_call_operand.vmem [shape: f32[2,1,32], index: 4, kind: input, shape index: {}]
  %s5 = inlined_call_operand.vmem [shape: bf16[2,3,4,32,8], index: 5, kind: input, shape index: {}]
  %s6 = inlined_call_operand.vmem [shape: f32[2,3,4,1,8], index: 6, kind: input, shape index: {}]
  %s7 = inlined_call_operand.vmem [shape: bf16[2,4,8,32], index: 7, kind: input, shape index: {}]
  %s8 = inlined_call_operand.vmem [shape: f32[2,1,32], index: 8, kind: input, shape index: {}]
  %s9 = inlined_call_operand.vmem [shape: f32[2,1,32], index: 9, kind: input, shape index: {}]
  %s10 = inlined_call_operand.vmem [shape: f32[2,1,32], index: 10, kind: input, shape index: {}]
  %s11 = inlined_call_operand.vmem [shape: bf16[2,32,128], index: 11, kind: input, shape index: {}]
  %s12 = inlined_call_operand.vmem [shape: f32[2,1,128], index: 12, kind: input, shape index: {}]
  %s13 = inlined_call_operand.vmem [shape: bf16[2,128,32], index: 13, kind: input, shape index: {}]
  %s14 = inlined_call_operand.vmem [shape: f32[2,1,32], index: 14, kind: input, shape index: {}]
  %s15 = inlined_call_operand.vmem [shape: f32[1,32], index: 15, kind: input, shape index: {}]
  %s16 = inlined_call_operand.vmem [shape: f32[1,32], index: 16, kind: input, shape index: {}]
  %s17 = inlined_call_operand.vmem [shape: f32[16,32], index: 17, kind: output, shape index: {}]
  %s18 = sld [smem:[#allocation0]]
  $region78: #{text_encoder_forward.1} parent=0
    _
  %s20 = ssub.s32 1, %s18
  %s21 = scalar_select 0, %s20, %s18
  // Predicated region
  $region2: #{text_encoder_forward.1} parent=0 // pred_check
    _
  $region3: #{text_encoder_forward.1} parent=0 // pred_check_branch
    %23 = sbr.rel (0) target = $region5
  $region4: #{text_encoder_forward.1} parent=0 // pred_region
    _
  $region5: #{text_encoder_forward.1} parent=0 // pred_fallthru
    _
  // Predicated region
  $region6: #{text_encoder_forward.1} parent=0 // pred_check
    _
  $region7: #{text_encoder_forward.1} parent=0 // pred_check_branch
    %25 = sbr.rel (0) target = $region9
  $region8: #{text_encoder_forward.1} parent=0 // pred_region
    _
  $region9: #{text_encoder_forward.1} parent=0 // pred_fallthru
    _
  // Predicated region
  $region10: #{text_encoder_forward.1} parent=0 // pred_check
    _
  $region11: #{text_encoder_forward.1} parent=0 // pred_check_branch
    %27 = sbr.rel (0) target = $region13
  $region12: #{text_encoder_forward.1} parent=0 // pred_region
    _
  $region13: #{text_encoder_forward.1} parent=0 // pred_fallthru
    _
  // Predicated region
  $region14: #{text_encoder_forward.1} parent=0 // pred_check
    _
  $region15: #{text_encoder_forward.1} parent=0 // pred_check_branch
    %29 = sbr.rel (0) target = $region17
  $region16: #{text_encoder_forward.1} parent=0 // pred_region
    _
  $region17: #{text_encoder_forward.1} parent=0 // pred_fallthru
    _
  // Predicated region
  $region18: #{text_encoder_forward.1} parent=0 // pred_check
    _
  $region19: #{text_encoder_forward.1} parent=0 // pred_check_branch
    %31 = sbr.rel (0) target = $region21
  $region20: #{text_encoder_forward.1} parent=0 // pred_region
    _
  $region21: #{text_encoder_forward.1} parent=0 // pred_fallthru
    _
  // Predicated region
  $region22: #{text_encoder_forward.1} parent=0 // pred_check
    _
  $region23: #{text_encoder_forward.1} parent=0 // pred_check_branch
    %33 = sbr.rel (0) target = $region25
  $region24: #{text_encoder_forward.1} parent=0 // pred_region
    _
  $region25: #{text_encoder_forward.1} parent=0 // pred_fallthru
    _
  // Predicated region
  $region26: #{text_encoder_forward.1} parent=0 // pred_check
    _
  $region27: #{text_encoder_forward.1} parent=0 // pred_check_branch
    %35 = sbr.rel (0) target = $region29
  $region28: #{text_encoder_forward.1} parent=0 // pred_region
    _
  $region29: #{text_encoder_forward.1} parent=0 // pred_fallthru
    _
  // Predicated region
  $region30: #{text_encoder_forward.1} parent=0 // pred_check
    _
  $region31: #{text_encoder_forward.1} parent=0 // pred_check_branch
    %37 = sbr.rel (0) target = $region33
  $region32: #{text_encoder_forward.1} parent=0 // pred_region
    _
  $region33: #{text_encoder_forward.1} parent=0 // pred_fallthru
    _
  // Predicated region
  $region34: #{text_encoder_forward.1} parent=0 // pred_check
    _
  $region35: #{text_encoder_forward.1} parent=0 // pred_check_branch
    %39 = sbr.rel (0) target = $region37
  $region36: #{text_encoder_forward.1} parent=0 // pred_region
    _
  $region37: #{text_encoder_forward.1} parent=0 // pred_fallthru
    _
  // Predicated region
  $region38: #{text_encoder_forward.1} parent=0 // pred_check
    _
  $region39: #{text_encoder_forward.1} parent=0 // pred_check_branch
    %41 = sbr.rel (0) target = $region41
  $region40: #{text_encoder_forward.1} parent=0 // pred_region
    _
  $region41: #{text_encoder_forward.1} parent=0 // pred_fallthru
    _
  // Predicated region
  $region42: #{text_encoder_forward.1} parent=0 // pred_check
    _
  $region43: #{text_encoder_forward.1} parent=0 // pred_check_branch
    %43 = sbr.rel (0) target = $region45
  $region44: #{text_encoder_forward.1} parent=0 // pred_region
    _
  $region45: #{text_encoder_forward.1} parent=0 // pred_fallthru
    _
  // Predicated region
  $region46: #{text_encoder_forward.1} parent=0 // pred_check
    _
  $region47: #{text_encoder_forward.1} parent=0 // pred_check_branch
    %45 = sbr.rel (0) target = $region49
  $region48: #{text_encoder_forward.1} parent=0 // pred_region
    _
  $region49: #{text_encoder_forward.1} parent=0 // pred_fallthru
    _
  // Predicated region
  $region50: #{text_encoder_forward.1} parent=0 // pred_check
    _
  $region51: #{text_encoder_forward.1} parent=0 // pred_check_branch
    %47 = sbr.rel (0) target = $region53
  $region52: #{text_encoder_forward.1} parent=0 // pred_region
    _
  $region53: #{text_encoder_forward.1} parent=0 // pred_fallthru
    _
  // Predicated region
  $region54: #{text_encoder_forward.1} parent=0 // pred_check
    _
  $region55: #{text_encoder_forward.1} parent=0 // pred_check_branch
    %49 = sbr.rel (0) target = $region57
  $region56: #{text_encoder_forward.1} parent=0 // pred_region
    _
  $region57: #{text_encoder_forward.1} parent=0 // pred_fallthru
    _
  // Predicated region
  $region58: #{text_encoder_forward.1} parent=0 // pred_check
    _
  $region59: #{text_encoder_forward.1} parent=0 // pred_check_branch
    %51 = sbr.rel (0) target = $region61
  $region60: #{text_encoder_forward.1} parent=0 // pred_region
    _
  $region61: #{text_encoder_forward.1} parent=0 // pred_fallthru
    _
  // Predicated region
  $region62: #{text_encoder_forward.1} parent=0 // pred_check
    _
  $region63: #{text_encoder_forward.1} parent=0 // pred_check_branch
    %53 = sbr.rel (0) target = $region65
  $region64: #{text_encoder_forward.1} parent=0 // pred_region
    _
  $region65: #{text_encoder_forward.1} parent=0 // pred_fallthru
    _
  // Predicated region
  $region66: #{text_encoder_forward.1} parent=0 // pred_check
    _
  $region67: #{text_encoder_forward.1} parent=0 // pred_check_branch
    %55 = sbr.rel (0) target = $region69
  $region68: #{text_encoder_forward.1} parent=0 // pred_region
    _
  $region69: #{text_encoder_forward.1} parent=0 // pred_fallthru
    _
  %v57 = vld [vmem:[%s0] sm:$0xff]
  %v58 = vld [vmem:[%s0 + $0x8] sm:$0xff]
  %v59 = vlaneseq
  %v60 = vand.u32 %v59, 127
  %61 = vset.pattern.permute.xlu0 0
  %62 = vperm.xlu0 %61, %v57
  %v63 = vpop.permute.xlu0 %62
  %64 = vset.pattern.permute.xlu0 0
  %65 = vperm.xlu0 %64, %v58
  %v66 = vpop.permute.xlu0 %65
  %vm67 = vcmp.eq.s32.totalorder %v60, %v63
  %vm68 = vcmp.eq.s32.totalorder %v60, %v66
  %v69 = vsel %vm67, 1, 0
  %v70 = vsel %vm68, 1, 0
  %v71 = vcvt.s32.f32 %v69
  %v72 = vcvt.s32.f32 %v70
  %v73 = vpack.c.bf16 %v72, %v71
  %v74 = vld [vmem:[%s1] sm:$0xf]
  %v75 = vld [vmem:[%s1 + $0x4] sm:$0xf]
  %v76 = vld [vmem:[%s1 + $0x8] sm:$0xf]
  %v77 = vld [vmem:[%s1 + $0xc] sm:$0xf]
  %v78 = vld [vmem:[%s1 + $0x10] sm:$0xf]
  %v79 = vld [vmem:[%s1 + $0x14] sm:$0xf]
  %v80 = vld [vmem:[%s1 + $0x18] sm:$0xf]
  %v81 = vld [vmem:[%s1 + $0x1c] sm:$0xf]
  %v90 = vunpack.c.l.b16 %v74
  %v91 = vunpack.c.l.b16 %v75
  %v92 = vunpack.c.l.b16 %v76
  %v93 = vunpack.c.l.b16 %v77
  %v94 = vunpack.c.l.b16 %v78
  %v95 = vunpack.c.l.b16 %v79
  %v96 = vunpack.c.l.b16 %v80
  %v97 = vunpack.c.l.b16 %v81
  %v98 = vpack.c.b16 %v91, %v90
  %v99 = vpack.c.b16 %v93, %v92
  %v100 = vpack.c.b16 %v95, %v94
  %v101 = vpack.c.b16 %v97, %v96
  %vm106 = vcmask 523264
  %v108 = vsel %vm106, %v73, 0
  %110 = vmatpush.bf16.msra.mxu0 0
  %111 = vmatpush.bf16.msra.mxu0 0
  %112 = vmatpush.bf16.msra.mxu0 0
  %113 = vmatpush.bf16.msra.mxu0 0
  %114 = vmatpush.bf16.msra.mxu0 %v101
  %115 = vmatpush.bf16.msra.mxu0 %v100
  %116 = vmatpush.bf16.msra.mxu0 %v99
  %117 = vmatpush.bf16.msra.mxu0 %v98
  %118 = vmatmul.bf16.gmra.mxu0 %v108
  %v119 = vpop.f32.mrf.mxu0
  %v120 = vadd.f32 0.0, %v119
  %v121 = vpop.f32.mrf.mxu0
  %v122 = vadd.f32 0.0, %v121
  %123 = vdwg.mxu0
  %v124 = vld [vmem:[%s2] sm:$0xff]
  %v125 = vadd.f32 %v120, %v124
  %v126 = vadd.f32 %v122, %v124
  %v127 = vlaneseq
  %v128 = vshrl.u32 %v127, 7
  %vm129 = vcmp.le.s32.totalorder %v60, %v128
  %v130 = vsel %vm129, 0.0, -1e+30
  %v131 = vld [vmem:[%s3] sm:$0x1]
  %v132 = vld [vmem:[%s4] sm:$0x1]
  %vm133 = vcmask 261120
  %v134 = vsel %vm133, %v125, 0.0
  %135 = vadd.xlane.f32.xlu0 %v134
  %v136 = vpop.xlane.xlu0 %135
  %v137 = vsel %vm133, %v126, 0.0
  %138 = vadd.xlane.f32.xlu0 %v137
  %v139 = vpop.xlane.xlu0 %138
  %v140 = vrcp.pop 32.0
  %v141 = vmul.f32 32.0, %v140
  %v142 = vsub.f32 1.0, %v141
  %v143 = vmul.f32 %v140, %v142
  %v144 = vadd.f32 %v140, %v143
  %vm145 = vweird.f32 %v140
  %v146 = vsel %vm145, %v140, %v144
  %v147 = vmul.f32 %v136, %v146
  %v148 = vmul.f32 %v139, %v146
  %v149 = vsub.f32 %v125, %v147
  %v150 = vsub.f32 %v126, %v148
  %v151 = vmul.f32 %v149, %v149
  %v152 = vmul.f32 %v150, %v150
  %v153 = vsel %vm133, %v151, 0.0
  %154 = vadd.xlane.f32.xlu0 %v153
  %v155 = vpop.xlane.xlu0 %154
  %v156 = vsel %vm133, %v152, 0.0
  %157 = vadd.xlane.f32.xlu0 %v156
  %v158 = vpop.xlane.xlu0 %157
  %v159 = vmul.f32 %v155, %v146
  %v160 = vmul.f32 %v158, %v146
  %v161 = vadd.f32 %v159, 1e-05
  %v162 = vadd.f32 %v160, 1e-05
  %v163 = vrsqrt.pop %v161
  %v164 = vmul.f32 %v163, %v161
  %v165 = vmul.f32 %v164, %v163
  %v166 = vmul.f32 0.5, %v165
  %v167 = vsub.f32 1.5, %v166
  %v168 = vmul.f32 %v163, %v167
  %vm169 = vweird.f32 %v161
  %vm170 = vweird.f32 %v163
  %vm171 = vmor %vm169, %vm170
  %v172 = vsel %vm171, %v163, %v168
  %v173 = vrsqrt.pop %v162
  %v174 = vmul.f32 %v173, %v162
  %v175 = vmul.f32 %v174, %v173
  %v176 = vmul.f32 0.5, %v175
  %v177 = vsub.f32 1.5, %v176
  %v178 = vmul.f32 %v173, %v177
  %vm179 = vweird.f32 %v162
  %vm180 = vweird.f32 %v173
  %vm181 = vmor %vm179, %vm180
  %v182 = vsel %vm181, %v173, %v178
  %v183 = vmul.f32 %v149, %v172
  %v184 = vmul.f32 %v150, %v182
  %v186 = vperm.slane %v131, 0
  %v188 = vmul.f32 %v183, %v186
  %v189 = vmul.f32 %v184, %v186
  %v191 = vperm.slane %v132, 0
  %v193 = vadd.f32 %v188, %v191
  %v194 = vadd.f32 %v189, %v191
  %v195 = vpack.c.bf16 %v194, %v193
  %v196 = vld [vmem:[%s5] sm:$0xf]
  %v197 = vld [vmem:[%s5 + $0x4] sm:$0xf]
  %v198 = vld [vmem:[%s5 + $0x8] sm:$0xf]
  %v199 = vld [vmem:[%s5 + $0xc] sm:$0xf]
  %v200 = vld [vmem:[%s6] sm:$0x1]
  %v202 = vperm.slane %v200, 0
  %v208 = vunpack.c.l.b16 %v196
  %v209 = vunpack.c.l.b16 %v197
  %v210 = vunpack.c.l.b16 %v198
  %v211 = vunpack.c.l.b16 %v199
  %v212 = vpack.c.b16 %v209, %v208
  %v213 = vpack.c.b16 %v211, %v210
  %v217 = vsel %vm133, %v195, 0
  %219 = vmatpush.bf16.msra.mxu0 0
  %220 = vmatpush.bf16.msra.mxu0 0
  %221 = vmatpush.bf16.msra.mxu0 0
  %222 = vmatpush.bf16.msra.mxu0 0
  %223 = vmatpush.bf16.msra.mxu0 0
  %224 = vmatpush.bf16.msra.mxu0 0
  %225 = vmatpush.bf16.msra.mxu0 %v213
  %226 = vmatpush.bf16.msra.mxu0 %v212
  %227 = vmatmul.bf16.gmra.mxu0 %v217
  %v228 = vpop.f32.mrf.mxu0
  %v229 = vadd.f32 %v202, %v228
  %v230 = vpop.f32.mrf.mxu0
  %v231 = vadd.f32 %v202, %v230
  %232 = vdwg.mxu0
  %s233 = scalar_lea.vmem %s5, 64
  %v234 = vld [vmem:[%s233] sm:$0xf]
  %v235 = vld [vmem:[%s233 + $0x4] sm:$0xf]
  %v236 = vld [vmem:[%s233 + $0x8] sm:$0xf]
  %v237 = vld [vmem:[%s233 + $0xc] sm:$0xf]
  %s238 = scalar_lea.vmem %s6, 4
  %v239 = vld [vmem:[%s238] sm:$0x1]
  %v241 = vperm.slane %v239, 0
  %v247 = vunpack.c.l.b16 %v234
  %v248 = vunpack.c.l.b16 %v235
  %v249 = vunpack.c.l.b16 %v236
  %v250 = vunpack.c.l.b16 %v237
  %v251 = vpack.c.b16 %v248, %v247
  %v252 = vpack.c.b16 %v250, %v249
  %255 = vmatpush.bf16.msra.mxu0 0
  %256 = vmatpush.bf16.msra.mxu0 0
  %257 = vmatpush.bf16.msra.mxu0 0
  %258 = vmatpush.bf16.msra.mxu0 0
  %259 = vmatpush.bf16.msra.mxu0 0
  %260 = vmatpush.bf16.msra.mxu0 0
  %261 = vmatpush.bf16.msra.mxu0 %v252
  %262 = vmatpush.bf16.msra.mxu0 %v251
  %263 = vmatmul.bf16.gmra.mxu0 %v217
  %v264 = vpop.f32.mrf.mxu0
  %v265 = vadd.f32 %v241, %v264
  %v266 = vpop.f32.mrf.mxu0
  %v267 = vadd.f32 %v241, %v266
  %268 = vdwg.mxu0
  %s269 = scalar_lea.vmem %s5, 128
  %v270 = vld [vmem:[%s269] sm:$0xf]
  %v271 = vld [vmem:[%s269 + $0x4] sm:$0xf]
  %v272 = vld [vmem:[%s269 + $0x8] sm:$0xf]
  %v273 = vld [vmem:[%s269 + $0xc] sm:$0xf]
  %s274 = scalar_lea.vmem %s6, 8
  %v275 = vld [vmem:[%s274] sm:$0x1]
  %v277 = vperm.slane %v275, 0
  %v283 = vunpack.c.l.b16 %v270
  %v284 = vunpack.c.l.b16 %v271
  %v285 = vunpack.c.l.b16 %v272
  %v286 = vunpack.c.l.b16 %v273
  %v287 = vpack.c.b16 %v284, %v283
  %v288 = vpack.c.b16 %v286, %v285
  %291 = vmatpush.bf16.msra.mxu0 0
  %292 = vmatpush.bf16.msra.mxu0 0
  %293 = vmatpush.bf16.msra.mxu0 0
  %294 = vmatpush.bf16.msra.mxu0 0
  %295 = vmatpush.bf16.msra.mxu0 0
  %296 = vmatpush.bf16.msra.mxu0 0
  %297 = vmatpush.bf16.msra.mxu0 %v288
  %298 = vmatpush.bf16.msra.mxu0 %v287
  %299 = vmatmul.bf16.gmra.mxu0 %v217
  %v300 = vpop.f32.mrf.mxu0
  %v301 = vadd.f32 %v277, %v300
  %v302 = vpop.f32.mrf.mxu0
  %v303 = vadd.f32 %v277, %v302
  %304 = vdwg.mxu0
  %vm305 = vcmask 64512
  %v307 = vsel %vm305, %v229, 0
  %v310 = vsel %vm305, %v265, 0
  %312 = vmatpush.xpose.msra.mxu0 0.0
  %313 = vmatpush.xpose.msra.mxu0 0.0
  %314 = vmatpush.xpose.msra.mxu0 0.0
  %315 = vmatpush.xpose.msra.mxu0 0.0
  %316 = vmatpush.xpose.msra.mxu0 0.0
  %317 = vmatpush.xpose.msra.mxu0 0.0
  %318 = vmatpush.xpose.msra.mxu0 0.0
  %319 = vmatpush.xpose.msra.mxu0 0.0
  %320 = vmatpush.xpose.msra.mxu0 0.0
  %321 = vmatpush.xpose.msra.mxu0 0.0
  %322 = vmatpush.xpose.msra.mxu0 0.0
  %323 = vmatpush.xpose.msra.mxu0 0.0
  %324 = vmatpush.xpose.msra.mxu0 0.0
  %325 = vmatpush.xpose.msra.mxu0 0.0
  %326 = vmatpush.xpose.msra.mxu0 0.0
  %327 = vmatpush.xpose.msra.mxu0 %v310
  %328 = vmatmul.f32.gmra.mxu0 %v307
  %v329 = vpop.f32.mrf.mxu0
  %v330 = vadd.f32 %v130, %v329
  %331 = vdwg.mxu0
  %v333 = vsel %vm305, %v231, 0
  %v336 = vsel %vm305, %v267, 0
  %338 = vmatpush.xpose.msra.mxu0 0.0
  %339 = vmatpush.xpose.msra.mxu0 0.0
  %340 = vmatpush.xpose.msra.mxu0 0.0
  %341 = vmatpush.xpose.msra.mxu0 0.0
  %342 = vmatpush.xpose.msra.mxu0 0.0
  %343 = vmatpush.xpose.msra.mxu0 0.0
  %344 = vmatpush.xpose.msra.mxu0 0.0
  %345 = vmatpush.xpose.msra.mxu0 0.0
  %346 = vmatpush.xpose.msra.mxu0 0.0
  %347 = vmatpush.xpose.msra.mxu0 0.0
  %348 = vmatpush.xpose.msra.mxu0 0.0
  %349 = vmatpush.xpose.msra.mxu0 0.0
  %350 = vmatpush.xpose.msra.mxu0 0.0
  %351 = vmatpush.xpose.msra.mxu0 0.0
  %352 = vmatpush.xpose.msra.mxu0 0.0
  %353 = vmatpush.xpose.msra.mxu0 %v336
  %354 = vmatmul.f32.gmra.mxu0 %v333
  %v355 = vpop.f32.mrf.mxu0
  %v356 = vadd.f32 %v130, %v355
  %357 = vdwg.mxu0
  %v358 = vsel %vm305, %v330, -inf
  %359 = vmax.xlane.f32.xlu0 %v358
  %v360 = vpop.xlane.xlu0 %359
  %v361 = vsel %vm305, %v356, -inf
  %362 = vmax.xlane.f32.xlu0 %v361
  %v363 = vpop.xlane.xlu0 %362
  %v364 = vsub.f32 %v330, %v360
  %v365 = vsub.f32 %v356, %v363
  %v366 = vmul.f32 %v364, 1.442695
  %v367 = vpow.pop %v366
  %v368 = vmul.f32 %v365, 1.442695
  %v369 = vpow.pop %v368
  %v370 = vsel %vm305, %v367, 0.0
  %371 = vadd.xlane.f32.xlu0 %v370
  %v372 = vpop.xlane.xlu0 %371
  %v373 = vsel %vm305, %v369, 0.0
  %374 = vadd.xlane.f32.xlu0 %v373
  %v375 = vpop.xlane.xlu0 %374
  %v376 = vrcp.pop %v372
  %v377 = vrcp.pop %v375
  %v378 = vmul.f32 %v367, %v376
  %v379 = vmul.f32 %v369, %v377
  %v381 = vsel %vm305, %v378, 0
  %383 = vmatpush.msra.mxu0 0.0
  %384 = vmatpush.msra.mxu0 0.0
  %385 = vmatpush.msra.mxu0 0.0
  %386 = vmatpush.msra.mxu0 0.0
  %387 = vmatpush.msra.mxu0 0.0
  %388 = vmatpush.msra.mxu0 0.0
  %389 = vmatpush.msra.mxu0 0.0
  %390 = vmatpush.msra.mxu0 0.0
  %391 = vmatpush.msra.mxu0 0.0
  %392 = vmatpush.msra.mxu0 0.0
  %393 = vmatpush.msra.mxu0 0.0
  %394 = vmatpush.msra.mxu0 0.0
  %395 = vmatpush.msra.mxu0 0.0
  %396 = vmatpush.msra.mxu0 0.0
  %397 = vmatpush.msra.mxu0 0.0
  %398 = vmatpush.msra.mxu0 %v301
  %399 = vmatmul.f32.gmra.mxu0 %v381
  %v400 = vpop.f32.mrf.mxu0
  %v401 = vadd.f32 0.0, %v400
  %402 = vdwg.mxu0
  %v404 = vsel %vm305, %v379, 0
  %406 = vmatpush.msra.mxu0 0.0
  %407 = vmatpush.msra.mxu0 0.0
  %408 = vmatpush.msra.mxu0 0.0
  %409 = vmatpush.msra.mxu0 0.0
  %410 = vmatpush.msra.mxu0 0.0
  %411 = vmatpush.msra.mxu0 0.0
  %412 = vmatpush.msra.mxu0 0.0
  %413 = vmatpush.msra.mxu0 0.0
  %414 = vmatpush.msra.mxu0 0.0
  %415 = vmatpush.msra.mxu0 0.0
  %416 = vmatpush.msra.mxu0 0.0
  %417 = vmatpush.msra.mxu0 0.0
  %418 = vmatpush.msra.mxu0 0.0
  %419 = vmatpush.msra.mxu0 0.0
  %420 = vmatpush.msra.mxu0 0.0
  %421 = vmatpush.msra.mxu0 %v303
  %422 = vmatmul.f32.gmra.mxu0 %v404
  %v423 = vpop.f32.mrf.mxu0
  %v424 = vadd.f32 0.0, %v423
  %425 = vdwg.mxu0
  %v426 = vpack.c.bf16 %v424, %v401
  %v427 = vld [vmem:[%s7] sm:$0xf]
  %s428 = scalar_lea.vmem %s5, 16
  %v429 = vld [vmem:[%s428] sm:$0xf]
  %v430 = vld [vmem:[%s428 + $0x4] sm:$0xf]
  %v431 = vld [vmem:[%s428 + $0x8] sm:$0xf]
  %v432 = vld [vmem:[%s428 + $0xc] sm:$0xf]
  %s433 = scalar_lea.vmem %s6, 1
  %v434 = vld [vmem:[%s433] sm:$0x1]
  %v436 = vperm.slane %v434, 0
  %v442 = vunpack.c.l.b16 %v429
  %v443 = vunpack.c.l.b16 %v430
  %v444 = vunpack.c.l.b16 %v431
  %v445 = vunpack.c.l.b16 %v432
  %v446 = vpack.c.b16 %v443, %v442
  %v447 = vpack.c.b16 %v445, %v444
  %450 = vmatpush.bf16.msra.mxu0 0
  %451 = vmatpush.bf16.msra.mxu0 0
  %452 = vmatpush.bf16.msra.mxu0 0
  %453 = vmatpush.bf16.msra.mxu0 0
  %454 = vmatpush.bf16.msra.mxu0 0
  %455 = vmatpush.bf16.msra.mxu0 0
  %456 = vmatpush.bf16.msra.mxu0 %v447
  %457 = vmatpush.bf16.msra.mxu0 %v446
  %458 = vmatmul.bf16.gmra.mxu0 %v217
  %v459 = vpop.f32.mrf.mxu0
  %v460 = vadd.f32 %v436, %v459
  %v461 = vpop.f32.mrf.mxu0
  %v462 = vadd.f32 %v436, %v461
  %463 = vdwg.mxu0
  %s464 = scalar_lea.vmem %s5, 80
  %v465 = vld [vmem:[%s464] sm:$0xf]
  %v466 = vld [vmem:[%s464 + $0x4] sm:$0xf]
  %v467 = vld [vmem:[%s464 + $0x8] sm:$0xf]
  %v468 = vld [vmem:[%s464 + $0xc] sm:$0xf]
  %s469 = scalar_lea.vmem %s6, 5
  %v470 = vld [vmem:[%s469] sm:$0x1]
  %v472 = vperm.slane %v470, 0
  %v478 = vunpack.c.l.b16 %v465
  %v479 = vunpack.c.l.b16 %v466
  %v480 = vunpack.c.l.b16 %v467
  %v481 = vunpack.c.l.b16 %v468
  %v482 = vpack.c.b16 %v479, %v478
  %v483 = vpack.c.b16 %v481, %v480
  %486 = vmatpush.bf16.msra.mxu0 0
  %487 = vmatpush.bf16.msra.mxu0 0
  %488 = vmatpush.bf16.msra.mxu0 0
  %489 = vmatpush.bf16.msra.mxu0 0
  %490 = vmatpush.bf16.msra.mxu0 0
  %491 = vmatpush.bf16.msra.mxu0 0
  %492 = vmatpush.bf16.msra.mxu0 %v483
  %493 = vmatpush.bf16.msra.mxu0 %v482
  %494 = vmatmul.bf16.gmra.mxu0 %v217
  %v495 = vpop.f32.mrf.mxu0
  %v496 = vadd.f32 %v472, %v495
  %v497 = vpop.f32.mrf.mxu0
  %v498 = vadd.f32 %v472, %v497
  %499 = vdwg.mxu0
  %s500 = scalar_lea.vmem %s5, 144
  %v501 = vld [vmem:[%s500] sm:$0xf]
  %v502 = vld [vmem:[%s500 + $0x4] sm:$0xf]
  %v503 = vld [vmem:[%s500 + $0x8] sm:$0xf]
  %v504 = vld [vmem:[%s500 + $0xc] sm:$0xf]
  %s505 = scalar_lea.vmem %s6, 9
  %v506 = vld [vmem:[%s505] sm:$0x1]
  %v508 = vperm.slane %v506, 0
  %v514 = vunpack.c.l.b16 %v501
  %v515 = vunpack.c.l.b16 %v502
  %v516 = vunpack.c.l.b16 %v503
  %v517 = vunpack.c.l.b16 %v504
  %v518 = vpack.c.b16 %v515, %v514
  %v519 = vpack.c.b16 %v517, %v516
  %522 = vmatpush.bf16.msra.mxu0 0
  %523 = vmatpush.bf16.msra.mxu0 0
  %524 = vmatpush.bf16.msra.mxu0 0
  %525 = vmatpush.bf16.msra.mxu0 0
  %526 = vmatpush.bf16.msra.mxu0 0
  %527 = vmatpush.bf16.msra.mxu0 0
  %528 = vmatpush.bf16.msra.mxu0 %v519
  %529 = vmatpush.bf16.msra.mxu0 %v518
  %530 = vmatmul.bf16.gmra.mxu0 %v217
  %v531 = vpop.f32.mrf.mxu0
  %v532 = vadd.f32 %v508, %v531
  %v533 = vpop.f32.mrf.mxu0
  %v534 = vadd.f32 %v508, %v533
  %535 = vdwg.mxu0
  %v537 = vsel %vm305, %v460, 0
  %v540 = vsel %vm305, %v496, 0
  %542 = vmatpush.xpose.msra.mxu0 0.0
  %543 = vmatpush.xpose.msra.mxu0 0.0
  %544 = vmatpush.xpose.msra.mxu0 0.0
  %545 = vmatpush.xpose.msra.mxu0 0.0
  %546 = vmatpush.xpose.msra.mxu0 0.0
  %547 = vmatpush.xpose.msra.mxu0 0.0
  %548 = vmatpush.xpose.msra.mxu0 0.0
  %549 = vmatpush.xpose.msra.mxu0 0.0
  %550 = vmatpush.xpose.msra.mxu0 0.0
  %551 = vmatpush.xpose.msra.mxu0 0.0
  %552 = vmatpush.xpose.msra.mxu0 0.0
  %553 = vmatpush.xpose.msra.mxu0 0.0
  %554 = vmatpush.xpose.msra.mxu0 0.0
  %555 = vmatpush.xpose.msra.mxu0 0.0
  %556 = vmatpush.xpose.msra.mxu0 0.0
  %557 = vmatpush.xpose.msra.mxu0 %v540
  %558 = vmatmul.f32.gmra.mxu0 %v537
  %v559 = vpop.f32.mrf.mxu0
  %v560 = vadd.f32 %v130, %v559
  %561 = vdwg.mxu0
  %v563 = vsel %vm305, %v462, 0
  %v566 = vsel %vm305, %v498, 0
  %568 = vmatpush.xpose.msra.mxu0 0.0
  %569 = vmatpush.xpose.msra.mxu0 0.0
  %570 = vmatpush.xpose.msra.mxu0 0.0
  %571 = vmatpush.xpose.msra.mxu0 0.0
  %572 = vmatpush.xpose.msra.mxu0 0.0
  %573 = vmatpush.xpose.msra.mxu0 0.0
  %574 = vmatpush.xpose.msra.mxu0 0.0
  %575 = vmatpush.xpose.msra.mxu0 0.0
  %576 = vmatpush.xpose.msra.mxu0 0.0
  %577 = vmatpush.xpose.msra.mxu0 0.0
  %578 = vmatpush.xpose.msra.mxu0 0.0
  %579 = vmatpush.xpose.msra.mxu0 0.0
  %580 = vmatpush.xpose.msra.mxu0 0.0
  %581 = vmatpush.xpose.msra.mxu0 0.0
  %582 = vmatpush.xpose.msra.mxu0 0.0
  %583 = vmatpush.xpose.msra.mxu0 %v566
  %584 = vmatmul.f32.gmra.mxu0 %v563
  %v585 = vpop.f32.mrf.mxu0
  %v586 = vadd.f32 %v130, %v585
  %587 = vdwg.mxu0
  %v588 = vsel %vm305, %v560, -inf
  %589 = vmax.xlane.f32.xlu0 %v588
  %v590 = vpop.xlane.xlu0 %589
  %v591 = vsel %vm305, %v586, -inf
  %592 = vmax.xlane.f32.xlu0 %v591
  %v593 = vpop.xlane.xlu0 %592
  %v594 = vsub.f32 %v560, %v590
  %v595 = vsub.f32 %v586, %v593
  %v596 = vmul.f32 %v594, 1.442695
  %v597 = vpow.pop %v596
  %v598 = vmul.f32 %v595, 1.442695
  %v599 = vpow.pop %v598
  %v600 = vsel %vm305, %v597, 0.0
  %601 = vadd.xlane.f32.xlu0 %v600
  %v602 = vpop.xlane.xlu0 %601
  %v603 = vsel %vm305, %v599, 0.0
  %604 = vadd.xlane.f32.xlu0 %v603
  %v605 = vpop.xlane.xlu0 %604
  %v606 = vrcp.pop %v602
  %v607 = vrcp.pop %v605
  %v608 = vmul.f32 %v597, %v606
  %v609 = vmul.f32 %v599, %v607
  %v611 = vsel %vm305, %v608, 0
  %613 = vmatpush.msra.mxu0 0.0
  %614 = vmatpush.msra.mxu0 0.0
  %615 = vmatpush.msra.mxu0 0.0
  %616 = vmatpush.msra.mxu0 0.0
  %617 = vmatpush.msra.mxu0 0.0
  %618 = vmatpush.msra.mxu0 0.0
  %619 = vmatpush.msra.mxu0 0.0
  %620 = vmatpush.msra.mxu0 0.0
  %621 = vmatpush.msra.mxu0 0.0
  %622 = vmatpush.msra.mxu0 0.0
  %623 = vmatpush.msra.mxu0 0.0
  %624 = vmatpush.msra.mxu0 0.0
  %625 = vmatpush.msra.mxu0 0.0
  %626 = vmatpush.msra.mxu0 0.0
  %627 = vmatpush.msra.mxu0 0.0
  %628 = vmatpush.msra.mxu0 %v532
  %629 = vmatmul.f32.gmra.mxu0 %v611
  %v630 = vpop.f32.mrf.mxu0
  %v631 = vadd.f32 0.0, %v630
  %632 = vdwg.mxu0
  %v634 = vsel %vm305, %v609, 0
  %636 = vmatpush.msra.mxu0 0.0
  %637 = vmatpush.msra.mxu0 0.0
  %638 = vmatpush.msra.mxu0 0.0
  %639 = vmatpush.msra.mxu0 0.0
  %640 = vmatpush.msra.mxu0 0.0
  %641 = vmatpush.msra.mxu0 0.0
  %642 = vmatpush.msra.mxu0 0.0
  %643 = vmatpush.msra.mxu0 0.0
  %644 = vmatpush.msra.mxu0 0.0
  %645 = vmatpush.msra.mxu0 0.0
  %646 = vmatpush.msra.mxu0 0.0
  %647 = vmatpush.msra.mxu0 0.0
  %648 = vmatpush.msra.mxu0 0.0
  %649 = vmatpush.msra.mxu0 0.0
  %650 = vmatpush.msra.mxu0 0.0
  %651 = vmatpush.msra.mxu0 %v534
  %652 = vmatmul.f32.gmra.mxu0 %v634
  %v653 = vpop.f32.mrf.mxu0
  %v654 = vadd.f32 0.0, %v653
  %655 = vdwg.mxu0
  %v656 = vpack.c.bf16 %v654, %v631
  %s657 = scalar_lea.vmem %s7, 4
  %v658 = vld [vmem:[%s657] sm:$0xf]
  %v660 = vsel %vm305, %v656, 0
  %vm662 = vcmask 1043456
  %v664 = vsel %vm662, %v658, 0
  %666 = vmatpush.bf16.msra.mxu0 0
  %667 = vmatpush.bf16.msra.mxu0 0
  %668 = vmatpush.bf16.msra.mxu0 0
  %669 = vmatpush.bf16.msra.mxu0 0
  %670 = vmatpush.bf16.msra.mxu0 0
  %671 = vmatpush.bf16.msra.mxu0 0
  %672 = vmatpush.bf16.msra.mxu0 0
  %673 = vmatpush.bf16.msra.mxu0 %v664
  %674 = vmatmul.bf16.gmra.mxu0 %v660
  %v675 = vpop.f32.mrf.mxu0
  %v676 = vadd.f32 0.0, %v675
  %v677 = vpop.f32.mrf.mxu0
  %v678 = vadd.f32 0.0, %v677
  %679 = vdwg.mxu0
  %v681 = vsel %vm305, %v426, 0
  %v684 = vsel %vm662, %v427, 0
  %686 = vmatpush.bf16.msra.mxu0 0
  %687 = vmatpush.bf16.msra.mxu0 0
  %688 = vmatpush.bf16.msra.mxu0 0
  %689 = vmatpush.bf16.msra.mxu0 0
  %690 = vmatpush.bf16.msra.mxu0 0
  %691 = vmatpush.bf16.msra.mxu0 0
  %692 = vmatpush.bf16.msra.mxu0 0
  %693 = vmatpush.bf16.msra.mxu0 %v684
  %694 = vmatmul.bf16.gmra.mxu0 %v681
  %v695 = vpop.f32.mrf.mxu0
  %v696 = vadd.f32 %v676, %v695
  %v697 = vpop.f32.mrf.mxu0
  %v698 = vadd.f32 %v678, %v697
  %699 = vdwg.mxu0
  %s700 = scalar_lea.vmem %s5, 32
  %v701 = vld [vmem:[%s700] sm:$0xf]
  %v702 = vld [vmem:[%s700 + $0x4] sm:$0xf]
  %v703 = vld [vmem:[%s700 + $0x8] sm:$0xf]
  %v704 = vld [vmem:[%s700 + $0xc] sm:$0xf]
  %s705 = scalar_lea.vmem %s6, 2
  %v706 = vld [vmem:[%s705] sm:$0x1]
  %v708 = vperm.slane %v706, 0
  %v714 = vunpack.c.l.b16 %v701
  %v715 = vunpack.c.l.b16 %v702
  %v716 = vunpack.c.l.b16 %v703
  %v717 = vunpack.c.l.b16 %v704
  %v718 = vpack.c.b16 %v715, %v714
  %v719 = vpack.c.b16 %v717, %v716
  %722 = vmatpush.bf16.msra.mxu0 0
  %723 = vmatpush.bf16.msra.mxu0 0
  %724 = vmatpush.bf16.msra.mxu0 0
  %725 = vmatpush.bf16.msra.mxu0 0
  %726 = vmatpush.bf16.msra.mxu0 0
  %727 = vmatpush.bf16.msra.mxu0 0
  %728 = vmatpush.bf16.msra.mxu0 %v719
  %729 = vmatpush.bf16.msra.mxu0 %v718
  %730 = vmatmul.bf16.gmra.mxu0 %v217
  %v731 = vpop.f32.mrf.mxu0
  %v732 = vadd.f32 %v708, %v731
  %v733 = vpop.f32.mrf.mxu0
  %v734 = vadd.f32 %v708, %v733
  %735 = vdwg.mxu0
  %s736 = scalar_lea.vmem %s5, 96
  %v737 = vld [vmem:[%s736] sm:$0xf]
  %v738 = vld [vmem:[%s736 + $0x4] sm:$0xf]
  %v739 = vld [vmem:[%s736 + $0x8] sm:$0xf]
  %v740 = vld [vmem:[%s736 + $0xc] sm:$0xf]
  %s741 = scalar_lea.vmem %s6, 6
  %v742 = vld [vmem:[%s741] sm:$0x1]
  %v744 = vperm.slane %v742, 0
  %v750 = vunpack.c.l.b16 %v737
  %v751 = vunpack.c.l.b16 %v738
  %v752 = vunpack.c.l.b16 %v739
  %v753 = vunpack.c.l.b16 %v740
  %v754 = vpack.c.b16 %v751, %v750
  %v755 = vpack.c.b16 %v753, %v752
  %758 = vmatpush.bf16.msra.mxu0 0
  %759 = vmatpush.bf16.msra.mxu0 0
  %760 = vmatpush.bf16.msra.mxu0 0
  %761 = vmatpush.bf16.msra.mxu0 0
  %762 = vmatpush.bf16.msra.mxu0 0
  %763 = vmatpush.bf16.msra.mxu0 0
  %764 = vmatpush.bf16.msra.mxu0 %v755
  %765 = vmatpush.bf16.msra.mxu0 %v754
  %766 = vmatmul.bf16.gmra.mxu0 %v217
  %v767 = vpop.f32.mrf.mxu0
  %v768 = vadd.f32 %v744, %v767
  %v769 = vpop.f32.mrf.mxu0
  %v770 = vadd.f32 %v744, %v769
  %771 = vdwg.mxu0
  %s772 = scalar_lea.vmem %s5, 160
  %v773 = vld [vmem:[%s772] sm:$0xf]
  %v774 = vld [vmem:[%s772 + $0x4] sm:$0xf]
  %v775 = vld [vmem:[%s772 + $0x8] sm:$0xf]
  %v776 = vld [vmem:[%s772 + $0xc] sm:$0xf]
  %s777 = scalar_lea.vmem %s6, 10
  %v778 = vld [vmem:[%s777] sm:$0x1]
  %v780 = vperm.slane %v778, 0
  %v786 = vunpack.c.l.b16 %v773
  %v787 = vunpack.c.l.b16 %v774
  %v788 = vunpack.c.l.b16 %v775
  %v789 = vunpack.c.l.b16 %v776
  %v790 = vpack.c.b16 %v787, %v786
  %v791 = vpack.c.b16 %v789, %v788
  %794 = vmatpush.bf16.msra.mxu0 0
  %795 = vmatpush.bf16.msra.mxu0 0
  %796 = vmatpush.bf16.msra.mxu0 0
  %797 = vmatpush.bf16.msra.mxu0 0
  %798 = vmatpush.bf16.msra.mxu0 0
  %799 = vmatpush.bf16.msra.mxu0 0
  %800 = vmatpush.bf16.msra.mxu0 %v791
  %801 = vmatpush.bf16.msra.mxu0 %v790
  %802 = vmatmul.bf16.gmra.mxu0 %v217
  %v803 = vpop.f32.mrf.mxu0
  %v804 = vadd.f32 %v780, %v803
  %v805 = vpop.f32.mrf.mxu0
  %v806 = vadd.f32 %v780, %v805
  %807 = vdwg.mxu0
  %v809 = vsel %vm305, %v732, 0
  %v812 = vsel %vm305, %v768, 0
  %814 = vmatpush.xpose.msra.mxu0 0.0
  %815 = vmatpush.xpose.msra.mxu0 0.0
  %816 = vmatpush.xpose.msra.mxu0 0.0
  %817 = vmatpush.xpose.msra.mxu0 0.0
  %818 = vmatpush.xpose.msra.mxu0 0.0
  %819 = vmatpush.xpose.msra.mxu0 0.0
  %820 = vmatpush.xpose.msra.mxu0 0.0
  %821 = vmatpush.xpose.msra.mxu0 0.0
  %822 = vmatpush.xpose.msra.mxu0 0.0
  %823 = vmatpush.xpose.msra.mxu0 0.0
  %824 = vmatpush.xpose.msra.mxu0 0.0
  %825 = vmatpush.xpose.msra.mxu0 0.0
  %826 = vmatpush.xpose.msra.mxu0 0.0
  %827 = vmatpush.xpose.msra.mxu0 0.0
  %828 = vmatpush.xpose.msra.mxu0 0.0
  %829 = vmatpush.xpose.msra.mxu0 %v812
  %830 = vmatmul.f32.gmra.mxu0 %v809
  %v831 = vpop.f32.mrf.mxu0
  %v832 = vadd.f32 %v130, %v831
  %833 = vdwg.mxu0
  %v835 = vsel %vm305, %v734, 0
  %v838 = vsel %vm305, %v770, 0
  %840 = vmatpush.xpose.msra.mxu0 0.0
  %841 = vmatpush.xpose.msra.mxu0 0.0
  %842 = vmatpush.xpose.msra.mxu0 0.0
  %843 = vmatpush.xpose.msra.mxu0 0.0
  %844 = vmatpush.xpose.msra.mxu0 0.0
  %845 = vmatpush.xpose.msra.mxu0 0.0
  %846 = vmatpush.xpose.msra.mxu0 0.0
  %847 = vmatpush.xpose.msra.mxu0 0.0
  %848 = vmatpush.xpose.msra.mxu0 0.0
  %849 = vmatpush.xpose.msra.mxu0 0.0
  %850 = vmatpush.xpose.msra.mxu0 0.0
  %851 = vmatpush.xpose.msra.mxu0 0.0
  %852 = vmatpush.xpose.msra.mxu0 0.0
  %853 = vmatpush.xpose.msra.mxu0 0.0
  %854 = vmatpush.xpose.msra.mxu0 0.0
  %855 = vmatpush.xpose.msra.mxu0 %v838
  %856 = vmatmul.f32.gmra.mxu0 %v835
  %v857 = vpop.f32.mrf.mxu0
  %v858 = vadd.f32 %v130, %v857
  %859 = vdwg.mxu0
  %v860 = vsel %vm305, %v832, -inf
  %861 = vmax.xlane.f32.xlu0 %v860
  %v862 = vpop.xlane.xlu0 %861
  %v863 = vsel %vm305, %v858, -inf
  %864 = vmax.xlane.f32.xlu0 %v863
  %v865 = vpop.xlane.xlu0 %864
  %v866 = vsub.f32 %v832, %v862
  %v867 = vsub.f32 %v858, %v865
  %v868 = vmul.f32 %v866, 1.442695
  %v869 = vpow.pop %v868
  %v870 = vmul.f32 %v867, 1.442695
  %v871 = vpow.pop %v870
  %v872 = vsel %vm305, %v869, 0.0
  %873 = vadd.xlane.f32.xlu0 %v872
  %v874 = vpop.xlane.xlu0 %873
  %v875 = vsel %vm305, %v871, 0.0
  %876 = vadd.xlane.f32.xlu0 %v875
  %v877 = vpop.xlane.xlu0 %876
  %v878 = vrcp.pop %v874
  %v879 = vrcp.pop %v877
  %v880 = vmul.f32 %v869, %v878
  %v881 = vmul.f32 %v871, %v879
  %v883 = vsel %vm305, %v880, 0
  %885 = vmatpush.msra.mxu0 0.0
  %886 = vmatpush.msra.mxu0 0.0
  %887 = vmatpush.msra.mxu0 0.0
  %888 = vmatpush.msra.mxu0 0.0
  %889 = vmatpush.msra.mxu0 0.0
  %890 = vmatpush.msra.mxu0 0.0
  %891 = vmatpush.msra.mxu0 0.0
  %892 = vmatpush.msra.mxu0 0.0
  %893 = vmatpush.msra.mxu0 0.0
  %894 = vmatpush.msra.mxu0 0.0
  %895 = vmatpush.msra.mxu0 0.0
  %896 = vmatpush.msra.mxu0 0.0
  %897 = vmatpush.msra.mxu0 0.0
  %898 = vmatpush.msra.mxu0 0.0
  %899 = vmatpush.msra.mxu0 0.0
  %900 = vmatpush.msra.mxu0 %v804
  %901 = vmatmul.f32.gmra.mxu0 %v883
  %v902 = vpop.f32.mrf.mxu0
  %v903 = vadd.f32 0.0, %v902
  %904 = vdwg.mxu0
  %v906 = vsel %vm305, %v881, 0
  %908 = vmatpush.msra.mxu0 0.0
  %909 = vmatpush.msra.mxu0 0.0
  %910 = vmatpush.msra.mxu0 0.0
  %911 = vmatpush.msra.mxu0 0.0
  %912 = vmatpush.msra.mxu0 0.0
  %913 = vmatpush.msra.mxu0 0.0
  %914 = vmatpush.msra.mxu0 0.0
  %915 = vmatpush.msra.mxu0 0.0
  %916 = vmatpush.msra.mxu0 0.0
  %917 = vmatpush.msra.mxu0 0.0
  %918 = vmatpush.msra.mxu0 0.0
  %919 = vmatpush.msra.mxu0 0.0
  %920 = vmatpush.msra.mxu0 0.0
  %921 = vmatpush.msra.mxu0 0.0
  %922 = vmatpush.msra.mxu0 0.0
  %923 = vmatpush.msra.mxu0 %v806
  %924 = vmatmul.f32.gmra.mxu0 %v906
  %v925 = vpop.f32.mrf.mxu0
  %v926 = vadd.f32 0.0, %v925
  %927 = vdwg.mxu0
  %v928 = vpack.c.bf16 %v926, %v903
  %s929 = scalar_lea.vmem %s7, 8
  %v930 = vld [vmem:[%s929] sm:$0xf]
  %v932 = vsel %vm305, %v928, 0
  %v935 = vsel %vm662, %v930, 0
  %937 = vmatpush.bf16.msra.mxu0 0
  %938 = vmatpush.bf16.msra.mxu0 0
  %939 = vmatpush.bf16.msra.mxu0 0
  %940 = vmatpush.bf16.msra.mxu0 0
  %941 = vmatpush.bf16.msra.mxu0 0
  %942 = vmatpush.bf16.msra.mxu0 0
  %943 = vmatpush.bf16.msra.mxu0 0
  %944 = vmatpush.bf16.msra.mxu0 %v935
  %945 = vmatmul.bf16.gmra.mxu0 %v932
  %v946 = vpop.f32.mrf.mxu0
  %v947 = vadd.f32 0.0, %v946
  %v948 = vpop.f32.mrf.mxu0
  %v949 = vadd.f32 0.0, %v948
  %950 = vdwg.mxu0
  %v951 = vadd.f32 %v696, %v947
  %v952 = vadd.f32 %v698, %v949
  %s953 = scalar_lea.vmem %s5, 48
  %v954 = vld [vmem:[%s953] sm:$0xf]
  %v955 = vld [vmem:[%s953 + $0x4] sm:$0xf]
  %v956 = vld [vmem:[%s953 + $0x8] sm:$0xf]
  %v957 = vld [vmem:[%s953 + $0xc] sm:$0xf]
  %s958 = scalar_lea.vmem %s6, 3
  %v959 = vld [vmem:[%s958] sm:$0x1]
  %v961 = vperm.slane %v959, 0
  %v967 = vunpack.c.l.b16 %v954
  %v968 = vunpack.c.l.b16 %v955
  %v969 = vunpack.c.l.b16 %v956
  %v970 = vunpack.c.l.b16 %v957
  %v971 = vpack.c.b16 %v968, %v967
  %v972 = vpack.c.b16 %v970, %v969
  %975 = vmatpush.bf16.msra.mxu0 0
  %976 = vmatpush.bf16.msra.mxu0 0
  %977 = vmatpush.bf16.msra.mxu0 0
  %978 = vmatpush.bf16.msra.mxu0 0
  %979 = vmatpush.bf16.msra.mxu0 0
  %980 = vmatpush.bf16.msra.mxu0 0
  %981 = vmatpush.bf16.msra.mxu0 %v972
  %982 = vmatpush.bf16.msra.mxu0 %v971
  %983 = vmatmul.bf16.gmra.mxu0 %v217
  %v984 = vpop.f32.mrf.mxu0
  %v985 = vadd.f32 %v961, %v984
  %v986 = vpop.f32.mrf.mxu0
  %v987 = vadd.f32 %v961, %v986
  %988 = vdwg.mxu0
  %s989 = scalar_lea.vmem %s5, 112
  %v990 = vld [vmem:[%s989] sm:$0xf]
  %v991 = vld [vmem:[%s989 + $0x4] sm:$0xf]
  %v992 = vld [vmem:[%s989 + $0x8] sm:$0xf]
  %v993 = vld [vmem:[%s989 + $0xc] sm:$0xf]
  %s994 = scalar_lea.vmem %s6, 7
  %v995 = vld [vmem:[%s994] sm:$0x1]
  %v997 = vperm.slane %v995, 0
  %v1003 = vunpack.c.l.b16 %v990
  %v1004 = vunpack.c.l.b16 %v991
  %v1005 = vunpack.c.l.b16 %v992
  %v1006 = vunpack.c.l.b16 %v993
  %v1007 = vpack.c.b16 %v1004, %v1003
  %v1008 = vpack.c.b16 %v1006, %v1005
  %1011 = vmatpush.bf16.msra.mxu0 0
  %1012 = vmatpush.bf16.msra.mxu0 0
  %1013 = vmatpush.bf16.msra.mxu0 0
  %1014 = vmatpush.bf16.msra.mxu0 0
  %1015 = vmatpush.bf16.msra.mxu0 0
  %1016 = vmatpush.bf16.msra.mxu0 0
  %1017 = vmatpush.bf16.msra.mxu0 %v1008
  %1018 = vmatpush.bf16.msra.mxu0 %v1007
  %1019 = vmatmul.bf16.gmra.mxu0 %v217
  %v1020 = vpop.f32.mrf.mxu0
  %v1021 = vadd.f32 %v997, %v1020
  %v1022 = vpop.f32.mrf.mxu0
  %v1023 = vadd.f32 %v997, %v1022
  %1024 = vdwg.mxu0
  %s1025 = scalar_lea.vmem %s5, 176
  %v1026 = vld [vmem:[%s1025] sm:$0xf]
  %v1027 = vld [vmem:[%s1025 + $0x4] sm:$0xf]
  %v1028 = vld [vmem:[%s1025 + $0x8] sm:$0xf]
  %v1029 = vld [vmem:[%s1025 + $0xc] sm:$0xf]
  %s1030 = scalar_lea.vmem %s6, 11
  %v1031 = vld [vmem:[%s1030] sm:$0x1]
  %v1033 = vperm.slane %v1031, 0
  %v1039 = vunpack.c.l.b16 %v1026
  %v1040 = vunpack.c.l.b16 %v1027
  %v1041 = vunpack.c.l.b16 %v1028
  %v1042 = vunpack.c.l.b16 %v1029
  %v1043 = vpack.c.b16 %v1040, %v1039
  %v1044 = vpack.c.b16 %v1042, %v1041
  %1047 = vmatpush.bf16.msra.mxu0 0
  %1048 = vmatpush.bf16.msra.mxu0 0
  %1049 = vmatpush.bf16.msra.mxu0 0
  %1050 = vmatpush.bf16.msra.mxu0 0
  %1051 = vmatpush.bf16.msra.mxu0 0
  %1052 = vmatpush.bf16.msra.mxu0 0
  %1053 = vmatpush.bf16.msra.mxu0 %v1044
  %1054 = vmatpush.bf16.msra.mxu0 %v1043
  %1055 = vmatmul.bf16.gmra.mxu0 %v217
  %v1056 = vpop.f32.mrf.mxu0
  %v1057 = vadd.f32 %v1033, %v1056
  %v1058 = vpop.f32.mrf.mxu0
  %v1059 = vadd.f32 %v1033, %v1058
  %1060 = vdwg.mxu0
  %v1062 = vsel %vm305, %v985, 0
  %v1065 = vsel %vm305, %v1021, 0
  %1067 = vmatpush.xpose.msra.mxu0 0.0
  %1068 = vmatpush.xpose.msra.mxu0 0.0
  %1069 = vmatpush.xpose.msra.mxu0 0.0
  %1070 = vmatpush.xpose.msra.mxu0 0.0
  %1071 = vmatpush.xpose.msra.mxu0 0.0
  %1072 = vmatpush.xpose.msra.mxu0 0.0
  %1073 = vmatpush.xpose.msra.mxu0 0.0
  %1074 = vmatpush.xpose.msra.mxu0 0.0
  %1075 = vmatpush.xpose.msra.mxu0 0.0
  %1076 = vmatpush.xpose.msra.mxu0 0.0
  %1077 = vmatpush.xpose.msra.mxu0 0.0
  %1078 = vmatpush.xpose.msra.mxu0 0.0
  %1079 = vmatpush.xpose.msra.mxu0 0.0
  %1080 = vmatpush.xpose.msra.mxu0 0.0
  %1081 = vmatpush.xpose.msra.mxu0 0.0
  %1082 = vmatpush.xpose.msra.mxu0 %v1065
  %1083 = vmatmul.f32.gmra.mxu0 %v1062
  %v1084 = vpop.f32.mrf.mxu0
  %v1085 = vadd.f32 %v130, %v1084
  %1086 = vdwg.mxu0
  %v1088 = vsel %vm305, %v987, 0
  %v1091 = vsel %vm305, %v1023, 0
  %1093 = vmatpush.xpose.msra.mxu0 0.0
  %1094 = vmatpush.xpose.msra.mxu0 0.0
  %1095 = vmatpush.xpose.msra.mxu0 0.0
  %1096 = vmatpush.xpose.msra.mxu0 0.0
  %1097 = vmatpush.xpose.msra.mxu0 0.0
  %1098 = vmatpush.xpose.msra.mxu0 0.0
  %1099 = vmatpush.xpose.msra.mxu0 0.0
  %1100 = vmatpush.xpose.msra.mxu0 0.0
  %1101 = vmatpush.xpose.msra.mxu0 0.0
  %1102 = vmatpush.xpose.msra.mxu0 0.0
  %1103 = vmatpush.xpose.msra.mxu0 0.0
  %1104 = vmatpush.xpose.msra.mxu0 0.0
  %1105 = vmatpush.xpose.msra.mxu0 0.0
  %1106 = vmatpush.xpose.msra.mxu0 0.0
  %1107 = vmatpush.xpose.msra.mxu0 0.0
  %1108 = vmatpush.xpose.msra.mxu0 %v1091
  %1109 = vmatmul.f32.gmra.mxu0 %v1088
  %v1110 = vpop.f32.mrf.mxu0
  %v1111 = vadd.f32 %v130, %v1110
  %1112 = vdwg.mxu0
  %v1113 = vsel %vm305, %v1085, -inf
  %1114 = vmax.xlane.f32.xlu0 %v1113
  %v1115 = vpop.xlane.xlu0 %1114
  %v1116 = vsel %vm305, %v1111, -inf
  %1117 = vmax.xlane.f32.xlu0 %v1116
  %v1118 = vpop.xlane.xlu0 %1117
  %v1119 = vsub.f32 %v1085, %v1115
  %v1120 = vsub.f32 %v1111, %v1118
  %v1121 = vmul.f32 %v1119, 1.442695
  %v1122 = vpow.pop %v1121
  %v1123 = vmul.f32 %v1120, 1.442695
  %v1124 = vpow.pop %v1123
  %v1125 = vsel %vm305, %v1122, 0.0
  %1126 = vadd.xlane.f32.xlu0 %v1125
  %v1127 = vpop.xlane.xlu0 %1126
  %v1128 = vsel %vm305, %v1124, 0.0
  %1129 = vadd.xlane.f32.xlu0 %v1128
  %v1130 = vpop.xlane.xlu0 %1129
  %v1131 = vrcp.pop %v1127
  %v1132 = vrcp.pop %v1130
  %v1133 = vmul.f32 %v1122, %v1131
  %v1134 = vmul.f32 %v1124, %v1132
  %v1136 = vsel %vm305, %v1133, 0
  %1138 = vmatpush.msra.mxu0 0.0
  %1139 = vmatpush.msra.mxu0 0.0
  %1140 = vmatpush.msra.mxu0 0.0
  %1141 = vmatpush.msra.mxu0 0.0
  %1142 = vmatpush.msra.mxu0 0.0
  %1143 = vmatpush.msra.mxu0 0.0
  %1144 = vmatpush.msra.mxu0 0.0
  %1145 = vmatpush.msra.mxu0 0.0
  %1146 = vmatpush.msra.mxu0 0.0
  %1147 = vmatpush.msra.mxu0 0.0
  %1148 = vmatpush.msra.mxu0 0.0
  %1149 = vmatpush.msra.mxu0 0.0
  %1150 = vmatpush.msra.mxu0 0.0
  %1151 = vmatpush.msra.mxu0 0.0
  %1152 = vmatpush.msra.mxu0 0.0
  %1153 = vmatpush.msra.mxu0 %v1057
  %1154 = vmatmul.f32.gmra.mxu0 %v1136
  %v1155 = vpop.f32.mrf.mxu0
  %v1156 = vadd.f32 0.0, %v1155
  %1157 = vdwg.mxu0
  %v1159 = vsel %vm305, %v1134, 0
  %1161 = vmatpush.msra.mxu0 0.0
  %1162 = vmatpush.msra.mxu0 0.0
  %1163 = vmatpush.msra.mxu0 0.0
  %1164 = vmatpush.msra.mxu0 0.0
  %1165 = vmatpush.msra.mxu0 0.0
  %1166 = vmatpush.msra.mxu0 0.0
  %1167 = vmatpush.msra.mxu0 0.0
  %1168 = vmatpush.msra.mxu0 0.0
  %1169 = vmatpush.msra.mxu0 0.0
  %1170 = vmatpush.msra.mxu0 0.0
  %1171 = vmatpush.msra.mxu0 0.0
  %1172 = vmatpush.msra.mxu0 0.0
  %1173 = vmatpush.msra.mxu0 0.0
  %1174 = vmatpush.msra.mxu0 0.0
  %1175 = vmatpush.msra.mxu0 0.0
  %1176 = vmatpush.msra.mxu0 %v1059
  %1177 = vmatmul.f32.gmra.mxu0 %v1159
  %v1178 = vpop.f32.mrf.mxu0
  %v1179 = vadd.f32 0.0, %v1178
  %1180 = vdwg.mxu0
  %v1181 = vpack.c.bf16 %v1179, %v1156
  %s1182 = scalar_lea.vmem %s7, 12
  %v1183 = vld [vmem:[%s1182] sm:$0xf]
  %v1185 = vsel %vm305, %v1181, 0
  %v1188 = vsel %vm662, %v1183, 0
  %1190 = vmatpush.bf16.msra.mxu0 0
  %1191 = vmatpush.bf16.msra.mxu0 0
  %1192 = vmatpush.bf16.msra.mxu0 0
  %1193 = vmatpush.bf16.msra.mxu0 0
  %1194 = vmatpush.bf16.msra.mxu0 0
  %1195 = vmatpush.bf16.msra.mxu0 0
  %1196 = vmatpush.bf16.msra.mxu0 0
  %1197 = vmatpush.bf16.msra.mxu0 %v1188
  %1198 = vmatmul.bf16.gmra.mxu0 %v1185
  %v1199 = vpop.f32.mrf.mxu0
  %v1200 = vadd.f32 0.0, %v1199
  %v1201 = vpop.f32.mrf.mxu0
  %v1202 = vadd.f32 0.0, %v1201
  %1203 = vdwg.mxu0
  %v1204 = vadd.f32 %v951, %v1200
  %v1205 = vadd.f32 %v952, %v1202
  %v1206 = vadd.f32 %v125, %v1204
  %v1207 = vadd.f32 %v126, %v1205
  %v1208 = vld [vmem:[%s8] sm:$0x1]
  %v1210 = vperm.slane %v1208, 0
  %v1212 = vadd.f32 %v1206, %v1210
  %v1213 = vadd.f32 %v1207, %v1210
  %v1214 = vld [vmem:[%s9] sm:$0x1]
  %v1215 = vld [vmem:[%s10] sm:$0x1]
  %v1216 = vsel %vm133, %v1212, 0.0
  %1217 = vadd.xlane.f32.xlu0 %v1216
  %v1218 = vpop.xlane.xlu0 %1217
  %v1219 = vsel %vm133, %v1213, 0.0
  %1220 = vadd.xlane.f32.xlu0 %v1219
  %v1221 = vpop.xlane.xlu0 %1220
  %v1222 = vmul.f32 %v1218, %v146
  %v1223 = vmul.f32 %v1221, %v146
  %v1224 = vsub.f32 %v1212, %v1222
  %v1225 = vsub.f32 %v1213, %v1223
  %v1226 = vmul.f32 %v1224, %v1224
  %v1227 = vmul.f32 %v1225, %v1225
  %v1228 = vsel %vm133, %v1226, 0.0
  %1229 = vadd.xlane.f32.xlu0 %v1228
  %v1230 = vpop.xlane.xlu0 %1229
  %v1231 = vsel %vm133, %v1227, 0.0
  %1232 = vadd.xlane.f32.xlu0 %v1231
  %v1233 = vpop.xlane.xlu0 %1232
  %v1234 = vmul.f32 %v1230, %v146
  %v1235 = vmul.f32 %v1233, %v146
  %v1236 = vadd.f32 %v1234, 1e-05
  %v1237 = vadd.f32 %v1235, 1e-05
  %v1238 = vrsqrt.pop %v1236
  %v1239 = vmul.f32 %v1238, %v1236
  %v1240 = vmul.f32 %v1239, %v1238
  %v1241 = vmul.f32 0.5, %v1240
  %v1242 = vsub.f32 1.5, %v1241
  %v1243 = vmul.f32 %v1238, %v1242
  %vm1244 = vweird.f32 %v1236
  %vm1245 = vweird.f32 %v1238
  %vm1246 = vmor %vm1244, %vm1245
  %v1247 = vsel %vm1246, %v1238, %v1243
  %v1248 = vrsqrt.pop %v1237
  %v1249 = vmul.f32 %v1248, %v1237
  %v1250 = vmul.f32 %v1249, %v1248
  %v1251 = vmul.f32 0.5, %v1250
  %v1252 = vsub.f32 1.5, %v1251
  %v1253 = vmul.f32 %v1248, %v1252
  %vm1254 = vweird.f32 %v1237
  %vm1255 = vweird.f32 %v1248
  %vm1256 = vmor %vm1254, %vm1255
  %v1257 = vsel %vm1256, %v1248, %v1253
  %v1258 = vmul.f32 %v1224, %v1247
  %v1259 = vmul.f32 %v1225, %v1257
  %v1261 = vperm.slane %v1214, 0
  %v1263 = vmul.f32 %v1258, %v1261
  %v1264 = vmul.f32 %v1259, %v1261
  %v1266 = vperm.slane %v1215, 0
  %v1268 = vadd.f32 %v1263, %v1266
  %v1269 = vadd.f32 %v1264, %v1266
  %v1270 = vpack.c.bf16 %v1269, %v1268
  %v1271 = vld [vmem:[%s11] sm:$0xf]
  %v1272 = vld [vmem:[%s11 + $0x4] sm:$0xf]
  %v1273 = vld [vmem:[%s11 + $0x8] sm:$0xf]
  %v1274 = vld [vmem:[%s11 + $0xc] sm:$0xf]
  %v1275 = vld [vmem:[%s12] sm:$0x1]
  %v1277 = vperm.slane %v1275, 0
  %v1283 = vunpack.c.l.b16 %v1271
  %v1284 = vunpack.c.l.b16 %v1272
  %v1285 = vunpack.c.l.b16 %v1273
  %v1286 = vunpack.c.l.b16 %v1274
  %v1287 = vpack.c.b16 %v1284, %v1283
  %v1288 = vpack.c.b16 %v1286, %v1285
  %v1292 = vsel %vm133, %v1270, 0
  %1294 = vmatpush.bf16.msra.mxu0 0
  %1295 = vmatpush.bf16.msra.mxu0 0
  %1296 = vmatpush.bf16.msra.mxu0 0
  %1297 = vmatpush.bf16.msra.mxu0 0
  %1298 = vmatpush.bf16.msra.mxu0 0
  %1299 = vmatpush.bf16.msra.mxu0 0
  %1300 = vmatpush.bf16.msra.mxu0 %v1288
  %1301 = vmatpush.bf16.msra.mxu0 %v1287
  %1302 = vmatmul.bf16.gmra.mxu0 %v1292
  %v1303 = vpop.f32.mrf.mxu0
  %v1304 = vadd.f32 %v1277, %v1303
  %v1305 = vpop.f32.mrf.mxu0
  %v1306 = vadd.f32 %v1277, %v1305
  %1307 = vdwg.mxu0
  %v1308 = vmul.f32 %v1304, 1.702
  %v1309 = vmul.f32 %v1306, 1.702
  %v1310 = vxor.u32 %v1308, 2147483648
  %v1311 = vxor.u32 %v1309, 2147483648
  %v1312 = vmul.f32 %v1310, 1.442695
  %v1313 = vpow.pop %v1312
  %v1314 = vmul.f32 %v1311, 1.442695
  %v1315 = vpow.pop %v1314
  %v1316 = vadd.f32 %v1313, 1.0
  %v1317 = vadd.f32 %v1315, 1.0
  %v1318 = vrcp.pop %v1316
  %v1319 = vmul.f32 %v1316, %v1318
  %v1320 = vsub.f32 1.0, %v1319
  %v1321 = vmul.f32 %v1318, %v1320
  %v1322 = vadd.f32 %v1318, %v1321
  %vm1323 = vweird.f32 %v1316
  %vm1324 = vweird.f32 %v1318
  %vm1325 = vmor %vm1323, %vm1324
  %v1326 = vsel %vm1325, %v1318, %v1322
  %v1327 = vand.u32 2147483647, %v1316
  %vm1328 = vcmp.eq.f32.partialorder %v1327, 8.507059e+37
  %v1329 = vand.u32 %v1316, 2147483648
  %v1330 = vor.u32 1.1754944e-38, %v1329
  %v1331 = vsel %vm1328, %v1330, %v1326
  %v1332 = vmul.f32 1.0, %v1331
  %v1333 = vrcp.pop %v1317
  %v1334 = vmul.f32 %v1317, %v1333
  %v1335 = vsub.f32 1.0, %v1334
  %v1336 = vmul.f32 %v1333, %v1335
  %v1337 = vadd.f32 %v1333, %v1336
  %vm1338 = vweird.f32 %v1317
  %vm1339 = vweird.f32 %v1333
  %vm1340 = vmor %vm1338, %vm1339
  %v1341 = vsel %vm1340, %v1333, %v1337
  %v1342 = vand.u32 2147483647, %v1317
  %vm1343 = vcmp.eq.f32.partialorder %v1342, 8.507059e+37
  %v1344 = vand.u32 %v1317, 2147483648
  %v1345 = vor.u32 1.1754944e-38, %v1344
  %v1346 = vsel %vm1343, %v1345, %v1341
  %v1347 = vmul.f32 1.0, %v1346
  %v1348 = vmul.f32 %v1304, %v1332
  %v1349 = vmul.f32 %v1306, %v1347
  %v1350 = vpack.c.bf16 %v1349, %v1348
  %v1351 = vld [vmem:[%s13] sm:$0xf]
  %v1352 = vld [vmem:[%s13 + $0x4] sm:$0xf]
  %v1353 = vld [vmem:[%s13 + $0x8] sm:$0xf]
  %v1354 = vld [vmem:[%s13 + $0xc] sm:$0xf]
  %v1355 = vld [vmem:[%s13 + $0x10] sm:$0xf]
  %v1356 = vld [vmem:[%s13 + $0x14] sm:$0xf]
  %v1357 = vld [vmem:[%s13 + $0x18] sm:$0xf]
  %v1358 = vld [vmem:[%s13 + $0x1c] sm:$0xf]
  %v1359 = vld [vmem:[%s13 + $0x20] sm:$0xf]
  %v1360 = vld [vmem:[%s13 + $0x24] sm:$0xf]
  %v1361 = vld [vmem:[%s13 + $0x28] sm:$0xf]
  %v1362 = vld [vmem:[%s13 + $0x2c] sm:$0xf]
  %v1363 = vld [vmem:[%s13 + $0x30] sm:$0xf]
  %v1364 = vld [vmem:[%s13 + $0x34] sm:$0xf]
  %v1365 = vld [vmem:[%s13 + $0x38] sm:$0xf]
  %v1366 = vld [vmem:[%s13 + $0x3c] sm:$0xf]
  %v1367 = vld [vmem:[%s14] sm:$0x1]
  %v1369 = vperm.slane %v1367, 0
  %v1387 = vunpack.c.l.b16 %v1351
  %v1388 = vunpack.c.l.b16 %v1352
  %v1389 = vunpack.c.l.b16 %v1353
  %v1390 = vunpack.c.l.b16 %v1354
  %v1391 = vunpack.c.l.b16 %v1355
  %v1392 = vunpack.c.l.b16 %v1356
  %v1393 = vunpack.c.l.b16 %v1357
  %v1394 = vunpack.c.l.b16 %v1358
  %v1395 = vunpack.c.l.b16 %v1359
  %v1396 = vunpack.c.l.b16 %v1360
  %v1397 = vunpack.c.l.b16 %v1361
  %v1398 = vunpack.c.l.b16 %v1362
  %v1399 = vunpack.c.l.b16 %v1363
  %v1400 = vunpack.c.l.b16 %v1364
  %v1401 = vunpack.c.l.b16 %v1365
  %v1402 = vunpack.c.l.b16 %v1366
  %v1403 = vpack.c.b16 %v1388, %v1387
  %v1404 = vpack.c.b16 %v1390, %v1389
  %v1405 = vpack.c.b16 %v1392, %v1391
  %v1406 = vpack.c.b16 %v1394, %v1393
  %v1407 = vpack.c.b16 %v1396, %v1395
  %v1408 = vpack.c.b16 %v1398, %v1397
  %v1409 = vpack.c.b16 %v1400, %v1399
  %v1410 = vpack.c.b16 %v1402, %v1401
  %1419 = vmatpush.bf16.msra.mxu0 %v1410
  %1420 = vmatpush.bf16.msra.mxu0 %v1409
  %1421 = vmatpush.bf16.msra.mxu0 %v1408
  %1422 = vmatpush.bf16.msra.mxu0 %v1407
  %1423 = vmatpush.bf16.msra.mxu0 %v1406
  %1424 = vmatpush.bf16.msra.mxu0 %v1405
  %1425 = vmatpush.bf16.msra.mxu0 %v1404
  %1426 = vmatpush.bf16.msra.mxu0 %v1403
  %1427 = vmatmul.bf16.gmra.mxu0 %v1350
  %v1428 = vpop.f32.mrf.mxu0
  %v1429 = vadd.f32 %v1369, %v1428
  %v1430 = vpop.f32.mrf.mxu0
  %v1431 = vadd.f32 %v1369, %v1430
  %1432 = vdwg.mxu0
  %v1433 = vadd.f32 %v1212, %v1429
  %v1434 = vadd.f32 %v1213, %v1431
  %s1435 = scalar_lea.vmem %s3, 1
  %v1436 = vld [vmem:[%s1435] sm:$0x1]
  %s1437 = scalar_lea.vmem %s4, 1
  %v1438 = vld [vmem:[%s1437] sm:$0x1]
  %v1439 = vsel %vm133, %v1433, 0.0
  %1440 = vadd.xlane.f32.xlu0 %v1439
  %v1441 = vpop.xlane.xlu0 %1440
  %v1442 = vsel %vm133, %v1434, 0.0
  %1443 = vadd.xlane.f32.xlu0 %v1442
  %v1444 = vpop.xlane.xlu0 %1443
  %v1445 = vmul.f32 %v1441, %v146
  %v1446 = vmul.f32 %v1444, %v146
  %v1447 = vsub.f32 %v1433, %v1445
  %v1448 = vsub.f32 %v1434, %v1446
  %v1449 = vmul.f32 %v1447, %v1447
  %v1450 = vmul.f32 %v1448, %v1448
  %v1451 = vsel %vm133, %v1449, 0.0
  %1452 = vadd.xlane.f32.xlu0 %v1451
  %v1453 = vpop.xlane.xlu0 %1452
  %v1454 = vsel %vm133, %v1450, 0.0
  %1455 = vadd.xlane.f32.xlu0 %v1454
  %v1456 = vpop.xlane.xlu0 %1455
  %v1457 = vmul.f32 %v1453, %v146
  %v1458 = vmul.f32 %v1456, %v146
  %v1459 = vadd.f32 %v1457, 1e-05
  %v1460 = vadd.f32 %v1458, 1e-05
  %v1461 = vrsqrt.pop %v1459
  %v1462 = vmul.f32 %v1461, %v1459
  %v1463 = vmul.f32 %v1462, %v1461
  %v1464 = vmul.f32 0.5, %v1463
  %v1465 = vsub.f32 1.5, %v1464
  %v1466 = vmul.f32 %v1461, %v1465
  %vm1467 = vweird.f32 %v1459
  %vm1468 = vweird.f32 %v1461
  %vm1469 = vmor %vm1467, %vm1468
  %v1470 = vsel %vm1469, %v1461, %v1466
  %v1471 = vrsqrt.pop %v1460
  %v1472 = vmul.f32 %v1471, %v1460
  %v1473 = vmul.f32 %v1472, %v1471
  %v1474 = vmul.f32 0.5, %v1473
  %v1475 = vsub.f32 1.5, %v1474
  %v1476 = vmul.f32 %v1471, %v1475
  %vm1477 = vweird.f32 %v1460
  %vm1478 = vweird.f32 %v1471
  %vm1479 = vmor %vm1477, %vm1478
  %v1480 = vsel %vm1479, %v1471, %v1476
  %v1481 = vmul.f32 %v1447, %v1470
  %v1482 = vmul.f32 %v1448, %v1480
  %v1484 = vperm.slane %v1436, 0
  %v1486 = vmul.f32 %v1481, %v1484
  %v1487 = vmul.f32 %v1482, %v1484
  %v1489 = vperm.slane %v1438, 0
  %v1491 = vadd.f32 %v1486, %v1489
  %v1492 = vadd.f32 %v1487, %v1489
  %v1493 = vpack.c.bf16 %v1492, %v1491
  %s1494 = scalar_lea.vmem %s5, 192
  %v1495 = vld [vmem:[%s1494] sm:$0xf]
  %v1496 = vld [vmem:[%s1494 + $0x4] sm:$0xf]
  %v1497 = vld [vmem:[%s1494 + $0x8] sm:$0xf]
  %v1498 = vld [vmem:[%s1494 + $0xc] sm:$0xf]
  %s1499 = scalar_lea.vmem %s6, 12
  %v1500 = vld [vmem:[%s1499] sm:$0x1]
  %v1502 = vperm.slane %v1500, 0
  %v1508 = vunpack.c.l.b16 %v1495
  %v1509 = vunpack.c.l.b16 %v1496
  %v1510 = vunpack.c.l.b16 %v1497
  %v1511 = vunpack.c.l.b16 %v1498
  %v1512 = vpack.c.b16 %v1509, %v1508
  %v1513 = vpack.c.b16 %v1511, %v1510
  %v1517 = vsel %vm133, %v1493, 0
  %1519 = vmatpush.bf16.msra.mxu0 0
  %1520 = vmatpush.bf16.msra.mxu0 0
  %1521 = vmatpush.bf16.msra.mxu0 0
  %1522 = vmatpush.bf16.msra.mxu0 0
  %1523 = vmatpush.bf16.msra.mxu0 0
  %1524 = vmatpush.bf16.msra.mxu0 0
  %1525 = vmatpush.bf16.msra.mxu0 %v1513
  %1526 = vmatpush.bf16.msra.mxu0 %v1512
  %1527 = vmatmul.bf16.gmra.mxu0 %v1517
  %v1528 = vpop.f32.mrf.mxu0
  %v1529 = vadd.f32 %v1502, %v1528
  %v1530 = vpop.f32.mrf.mxu0
  %v1531 = vadd.f32 %v1502, %v1530
  %1532 = vdwg.mxu0
  %s1533 = scalar_lea.vmem %s5, 256
  %v1534 = vld [vmem:[%s1533] sm:$0xf]
  %v1535 = vld [vmem:[%s1533 + $0x4] sm:$0xf]
  %v1536 = vld [vmem:[%s1533 + $0x8] sm:$0xf]
  %v1537 = vld [vmem:[%s1533 + $0xc] sm:$0xf]
  %s1538 = scalar_lea.vmem %s6, 16
  %v1539 = vld [vmem:[%s1538] sm:$0x1]
  %v1541 = vperm.slane %v1539, 0
  %v1547 = vunpack.c.l.b16 %v1534
  %v1548 = vunpack.c.l.b16 %v1535
  %v1549 = vunpack.c.l.b16 %v1536
  %v1550 = vunpack.c.l.b16 %v1537
  %v1551 = vpack.c.b16 %v1548, %v1547
  %v1552 = vpack.c.b16 %v1550, %v1549
  %1555 = vmatpush.bf16.msra.mxu0 0
  %1556 = vmatpush.bf16.msra.mxu0 0
  %1557 = vmatpush.bf16.msra.mxu0 0
  %1558 = vmatpush.bf16.msra.mxu0 0
  %1559 = vmatpush.bf16.msra.mxu0 0
  %1560 = vmatpush.bf16.msra.mxu0 0
  %1561 = vmatpush.bf16.msra.mxu0 %v1552
  %1562 = vmatpush.bf16.msra.mxu0 %v1551
  %1563 = vmatmul.bf16.gmra.mxu0 %v1517
  %v1564 = vpop.f32.mrf.mxu0
  %v1565 = vadd.f32 %v1541, %v1564
  %v1566 = vpop.f32.mrf.mxu0
  %v1567 = vadd.f32 %v1541, %v1566
  %1568 = vdwg.mxu0
  %s1569 = scalar_lea.vmem %s5, 320
  %v1570 = vld [vmem:[%s1569] sm:$0xf]
  %v1571 = vld [vmem:[%s1569 + $0x4] sm:$0xf]
  %v1572 = vld [vmem:[%s1569 + $0x8] sm:$0xf]
  %v1573 = vld [vmem:[%s1569 + $0xc] sm:$0xf]
  %s1574 = scalar_lea.vmem %s6, 20
  %v1575 = vld [vmem:[%s1574] sm:$0x1]
  %v1577 = vperm.slane %v1575, 0
  %v1583 = vunpack.c.l.b16 %v1570
  %v1584 = vunpack.c.l.b16 %v1571
  %v1585 = vunpack.c.l.b16 %v1572
  %v1586 = vunpack.c.l.b16 %v1573
  %v1587 = vpack.c.b16 %v1584, %v1583
  %v1588 = vpack.c.b16 %v1586, %v1585
  %1591 = vmatpush.bf16.msra.mxu0 0
  %1592 = vmatpush.bf16.msra.mxu0 0
  %1593 = vmatpush.bf16.msra.mxu0 0
  %1594 = vmatpush.bf16.msra.mxu0 0
  %1595 = vmatpush.bf16.msra.mxu0 0
  %1596 = vmatpush.bf16.msra.mxu0 0
  %1597 = vmatpush.bf16.msra.mxu0 %v1588
  %1598 = vmatpush.bf16.msra.mxu0 %v1587
  %1599 = vmatmul.bf16.gmra.mxu0 %v1517
  %v1600 = vpop.f32.mrf.mxu0
  %v1601 = vadd.f32 %v1577, %v1600
  %v1602 = vpop.f32.mrf.mxu0
  %v1603 = vadd.f32 %v1577, %v1602
  %1604 = vdwg.mxu0
  %v1606 = vsel %vm305, %v1529, 0
  %v1609 = vsel %vm305, %v1565, 0
  %1611 = vmatpush.xpose.msra.mxu0 0.0
  %1612 = vmatpush.xpose.msra.mxu0 0.0
  %1613 = vmatpush.xpose.msra.mxu0 0.0
  %1614 = vmatpush.xpose.msra.mxu0 0.0
  %1615 = vmatpush.xpose.msra.mxu0 0.0
  %1616 = vmatpush.xpose.msra.mxu0 0.0
  %1617 = vmatpush.xpose.msra.mxu0 0.0
  %1618 = vmatpush.xpose.msra.mxu0 0.0
  %1619 = vmatpush.xpose.msra.mxu0 0.0
  %1620 = vmatpush.xpose.msra.mxu0 0.0
  %1621 = vmatpush.xpose.msra.mxu0 0.0
  %1622 = vmatpush.xpose.msra.mxu0 0.0
  %1623 = vmatpush.xpose.msra.mxu0 0.0
  %1624 = vmatpush.xpose.msra.mxu0 0.0
  %1625 = vmatpush.xpose.msra.mxu0 0.0
  %1626 = vmatpush.xpose.msra.mxu0 %v1609
  %1627 = vmatmul.f32.gmra.mxu0 %v1606
  %v1628 = vpop.f32.mrf.mxu0
  %v1629 = vadd.f32 %v130, %v1628
  %1630 = vdwg.mxu0
  %v1632 = vsel %vm305, %v1531, 0
  %v1635 = vsel %vm305, %v1567, 0
  %1637 = vmatpush.xpose.msra.mxu0 0.0
  %1638 = vmatpush.xpose.msra.mxu0 0.0
  %1639 = vmatpush.xpose.msra.mxu0 0.0
  %1640 = vmatpush.xpose.msra.mxu0 0.0
  %1641 = vmatpush.xpose.msra.mxu0 0.0
  %1642 = vmatpush.xpose.msra.mxu0 0.0
  %1643 = vmatpush.xpose.msra.mxu0 0.0
  %1644 = vmatpush.xpose.msra.mxu0 0.0
  %1645 = vmatpush.xpose.msra.mxu0 0.0
  %1646 = vmatpush.xpose.msra.mxu0 0.0
  %1647 = vmatpush.xpose.msra.mxu0 0.0
  %1648 = vmatpush.xpose.msra.mxu0 0.0
  %1649 = vmatpush.xpose.msra.mxu0 0.0
  %1650 = vmatpush.xpose.msra.mxu0 0.0
  %1651 = vmatpush.xpose.msra.mxu0 0.0
  %1652 = vmatpush.xpose.msra.mxu0 %v1635
  %1653 = vmatmul.f32.gmra.mxu0 %v1632
  %v1654 = vpop.f32.mrf.mxu0
  %v1655 = vadd.f32 %v130, %v1654
  %1656 = vdwg.mxu0
  %v1657 = vsel %vm305, %v1629, -inf
  %1658 = vmax.xlane.f32.xlu0 %v1657
  %v1659 = vpop.xlane.xlu0 %1658
  %v1660 = vsel %vm305, %v1655, -inf
  %1661 = vmax.xlane.f32.xlu0 %v1660
  %v1662 = vpop.xlane.xlu0 %1661
  %v1663 = vsub.f32 %v1629, %v1659
  %v1664 = vsub.f32 %v1655, %v1662
  %v1665 = vmul.f32 %v1663, 1.442695
  %v1666 = vpow.pop %v1665
  %v1667 = vmul.f32 %v1664, 1.442695
  %v1668 = vpow.pop %v1667
  %v1669 = vsel %vm305, %v1666, 0.0
  %1670 = vadd.xlane.f32.xlu0 %v1669
  %v1671 = vpop.xlane.xlu0 %1670
  %v1672 = vsel %vm305, %v1668, 0.0
  %1673 = vadd.xlane.f32.xlu0 %v1672
  %v1674 = vpop.xlane.xlu0 %1673
  %v1675 = vrcp.pop %v1671
  %v1676 = vrcp.pop %v1674
  %v1677 = vmul.f32 %v1666, %v1675
  %v1678 = vmul.f32 %v1668, %v1676
  %v1680 = vsel %vm305, %v1677, 0
  %1682 = vmatpush.msra.mxu0 0.0
  %1683 = vmatpush.msra.mxu0 0.0
  %1684 = vmatpush.msra.mxu0 0.0
  %1685 = vmatpush.msra.mxu0 0.0
  %1686 = vmatpush.msra.mxu0 0.0
  %1687 = vmatpush.msra.mxu0 0.0
  %1688 = vmatpush.msra.mxu0 0.0
  %1689 = vmatpush.msra.mxu0 0.0
  %1690 = vmatpush.msra.mxu0 0.0
  %1691 = vmatpush.msra.mxu0 0.0
  %1692 = vmatpush.msra.mxu0 0.0
  %1693 = vmatpush.msra.mxu0 0.0
  %1694 = vmatpush.msra.mxu0 0.0
  %1695 = vmatpush.msra.mxu0 0.0
  %1696 = vmatpush.msra.mxu0 0.0
  %1697 = vmatpush.msra.mxu0 %v1601
  %1698 = vmatmul.f32.gmra.mxu0 %v1680
  %v1699 = vpop.f32.mrf.mxu0
  %v1700 = vadd.f32 0.0, %v1699
  %1701 = vdwg.mxu0
  %v1703 = vsel %vm305, %v1678, 0
  %1705 = vmatpush.msra.mxu0 0.0
  %1706 = vmatpush.msra.mxu0 0.0
  %1707 = vmatpush.msra.mxu0 0.0
  %1708 = vmatpush.msra.mxu0 0.0
  %1709 = vmatpush.msra.mxu0 0.0
  %1710 = vmatpush.msra.mxu0 0.0
  %1711 = vmatpush.msra.mxu0 0.0
  %1712 = vmatpush.msra.mxu0 0.0
  %1713 = vmatpush.msra.mxu0 0.0
  %1714 = vmatpush.msra.mxu0 0.0
  %1715 = vmatpush.msra.mxu0 0.0
  %1716 = vmatpush.msra.mxu0 0.0
  %1717 = vmatpush.msra.mxu0 0.0
  %1718 = vmatpush.msra.mxu0 0.0
  %1719 = vmatpush.msra.mxu0 0.0
  %1720 = vmatpush.msra.mxu0 %v1603
  %1721 = vmatmul.f32.gmra.mxu0 %v1703
  %v1722 = vpop.f32.mrf.mxu0
  %v1723 = vadd.f32 0.0, %v1722
  %1724 = vdwg.mxu0
  %v1725 = vpack.c.bf16 %v1723, %v1700
  %s1726 = scalar_lea.vmem %s7, 16
  %v1727 = vld [vmem:[%s1726] sm:$0xf]
  %s1728 = scalar_lea.vmem %s5, 208
  %v1729 = vld [vmem:[%s1728] sm:$0xf]
  %v1730 = vld [vmem:[%s1728 + $0x4] sm:$0xf]
  %v1731 = vld [vmem:[%s1728 + $0x8] sm:$0xf]
  %v1732 = vld [vmem:[%s1728 + $0xc] sm:$0xf]
  %s1733 = scalar_lea.vmem %s6, 13
  %v1734 = vld [vmem:[%s1733] sm:$0x1]
  %v1736 = vperm.slane %v1734, 0
  %v1742 = vunpack.c.l.b16 %v1729
  %v1743 = vunpack.c.l.b16 %v1730
  %v1744 = vunpack.c.l.b16 %v1731
  %v1745 = vunpack.c.l.b16 %v1732
  %v1746 = vpack.c.b16 %v1743, %v1742
  %v1747 = vpack.c.b16 %v1745, %v1744
  %1750 = vmatpush.bf16.msra.mxu0 0
  %1751 = vmatpush.bf16.msra.mxu0 0
  %1752 = vmatpush.bf16.msra.mxu0 0
  %1753 = vmatpush.bf16.msra.mxu0 0
  %1754 = vmatpush.bf16.msra.mxu0 0
  %1755 = vmatpush.bf16.msra.mxu0 0
  %1756 = vmatpush.bf16.msra.mxu0 %v1747
  %1757 = vmatpush.bf16.msra.mxu0 %v1746
  %1758 = vmatmul.bf16.gmra.mxu0 %v1517
  %v1759 = vpop.f32.mrf.mxu0
  %v1760 = vadd.f32 %v1736, %v1759
  %v1761 = vpop.f32.mrf.mxu0
  %v1762 = vadd.f32 %v1736, %v1761
  %1763 = vdwg.mxu0
  %s1764 = scalar_lea.vmem %s5, 272
  %v1765 = vld [vmem:[%s1764] sm:$0xf]
  %v1766 = vld [vmem:[%s1764 + $0x4] sm:$0xf]
  %v1767 = vld [vmem:[%s1764 + $0x8] sm:$0xf]
  %v1768 = vld [vmem:[%s1764 + $0xc] sm:$0xf]
  %s1769 = scalar_lea.vmem %s6, 17
  %v1770 = vld [vmem:[%s1769] sm:$0x1]
  %v1772 = vperm.slane %v1770, 0
  %v1778 = vunpack.c.l.b16 %v1765
  %v1779 = vunpack.c.l.b16 %v1766
  %v1780 = vunpack.c.l.b16 %v1767
  %v1781 = vunpack.c.l.b16 %v1768
  %v1782 = vpack.c.b16 %v1779, %v1778
  %v1783 = vpack.c.b16 %v1781, %v1780
  %1786 = vmatpush.bf16.msra.mxu0 0
  %1787 = vmatpush.bf16.msra.mxu0 0
  %1788 = vmatpush.bf16.msra.mxu0 0
  %1789 = vmatpush.bf16.msra.mxu0 0
  %1790 = vmatpush.bf16.msra.mxu0 0
  %1791 = vmatpush.bf16.msra.mxu0 0
  %1792 = vmatpush.bf16.msra.mxu0 %v1783
  %1793 = vmatpush.bf16.msra.mxu0 %v1782
  %1794 = vmatmul.bf16.gmra.mxu0 %v1517
  %v1795 = vpop.f32.mrf.mxu0
  %v1796 = vadd.f32 %v1772, %v1795
  %v1797 = vpop.f32.mrf.mxu0
  %v1798 = vadd.f32 %v1772, %v1797
  %1799 = vdwg.mxu0
  %s1800 = scalar_lea.vmem %s5, 336
  %v1801 = vld [vmem:[%s1800] sm:$0xf]
  %v1802 = vld [vmem:[%s1800 + $0x4] sm:$0xf]
  %v1803 = vld [vmem:[%s1800 + $0x8] sm:$0xf]
  %v1804 = vld [vmem:[%s1800 + $0xc] sm:$0xf]
  %s1805 = scalar_lea.vmem %s6, 21
  %v1806 = vld [vmem:[%s1805] sm:$0x1]
  %v1808 = vperm.slane %v1806, 0
  %v1814 = vunpack.c.l.b16 %v1801
  %v1815 = vunpack.c.l.b16 %v1802
  %v1816 = vunpack.c.l.b16 %v1803
  %v1817 = vunpack.c.l.b16 %v1804
  %v1818 = vpack.c.b16 %v1815, %v1814
  %v1819 = vpack.c.b16 %v1817, %v1816
  %1822 = vmatpush.bf16.msra.mxu0 0
  %1823 = vmatpush.bf16.msra.mxu0 0
  %1824 = vmatpush.bf16.msra.mxu0 0
  %1825 = vmatpush.bf16.msra.mxu0 0
  %1826 = vmatpush.bf16.msra.mxu0 0
  %1827 = vmatpush.bf16.msra.mxu0 0
  %1828 = vmatpush.bf16.msra.mxu0 %v1819
  %1829 = vmatpush.bf16.msra.mxu0 %v1818
  %1830 = vmatmul.bf16.gmra.mxu0 %v1517
  %v1831 = vpop.f32.mrf.mxu0
  %v1832 = vadd.f32 %v1808, %v1831
  %v1833 = vpop.f32.mrf.mxu0
  %v1834 = vadd.f32 %v1808, %v1833
  %1835 = vdwg.mxu0
  %v1837 = vsel %vm305, %v1760, 0
  %v1840 = vsel %vm305, %v1796, 0
  %1842 = vmatpush.xpose.msra.mxu0 0.0
  %1843 = vmatpush.xpose.msra.mxu0 0.0
  %1844 = vmatpush.xpose.msra.mxu0 0.0
  %1845 = vmatpush.xpose.msra.mxu0 0.0
  %1846 = vmatpush.xpose.msra.mxu0 0.0
  %1847 = vmatpush.xpose.msra.mxu0 0.0
  %1848 = vmatpush.xpose.msra.mxu0 0.0
  %1849 = vmatpush.xpose.msra.mxu0 0.0
  %1850 = vmatpush.xpose.msra.mxu0 0.0
  %1851 = vmatpush.xpose.msra.mxu0 0.0
  %1852 = vmatpush.xpose.msra.mxu0 0.0
  %1853 = vmatpush.xpose.msra.mxu0 0.0
  %1854 = vmatpush.xpose.msra.mxu0 0.0
  %1855 = vmatpush.xpose.msra.mxu0 0.0
  %1856 = vmatpush.xpose.msra.mxu0 0.0
  %1857 = vmatpush.xpose.msra.mxu0 %v1840
  %1858 = vmatmul.f32.gmra.mxu0 %v1837
  %v1859 = vpop.f32.mrf.mxu0
  %v1860 = vadd.f32 %v130, %v1859
  %1861 = vdwg.mxu0
  %v1863 = vsel %vm305, %v1762, 0
  %v1866 = vsel %vm305, %v1798, 0
  %1868 = vmatpush.xpose.msra.mxu0 0.0
  %1869 = vmatpush.xpose.msra.mxu0 0.0
  %1870 = vmatpush.xpose.msra.mxu0 0.0
  %1871 = vmatpush.xpose.msra.mxu0 0.0
  %1872 = vmatpush.xpose.msra.mxu0 0.0
  %1873 = vmatpush.xpose.msra.mxu0 0.0
  %1874 = vmatpush.xpose.msra.mxu0 0.0
  %1875 = vmatpush.xpose.msra.mxu0 0.0
  %1876 = vmatpush.xpose.msra.mxu0 0.0
  %1877 = vmatpush.xpose.msra.mxu0 0.0
  %1878 = vmatpush.xpose.msra.mxu0 0.0
  %1879 = vmatpush.xpose.msra.mxu0 0.0
  %1880 = vmatpush.xpose.msra.mxu0 0.0
  %1881 = vmatpush.xpose.msra.mxu0 0.0
  %1882 = vmatpush.xpose.msra.mxu0 0.0
  %1883 = vmatpush.xpose.msra.mxu0 %v1866
  %1884 = vmatmul.f32.gmra.mxu0 %v1863
  %v1885 = vpop.f32.mrf.mxu0
  %v1886 = vadd.f32 %v130, %v1885
  %1887 = vdwg.mxu0
  %v1888 = vsel %vm305, %v1860, -inf
  %1889 = vmax.xlane.f32.xlu0 %v1888
  %v1890 = vpop.xlane.xlu0 %1889
  %v1891 = vsel %vm305, %v1886, -inf
  %1892 = vmax.xlane.f32.xlu0 %v1891
  %v1893 = vpop.xlane.xlu0 %1892
  %v1894 = vsub.f32 %v1860, %v1890
  %v1895 = vsub.f32 %v1886, %v1893
  %v1896 = vmul.f32 %v1894, 1.442695
  %v1897 = vpow.pop %v1896
  %v1898 = vmul.f32 %v1895, 1.442695
  %v1899 = vpow.pop %v1898
  %v1900 = vsel %vm305, %v1897, 0.0
  %1901 = vadd.xlane.f32.xlu0 %v1900
  %v1902 = vpop.xlane.xlu0 %1901
  %v1903 = vsel %vm305, %v1899, 0.0
  %1904 = vadd.xlane.f32.xlu0 %v1903
  %v1905 = vpop.xlane.xlu0 %1904
  %v1906 = vrcp.pop %v1902
  %v1907 = vrcp.pop %v1905
  %v1908 = vmul.f32 %v1897, %v1906
  %v1909 = vmul.f32 %v1899, %v1907
  %v1911 = vsel %vm305, %v1908, 0
  %1913 = vmatpush.msra.mxu0 0.0
  %1914 = vmatpush.msra.mxu0 0.0
  %1915 = vmatpush.msra.mxu0 0.0
  %1916 = vmatpush.msra.mxu0 0.0
  %1917 = vmatpush.msra.mxu0 0.0
  %1918 = vmatpush.msra.mxu0 0.0
  %1919 = vmatpush.msra.mxu0 0.0
  %1920 = vmatpush.msra.mxu0 0.0
  %1921 = vmatpush.msra.mxu0 0.0
  %1922 = vmatpush.msra.mxu0 0.0
  %1923 = vmatpush.msra.mxu0 0.0
  %1924 = vmatpush.msra.mxu0 0.0
  %1925 = vmatpush.msra.mxu0 0.0
  %1926 = vmatpush.msra.mxu0 0.0
  %1927 = vmatpush.msra.mxu0 0.0
  %1928 = vmatpush.msra.mxu0 %v1832
  %1929 = vmatmul.f32.gmra.mxu0 %v1911
  %v1930 = vpop.f32.mrf.mxu0
  %v1931 = vadd.f32 0.0, %v1930
  %1932 = vdwg.mxu0
  %v1934 = vsel %vm305, %v1909, 0
  %1936 = vmatpush.msra.mxu0 0.0
  %1937 = vmatpush.msra.mxu0 0.0
  %1938 = vmatpush.msra.mxu0 0.0
  %1939 = vmatpush.msra.mxu0 0.0
  %1940 = vmatpush.msra.mxu0 0.0
  %1941 = vmatpush.msra.mxu0 0.0
  %1942 = vmatpush.msra.mxu0 0.0
  %1943 = vmatpush.msra.mxu0 0.0
  %1944 = vmatpush.msra.mxu0 0.0
  %1945 = vmatpush.msra.mxu0 0.0
  %1946 = vmatpush.msra.mxu0 0.0
  %1947 = vmatpush.msra.mxu0 0.0
  %1948 = vmatpush.msra.mxu0 0.0
  %1949 = vmatpush.msra.mxu0 0.0
  %1950 = vmatpush.msra.mxu0 0.0
  %1951 = vmatpush.msra.mxu0 %v1834
  %1952 = vmatmul.f32.gmra.mxu0 %v1934
  %v1953 = vpop.f32.mrf.mxu0
  %v1954 = vadd.f32 0.0, %v1953
  %1955 = vdwg.mxu0
  %v1956 = vpack.c.bf16 %v1954, %v1931
  %s1957 = scalar_lea.vmem %s7, 20
  %v1958 = vld [vmem:[%s1957] sm:$0xf]
  %v1960 = vsel %vm305, %v1956, 0
  %v1963 = vsel %vm662, %v1958, 0
  %1965 = vmatpush.bf16.msra.mxu0 0
  %1966 = vmatpush.bf16.msra.mxu0 0
  %1967 = vmatpush.bf16.msra.mxu0 0
  %1968 = vmatpush.bf16.msra.mxu0 0
  %1969 = vmatpush.bf16.msra.mxu0 0
  %1970 = vmatpush.bf16.msra.mxu0 0
  %1971 = vmatpush.bf16.msra.mxu0 0
  %1972 = vmatpush.bf16.msra.mxu0 %v1963
  %1973 = vmatmul.bf16.gmra.mxu0 %v1960
  %v1974 = vpop.f32.mrf.mxu0
  %v1975 = vadd.f32 0.0, %v1974
  %v1976 = vpop.f32.mrf.mxu0
  %v1977 = vadd.f32 0.0, %v1976
  %1978 = vdwg.mxu0
  %v1980 = vsel %vm305, %v1725, 0
  %v1983 = vsel %vm662, %v1727, 0
  %1985 = vmatpush.bf16.msra.mxu0 0
  %1986 = vmatpush.bf16.msra.mxu0 0
  %1987 = vmatpush.bf16.msra.mxu0 0
  %1988 = vmatpush.bf16.msra.mxu0 0
  %1989 = vmatpush.bf16.msra.mxu0 0
  %1990 = vmatpush.bf16.msra.mxu0 0
  %1991 = vmatpush.bf16.msra.mxu0 0
  %1992 = vmatpush.bf16.msra.mxu0 %v1983
  %1993 = vmatmul.bf16.gmra.mxu0 %v1980
  %v1994 = vpop.f32.mrf.mxu0
  %v1995 = vadd.f32 %v1975, %v1994
  %v1996 = vpop.f32.mrf.mxu0
  %v1997 = vadd.f32 %v1977, %v1996
  %1998 = vdwg.mxu0
  %s1999 = scalar_lea.vmem %s5, 224
  %v2000 = vld [vmem:[%s1999] sm:$0xf]
  %v2001 = vld [vmem:[%s1999 + $0x4] sm:$0xf]
  %v2002 = vld [vmem:[%s1999 + $0x8] sm:$0xf]
  %v2003 = vld [vmem:[%s1999 + $0xc] sm:$0xf]
  %s2004 = scalar_lea.vmem %s6, 14
  %v2005 = vld [vmem:[%s2004] sm:$0x1]
  %v2007 = vperm.slane %v2005, 0
  %v2013 = vunpack.c.l.b16 %v2000
  %v2014 = vunpack.c.l.b16 %v2001
  %v2015 = vunpack.c.l.b16 %v2002
  %v2016 = vunpack.c.l.b16 %v2003
  %v2017 = vpack.c.b16 %v2014, %v2013
  %v2018 = vpack.c.b16 %v2016, %v2015
  %2021 = vmatpush.bf16.msra.mxu0 0
  %2022 = vmatpush.bf16.msra.mxu0 0
  %2023 = vmatpush.bf16.msra.mxu0 0
  %2024 = vmatpush.bf16.msra.mxu0 0
  %2025 = vmatpush.bf16.msra.mxu0 0
  %2026 = vmatpush.bf16.msra.mxu0 0
  %2027 = vmatpush.bf16.msra.mxu0 %v2018
  %2028 = vmatpush.bf16.msra.mxu0 %v2017
  %2029 = vmatmul.bf16.gmra.mxu0 %v1517
  %v2030 = vpop.f32.mrf.mxu0
  %v2031 = vadd.f32 %v2007, %v2030
  %v2032 = vpop.f32.mrf.mxu0
  %v2033 = vadd.f32 %v2007, %v2032
  %2034 = vdwg.mxu0
  %s2035 = scalar_lea.vmem %s5, 288
  %v2036 = vld [vmem:[%s2035] sm:$0xf]
  %v2037 = vld [vmem:[%s2035 + $0x4] sm:$0xf]
  %v2038 = vld [vmem:[%s2035 + $0x8] sm:$0xf]
  %v2039 = vld [vmem:[%s2035 + $0xc] sm:$0xf]
  %s2040 = scalar_lea.vmem %s6, 18
  %v2041 = vld [vmem:[%s2040] sm:$0x1]
  %v2043 = vperm.slane %v2041, 0
  %v2049 = vunpack.c.l.b16 %v2036
  %v2050 = vunpack.c.l.b16 %v2037
  %v2051 = vunpack.c.l.b16 %v2038
  %v2052 = vunpack.c.l.b16 %v2039
  %v2053 = vpack.c.b16 %v2050, %v2049
  %v2054 = vpack.c.b16 %v2052, %v2051
  %2057 = vmatpush.bf16.msra.mxu0 0
  %2058 = vmatpush.bf16.msra.mxu0 0
  %2059 = vmatpush.bf16.msra.mxu0 0
  %2060 = vmatpush.bf16.msra.mxu0 0
  %2061 = vmatpush.bf16.msra.mxu0 0
  %2062 = vmatpush.bf16.msra.mxu0 0
  %2063 = vmatpush.bf16.msra.mxu0 %v2054
  %2064 = vmatpush.bf16.msra.mxu0 %v2053
  %2065 = vmatmul.bf16.gmra.mxu0 %v1517
  %v2066 = vpop.f32.mrf.mxu0
  %v2067 = vadd.f32 %v2043, %v2066
  %v2068 = vpop.f32.mrf.mxu0
  %v2069 = vadd.f32 %v2043, %v2068
  %2070 = vdwg.mxu0
  %s2071 = scalar_lea.vmem %s5, 352
  %v2072 = vld [vmem:[%s2071] sm:$0xf]
  %v2073 = vld [vmem:[%s2071 + $0x4] sm:$0xf]
  %v2074 = vld [vmem:[%s2071 + $0x8] sm:$0xf]
  %v2075 = vld [vmem:[%s2071 + $0xc] sm:$0xf]
  %s2076 = scalar_lea.vmem %s6, 22
  %v2077 = vld [vmem:[%s2076] sm:$0x1]
  %v2079 = vperm.slane %v2077, 0
  %v2085 = vunpack.c.l.b16 %v2072
  %v2086 = vunpack.c.l.b16 %v2073
  %v2087 = vunpack.c.l.b16 %v2074
  %v2088 = vunpack.c.l.b16 %v2075
  %v2089 = vpack.c.b16 %v2086, %v2085
  %v2090 = vpack.c.b16 %v2088, %v2087
  %2093 = vmatpush.bf16.msra.mxu0 0
  %2094 = vmatpush.bf16.msra.mxu0 0
  %2095 = vmatpush.bf16.msra.mxu0 0
  %2096 = vmatpush.bf16.msra.mxu0 0
  %2097 = vmatpush.bf16.msra.mxu0 0
  %2098 = vmatpush.bf16.msra.mxu0 0
  %2099 = vmatpush.bf16.msra.mxu0 %v2090
  %2100 = vmatpush.bf16.msra.mxu0 %v2089
  %2101 = vmatmul.bf16.gmra.mxu0 %v1517
  %v2102 = vpop.f32.mrf.mxu0
  %v2103 = vadd.f32 %v2079, %v2102
  %v2104 = vpop.f32.mrf.mxu0
  %v2105 = vadd.f32 %v2079, %v2104
  %2106 = vdwg.mxu0
  %v2108 = vsel %vm305, %v2031, 0
  %v2111 = vsel %vm305, %v2067, 0
  %2113 = vmatpush.xpose.msra.mxu0 0.0
  %2114 = vmatpush.xpose.msra.mxu0 0.0
  %2115 = vmatpush.xpose.msra.mxu0 0.0
  %2116 = vmatpush.xpose.msra.mxu0 0.0
  %2117 = vmatpush.xpose.msra.mxu0 0.0
  %2118 = vmatpush.xpose.msra.mxu0 0.0
  %2119 = vmatpush.xpose.msra.mxu0 0.0
  %2120 = vmatpush.xpose.msra.mxu0 0.0
  %2121 = vmatpush.xpose.msra.mxu0 0.0
  %2122 = vmatpush.xpose.msra.mxu0 0.0
  %2123 = vmatpush.xpose.msra.mxu0 0.0
  %2124 = vmatpush.xpose.msra.mxu0 0.0
  %2125 = vmatpush.xpose.msra.mxu0 0.0
  %2126 = vmatpush.xpose.msra.mxu0 0.0
  %2127 = vmatpush.xpose.msra.mxu0 0.0
  %2128 = vmatpush.xpose.msra.mxu0 %v2111
  %2129 = vmatmul.f32.gmra.mxu0 %v2108
  %v2130 = vpop.f32.mrf.mxu0
  %v2131 = vadd.f32 %v130, %v2130
  %2132 = vdwg.mxu0
  %v2134 = vsel %vm305, %v2033, 0
  %v2137 = vsel %vm305, %v2069, 0
  %2139 = vmatpush.xpose.msra.mxu0 0.0
  %2140 = vmatpush.xpose.msra.mxu0 0.0
  %2141 = vmatpush.xpose.msra.mxu0 0.0
  %2142 = vmatpush.xpose.msra.mxu0 0.0
  %2143 = vmatpush.xpose.msra.mxu0 0.0
  %2144 = vmatpush.xpose.msra.mxu0 0.0
  %2145 = vmatpush.xpose.msra.mxu0 0.0
  %2146 = vmatpush.xpose.msra.mxu0 0.0
  %2147 = vmatpush.xpose.msra.mxu0 0.0
  %2148 = vmatpush.xpose.msra.mxu0 0.0
  %2149 = vmatpush.xpose.msra.mxu0 0.0
  %2150 = vmatpush.xpose.msra.mxu0 0.0
  %2151 = vmatpush.xpose.msra.mxu0 0.0
  %2152 = vmatpush.xpose.msra.mxu0 0.0
  %2153 = vmatpush.xpose.msra.mxu0 0.0
  %2154 = vmatpush.xpose.msra.mxu0 %v2137
  %2155 = vmatmul.f32.gmra.mxu0 %v2134
  %v2156 = vpop.f32.mrf.mxu0
  %v2157 = vadd.f32 %v130, %v2156
  %2158 = vdwg.mxu0
  %v2159 = vsel %vm305, %v2131, -inf
  %2160 = vmax.xlane.f32.xlu0 %v2159
  %v2161 = vpop.xlane.xlu0 %2160
  %v2162 = vsel %vm305, %v2157, -inf
  %2163 = vmax.xlane.f32.xlu0 %v2162
  %v2164 = vpop.xlane.xlu0 %2163
  %v2165 = vsub.f32 %v2131, %v2161
  %v2166 = vsub.f32 %v2157, %v2164
  %v2167 = vmul.f32 %v2165, 1.442695
  %v2168 = vpow.pop %v2167
  %v2169 = vmul.f32 %v2166, 1.442695
  %v2170 = vpow.pop %v2169
  %v2171 = vsel %vm305, %v2168, 0.0
  %2172 = vadd.xlane.f32.xlu0 %v2171
  %v2173 = vpop.xlane.xlu0 %2172
  %v2174 = vsel %vm305, %v2170, 0.0
  %2175 = vadd.xlane.f32.xlu0 %v2174
  %v2176 = vpop.xlane.xlu0 %2175
  %v2177 = vrcp.pop %v2173
  %v2178 = vrcp.pop %v2176
  %v2179 = vmul.f32 %v2168, %v2177
  %v2180 = vmul.f32 %v2170, %v2178
  %v2182 = vsel %vm305, %v2179, 0
  %2184 = vmatpush.msra.mxu0 0.0
  %2185 = vmatpush.msra.mxu0 0.0
  %2186 = vmatpush.msra.mxu0 0.0
  %2187 = vmatpush.msra.mxu0 0.0
  %2188 = vmatpush.msra.mxu0 0.0
  %2189 = vmatpush.msra.mxu0 0.0
  %2190 = vmatpush.msra.mxu0 0.0
  %2191 = vmatpush.msra.mxu0 0.0
  %2192 = vmatpush.msra.mxu0 0.0
  %2193 = vmatpush.msra.mxu0 0.0
  %2194 = vmatpush.msra.mxu0 0.0
  %2195 = vmatpush.msra.mxu0 0.0
  %2196 = vmatpush.msra.mxu0 0.0
  %2197 = vmatpush.msra.mxu0 0.0
  %2198 = vmatpush.msra.mxu0 0.0
  %2199 = vmatpush.msra.mxu0 %v2103
  %2200 = vmatmul.f32.gmra.mxu0 %v2182
  %v2201 = vpop.f32.mrf.mxu0
  %v2202 = vadd.f32 0.0, %v2201
  %2203 = vdwg.mxu0
  %v2205 = vsel %vm305, %v2180, 0
  %2207 = vmatpush.msra.mxu0 0.0
  %2208 = vmatpush.msra.mxu0 0.0
  %2209 = vmatpush.msra.mxu0 0.0
  %2210 = vmatpush.msra.mxu0 0.0
  %2211 = vmatpush.msra.mxu0 0.0
  %2212 = vmatpush.msra.mxu0 0.0
  %2213 = vmatpush.msra.mxu0 0.0
  %2214 = vmatpush.msra.mxu0 0.0
  %2215 = vmatpush.msra.mxu0 0.0
  %2216 = vmatpush.msra.mxu0 0.0
  %2217 = vmatpush.msra.mxu0 0.0
  %2218 = vmatpush.msra.mxu0 0.0
  %2219 = vmatpush.msra.mxu0 0.0
  %2220 = vmatpush.msra.mxu0 0.0
  %2221 = vmatpush.msra.mxu0 0.0
  %2222 = vmatpush.msra.mxu0 %v2105
  %2223 = vmatmul.f32.gmra.mxu0 %v2205
  %v2224 = vpop.f32.mrf.mxu0
  %v2225 = vadd.f32 0.0, %v2224
  %2226 = vdwg.mxu0
  %v2227 = vpack.c.bf16 %v2225, %v2202
  %s2228 = scalar_lea.vmem %s7, 24
  %v2229 = vld [vmem:[%s2228] sm:$0xf]
  %v2231 = vsel %vm305, %v2227, 0
  %v2234 = vsel %vm662, %v2229, 0
  %2236 = vmatpush.bf16.msra.mxu0 0
  %2237 = vmatpush.bf16.msra.mxu0 0
  %2238 = vmatpush.bf16.msra.mxu0 0
  %2239 = vmatpush.bf16.msra.mxu0 0
  %2240 = vmatpush.bf16.msra.mxu0 0
  %2241 = vmatpush.bf16.msra.mxu0 0
  %2242 = vmatpush.bf16.msra.mxu0 0
  %2243 = vmatpush.bf16.msra.mxu0 %v2234
  %2244 = vmatmul.bf16.gmra.mxu0 %v2231
  %v2245 = vpop.f32.mrf.mxu0
  %v2246 = vadd.f32 0.0, %v2245
  %v2247 = vpop.f32.mrf.mxu0
  %v2248 = vadd.f32 0.0, %v2247
  %2249 = vdwg.mxu0
  %v2250 = vadd.f32 %v1995, %v2246
  %v2251 = vadd.f32 %v1997, %v2248
  %s2252 = scalar_lea.vmem %s5, 240
  %v2253 = vld [vmem:[%s2252] sm:$0xf]
  %v2254 = vld [vmem:[%s2252 + $0x4] sm:$0xf]
  %v2255 = vld [vmem:[%s2252 + $0x8] sm:$0xf]
  %v2256 = vld [vmem:[%s2252 + $0xc] sm:$0xf]
  %s2257 = scalar_lea.vmem %s6, 15
  %v2258 = vld [vmem:[%s2257] sm:$0x1]
  %v2260 = vperm.slane %v2258, 0
  %v2266 = vunpack.c.l.b16 %v2253
  %v2267 = vunpack.c.l.b16 %v2254
  %v2268 = vunpack.c.l.b16 %v2255
  %v2269 = vunpack.c.l.b16 %v2256
  %v2270 = vpack.c.b16 %v2267, %v2266
  %v2271 = vpack.c.b16 %v2269, %v2268
  %2274 = vmatpush.bf16.msra.mxu0 0
  %2275 = vmatpush.bf16.msra.mxu0 0
  %2276 = vmatpush.bf16.msra.mxu0 0
  %2277 = vmatpush.bf16.msra.mxu0 0
  %2278 = vmatpush.bf16.msra.mxu0 0
  %2279 = vmatpush.bf16.msra.mxu0 0
  %2280 = vmatpush.bf16.msra.mxu0 %v2271
  %2281 = vmatpush.bf16.msra.mxu0 %v2270
  %2282 = vmatmul.bf16.gmra.mxu0 %v1517
  %v2283 = vpop.f32.mrf.mxu0
  %v2284 = vadd.f32 %v2260, %v2283
  %v2285 = vpop.f32.mrf.mxu0
  %v2286 = vadd.f32 %v2260, %v2285
  %2287 = vdwg.mxu0
  %s2288 = scalar_lea.vmem %s5, 304
  %v2289 = vld [vmem:[%s2288] sm:$0xf]
  %v2290 = vld [vmem:[%s2288 + $0x4] sm:$0xf]
  %v2291 = vld [vmem:[%s2288 + $0x8] sm:$0xf]
  %v2292 = vld [vmem:[%s2288 + $0xc] sm:$0xf]
  %s2293 = scalar_lea.vmem %s6, 19
  %v2294 = vld [vmem:[%s2293] sm:$0x1]
  %v2296 = vperm.slane %v2294, 0
  %v2302 = vunpack.c.l.b16 %v2289
  %v2303 = vunpack.c.l.b16 %v2290
  %v2304 = vunpack.c.l.b16 %v2291
  %v2305 = vunpack.c.l.b16 %v2292
  %v2306 = vpack.c.b16 %v2303, %v2302
  %v2307 = vpack.c.b16 %v2305, %v2304
  %2310 = vmatpush.bf16.msra.mxu0 0
  %2311 = vmatpush.bf16.msra.mxu0 0
  %2312 = vmatpush.bf16.msra.mxu0 0
  %2313 = vmatpush.bf16.msra.mxu0 0
  %2314 = vmatpush.bf16.msra.mxu0 0
  %2315 = vmatpush.bf16.msra.mxu0 0
  %2316 = vmatpush.bf16.msra.mxu0 %v2307
  %2317 = vmatpush.bf16.msra.mxu0 %v2306
  %2318 = vmatmul.bf16.gmra.mxu0 %v1517
  %v2319 = vpop.f32.mrf.mxu0
  %v2320 = vadd.f32 %v2296, %v2319
  %v2321 = vpop.f32.mrf.mxu0
  %v2322 = vadd.f32 %v2296, %v2321
  %2323 = vdwg.mxu0
  %s2324 = scalar_lea.vmem %s5, 368
  %v2325 = vld [vmem:[%s2324] sm:$0xf]
  %v2326 = vld [vmem:[%s2324 + $0x4] sm:$0xf]
  %v2327 = vld [vmem:[%s2324 + $0x8] sm:$0xf]
  %v2328 = vld [vmem:[%s2324 + $0xc] sm:$0xf]
  %s2329 = scalar_lea.vmem %s6, 23
  %v2330 = vld [vmem:[%s2329] sm:$0x1]
  %v2332 = vperm.slane %v2330, 0
  %v2338 = vunpack.c.l.b16 %v2325
  %v2339 = vunpack.c.l.b16 %v2326
  %v2340 = vunpack.c.l.b16 %v2327
  %v2341 = vunpack.c.l.b16 %v2328
  %v2342 = vpack.c.b16 %v2339, %v2338
  %v2343 = vpack.c.b16 %v2341, %v2340
  %2346 = vmatpush.bf16.msra.mxu0 0
  %2347 = vmatpush.bf16.msra.mxu0 0
  %2348 = vmatpush.bf16.msra.mxu0 0
  %2349 = vmatpush.bf16.msra.mxu0 0
  %2350 = vmatpush.bf16.msra.mxu0 0
  %2351 = vmatpush.bf16.msra.mxu0 0
  %2352 = vmatpush.bf16.msra.mxu0 %v2343
  %2353 = vmatpush.bf16.msra.mxu0 %v2342
  %2354 = vmatmul.bf16.gmra.mxu0 %v1517
  %v2355 = vpop.f32.mrf.mxu0
  %v2356 = vadd.f32 %v2332, %v2355
  %v2357 = vpop.f32.mrf.mxu0
  %v2358 = vadd.f32 %v2332, %v2357
  %2359 = vdwg.mxu0
  %v2361 = vsel %vm305, %v2284, 0
  %v2364 = vsel %vm305, %v2320, 0
  %2366 = vmatpush.xpose.msra.mxu0 0.0
  %2367 = vmatpush.xpose.msra.mxu0 0.0
  %2368 = vmatpush.xpose.msra.mxu0 0.0
  %2369 = vmatpush.xpose.msra.mxu0 0.0
  %2370 = vmatpush.xpose.msra.mxu0 0.0
  %2371 = vmatpush.xpose.msra.mxu0 0.0
  %2372 = vmatpush.xpose.msra.mxu0 0.0
  %2373 = vmatpush.xpose.msra.mxu0 0.0
  %2374 = vmatpush.xpose.msra.mxu0 0.0
  %2375 = vmatpush.xpose.msra.mxu0 0.0
  %2376 = vmatpush.xpose.msra.mxu0 0.0
  %2377 = vmatpush.xpose.msra.mxu0 0.0
  %2378 = vmatpush.xpose.msra.mxu0 0.0
  %2379 = vmatpush.xpose.msra.mxu0 0.0
  %2380 = vmatpush.xpose.msra.mxu0 0.0
  %2381 = vmatpush.xpose.msra.mxu0 %v2364
  %2382 = vmatmul.f32.gmra.mxu0 %v2361
  %v2383 = vpop.f32.mrf.mxu0
  %v2384 = vadd.f32 %v130, %v2383
  %2385 = vdwg.mxu0
  %v2387 = vsel %vm305, %v2286, 0
  %v2390 = vsel %vm305, %v2322, 0
  %2392 = vmatpush.xpose.msra.mxu0 0.0
  %2393 = vmatpush.xpose.msra.mxu0 0.0
  %2394 = vmatpush.xpose.msra.mxu0 0.0
  %2395 = vmatpush.xpose.msra.mxu0 0.0
  %2396 = vmatpush.xpose.msra.mxu0 0.0
  %2397 = vmatpush.xpose.msra.mxu0 0.0
  %2398 = vmatpush.xpose.msra.mxu0 0.0
  %2399 = vmatpush.xpose.msra.mxu0 0.0
  %2400 = vmatpush.xpose.msra.mxu0 0.0
  %2401 = vmatpush.xpose.msra.mxu0 0.0
  %2402 = vmatpush.xpose.msra.mxu0 0.0
  %2403 = vmatpush.xpose.msra.mxu0 0.0
  %2404 = vmatpush.xpose.msra.mxu0 0.0
  %2405 = vmatpush.xpose.msra.mxu0 0.0
  %2406 = vmatpush.xpose.msra.mxu0 0.0
  %2407 = vmatpush.xpose.msra.mxu0 %v2390
  %2408 = vmatmul.f32.gmra.mxu0 %v2387
  %v2409 = vpop.f32.mrf.mxu0
  %v2410 = vadd.f32 %v130, %v2409
  %2411 = vdwg.mxu0
  %v2412 = vsel %vm305, %v2384, -inf
  %2413 = vmax.xlane.f32.xlu0 %v2412
  %v2414 = vpop.xlane.xlu0 %2413
  %v2415 = vsel %vm305, %v2410, -inf
  %2416 = vmax.xlane.f32.xlu0 %v2415
  %v2417 = vpop.xlane.xlu0 %2416
  %v2418 = vsub.f32 %v2384, %v2414
  %v2419 = vsub.f32 %v2410, %v2417
  %v2420 = vmul.f32 %v2418, 1.442695
  %v2421 = vpow.pop %v2420
  %v2422 = vmul.f32 %v2419, 1.442695
  %v2423 = vpow.pop %v2422
  %v2424 = vsel %vm305, %v2421, 0.0
  %2425 = vadd.xlane.f32.xlu0 %v2424
  %v2426 = vpop.xlane.xlu0 %2425
  %v2427 = vsel %vm305, %v2423, 0.0
  %2428 = vadd.xlane.f32.xlu0 %v2427
  %v2429 = vpop.xlane.xlu0 %2428
  %v2430 = vrcp.pop %v2426
  %v2431 = vrcp.pop %v2429
  %v2432 = vmul.f32 %v2421, %v2430
  %v2433 = vmul.f32 %v2423, %v2431
  %v2435 = vsel %vm305, %v2432, 0
  %2437 = vmatpush.msra.mxu0 0.0
  %2438 = vmatpush.msra.mxu0 0.0
  %2439 = vmatpush.msra.mxu0 0.0
  %2440 = vmatpush.msra.mxu0 0.0
  %2441 = vmatpush.msra.mxu0 0.0
  %2442 = vmatpush.msra.mxu0 0.0
  %2443 = vmatpush.msra.mxu0 0.0
  %2444 = vmatpush.msra.mxu0 0.0
  %2445 = vmatpush.msra.mxu0 0.0
  %2446 = vmatpush.msra.mxu0 0.0
  %2447 = vmatpush.msra.mxu0 0.0
  %2448 = vmatpush.msra.mxu0 0.0
  %2449 = vmatpush.msra.mxu0 0.0
  %2450 = vmatpush.msra.mxu0 0.0
  %2451 = vmatpush.msra.mxu0 0.0
  %2452 = vmatpush.msra.mxu0 %v2356
  %2453 = vmatmul.f32.gmra.mxu0 %v2435
  %v2454 = vpop.f32.mrf.mxu0
  %v2455 = vadd.f32 0.0, %v2454
  %2456 = vdwg.mxu0
  %v2458 = vsel %vm305, %v2433, 0
  %2460 = vmatpush.msra.mxu0 0.0
  %2461 = vmatpush.msra.mxu0 0.0
  %2462 = vmatpush.msra.mxu0 0.0
  %2463 = vmatpush.msra.mxu0 0.0
  %2464 = vmatpush.msra.mxu0 0.0
  %2465 = vmatpush.msra.mxu0 0.0
  %2466 = vmatpush.msra.mxu0 0.0
  %2467 = vmatpush.msra.mxu0 0.0
  %2468 = vmatpush.msra.mxu0 0.0
  %2469 = vmatpush.msra.mxu0 0.0
  %2470 = vmatpush.msra.mxu0 0.0
  %2471 = vmatpush.msra.mxu0 0.0
  %2472 = vmatpush.msra.mxu0 0.0
  %2473 = vmatpush.msra.mxu0 0.0
  %2474 = vmatpush.msra.mxu0 0.0
  %2475 = vmatpush.msra.mxu0 %v2358
  %2476 = vmatmul.f32.gmra.mxu0 %v2458
  %v2477 = vpop.f32.mrf.mxu0
  %v2478 = vadd.f32 0.0, %v2477
  %2479 = vdwg.mxu0
  %v2480 = vpack.c.bf16 %v2478, %v2455
  %s2481 = scalar_lea.vmem %s7, 28
  %v2482 = vld [vmem:[%s2481] sm:$0xf]
  %v2484 = vsel %vm305, %v2480, 0
  %v2487 = vsel %vm662, %v2482, 0
  %2489 = vmatpush.bf16.msra.mxu0 0
  %2490 = vmatpush.bf16.msra.mxu0 0
  %2491 = vmatpush.bf16.msra.mxu0 0
  %2492 = vmatpush.bf16.msra.mxu0 0
  %2493 = vmatpush.bf16.msra.mxu0 0
  %2494 = vmatpush.bf16.msra.mxu0 0
  %2495 = vmatpush.bf16.msra.mxu0 0
  %2496 = vmatpush.bf16.msra.mxu0 %v2487
  %2497 = vmatmul.bf16.gmra.mxu0 %v2484
  %v2498 = vpop.f32.mrf.mxu0
  %v2499 = vadd.f32 0.0, %v2498
  %v2500 = vpop.f32.mrf.mxu0
  %v2501 = vadd.f32 0.0, %v2500
  %2502 = vdwg.mxu0
  %v2503 = vadd.f32 %v2250, %v2499
  %v2504 = vadd.f32 %v2251, %v2501
  %v2505 = vadd.f32 %v1433, %v2503
  %v2506 = vadd.f32 %v1434, %v2504
  %s2507 = scalar_lea.vmem %s8, 1
  %v2508 = vld [vmem:[%s2507] sm:$0x1]
  %v2510 = vperm.slane %v2508, 0
  %v2512 = vadd.f32 %v2505, %v2510
  %v2513 = vadd.f32 %v2506, %v2510
  %s2514 = scalar_lea.vmem %s9, 1
  %v2515 = vld [vmem:[%s2514] sm:$0x1]
  %s2516 = scalar_lea.vmem %s10, 1
  %v2517 = vld [vmem:[%s2516] sm:$0x1]
  %v2518 = vsel %vm133, %v2512, 0.0
  %2519 = vadd.xlane.f32.xlu0 %v2518
  %v2520 = vpop.xlane.xlu0 %2519
  %v2521 = vsel %vm133, %v2513, 0.0
  %2522 = vadd.xlane.f32.xlu0 %v2521
  %v2523 = vpop.xlane.xlu0 %2522
  %v2524 = vmul.f32 %v2520, %v146
  %v2525 = vmul.f32 %v2523, %v146
  %v2526 = vsub.f32 %v2512, %v2524
  %v2527 = vsub.f32 %v2513, %v2525
  %v2528 = vmul.f32 %v2526, %v2526
  %v2529 = vmul.f32 %v2527, %v2527
  %v2530 = vsel %vm133, %v2528, 0.0
  %2531 = vadd.xlane.f32.xlu0 %v2530
  %v2532 = vpop.xlane.xlu0 %2531
  %v2533 = vsel %vm133, %v2529, 0.0
  %2534 = vadd.xlane.f32.xlu0 %v2533
  %v2535 = vpop.xlane.xlu0 %2534
  %v2536 = vmul.f32 %v2532, %v146
  %v2537 = vmul.f32 %v2535, %v146
  %v2538 = vadd.f32 %v2536, 1e-05
  %v2539 = vadd.f32 %v2537, 1e-05
  %v2540 = vrsqrt.pop %v2538
  %v2541 = vmul.f32 %v2540, %v2538
  %v2542 = vmul.f32 %v2541, %v2540
  %v2543 = vmul.f32 0.5, %v2542
  %v2544 = vsub.f32 1.5, %v2543
  %v2545 = vmul.f32 %v2540, %v2544
  %vm2546 = vweird.f32 %v2538
  %vm2547 = vweird.f32 %v2540
  %vm2548 = vmor %vm2546, %vm2547
  %v2549 = vsel %vm2548, %v2540, %v2545
  %v2550 = vrsqrt.pop %v2539
  %v2551 = vmul.f32 %v2550, %v2539
  %v2552 = vmul.f32 %v2551, %v2550
  %v2553 = vmul.f32 0.5, %v2552
  %v2554 = vsub.f32 1.5, %v2553
  %v2555 = vmul.f32 %v2550, %v2554
  %vm2556 = vweird.f32 %v2539
  %vm2557 = vweird.f32 %v2550
  %vm2558 = vmor %vm2556, %vm2557
  %v2559 = vsel %vm2558, %v2550, %v2555
  %v2560 = vmul.f32 %v2526, %v2549
  %v2561 = vmul.f32 %v2527, %v2559
  %v2563 = vperm.slane %v2515, 0
  %v2565 = vmul.f32 %v2560, %v2563
  %v2566 = vmul.f32 %v2561, %v2563
  %v2568 = vperm.slane %v2517, 0
  %v2570 = vadd.f32 %v2565, %v2568
  %v2571 = vadd.f32 %v2566, %v2568
  %v2572 = vpack.c.bf16 %v2571, %v2570
  %s2573 = scalar_lea.vmem %s11, 16
  %v2574 = vld [vmem:[%s2573] sm:$0xf]
  %v2575 = vld [vmem:[%s2573 + $0x4] sm:$0xf]
  %v2576 = vld [vmem:[%s2573 + $0x8] sm:$0xf]
  %v2577 = vld [vmem:[%s2573 + $0xc] sm:$0xf]
  %s2578 = scalar_lea.vmem %s12, 1
  %v2579 = vld [vmem:[%s2578] sm:$0x1]
  %v2581 = vperm.slane %v2579, 0
  %v2587 = vunpack.c.l.b16 %v2574
  %v2588 = vunpack.c.l.b16 %v2575
  %v2589 = vunpack.c.l.b16 %v2576
  %v2590 = vunpack.c.l.b16 %v2577
  %v2591 = vpack.c.b16 %v2588, %v2587
  %v2592 = vpack.c.b16 %v2590, %v2589
  %v2596 = vsel %vm133, %v2572, 0
  %2598 = vmatpush.bf16.msra.mxu0 0
  %2599 = vmatpush.bf16.msra.mxu0 0
  %2600 = vmatpush.bf16.msra.mxu0 0
  %2601 = vmatpush.bf16.msra.mxu0 0
  %2602 = vmatpush.bf16.msra.mxu0 0
  %2603 = vmatpush.bf16.msra.mxu0 0
  %2604 = vmatpush.bf16.msra.mxu0 %v2592
  %2605 = vmatpush.bf16.msra.mxu0 %v2591
  %2606 = vmatmul.bf16.gmra.mxu0 %v2596
  %v2607 = vpop.f32.mrf.mxu0
  %v2608 = vadd.f32 %v2581, %v2607
  %v2609 = vpop.f32.mrf.mxu0
  %v2610 = vadd.f32 %v2581, %v2609
  %2611 = vdwg.mxu0
  %v2612 = vmul.f32 %v2608, 1.702
  %v2613 = vmul.f32 %v2610, 1.702
  %v2614 = vxor.u32 %v2612, 2147483648
  %v2615 = vxor.u32 %v2613, 2147483648
  %v2616 = vmul.f32 %v2614, 1.442695
  %v2617 = vpow.pop %v2616
  %v2618 = vmul.f32 %v2615, 1.442695
  %v2619 = vpow.pop %v2618
  %v2620 = vadd.f32 %v2617, 1.0
  %v2621 = vadd.f32 %v2619, 1.0
  %v2622 = vrcp.pop %v2620
  %v2623 = vmul.f32 %v2620, %v2622
  %v2624 = vsub.f32 1.0, %v2623
  %v2625 = vmul.f32 %v2622, %v2624
  %v2626 = vadd.f32 %v2622, %v2625
  %vm2627 = vweird.f32 %v2620
  %vm2628 = vweird.f32 %v2622
  %vm2629 = vmor %vm2627, %vm2628
  %v2630 = vsel %vm2629, %v2622, %v2626
  %v2631 = vand.u32 2147483647, %v2620
  %vm2632 = vcmp.eq.f32.partialorder %v2631, 8.507059e+37
  %v2633 = vand.u32 %v2620, 2147483648
  %v2634 = vor.u32 1.1754944e-38, %v2633
  %v2635 = vsel %vm2632, %v2634, %v2630
  %v2636 = vmul.f32 1.0, %v2635
  %v2637 = vrcp.pop %v2621
  %v2638 = vmul.f32 %v2621, %v2637
  %v2639 = vsub.f32 1.0, %v2638
  %v2640 = vmul.f32 %v2637, %v2639
  %v2641 = vadd.f32 %v2637, %v2640
  %vm2642 = vweird.f32 %v2621
  %vm2643 = vweird.f32 %v2637
  %vm2644 = vmor %vm2642, %vm2643
  %v2645 = vsel %vm2644, %v2637, %v2641
  %v2646 = vand.u32 2147483647, %v2621
  %vm2647 = vcmp.eq.f32.partialorder %v2646, 8.507059e+37
  %v2648 = vand.u32 %v2621, 2147483648
  %v2649 = vor.u32 1.1754944e-38, %v2648
  %v2650 = vsel %vm2647, %v2649, %v2645
  %v2651 = vmul.f32 1.0, %v2650
  %v2652 = vmul.f32 %v2608, %v2636
  %v2653 = vmul.f32 %v2610, %v2651
  %v2654 = vpack.c.bf16 %v2653, %v2652
  %s2655 = scalar_lea.vmem %s13, 64
  %v2656 = vld [vmem:[%s2655] sm:$0xf]
  %v2657 = vld [vmem:[%s2655 + $0x4] sm:$0xf]
  %v2658 = vld [vmem:[%s2655 + $0x8] sm:$0xf]
  %v2659 = vld [vmem:[%s2655 + $0xc] sm:$0xf]
  %v2660 = vld [vmem:[%s2655 + $0x10] sm:$0xf]
  %v2661 = vld [vmem:[%s2655 + $0x14] sm:$0xf]
  %v2662 = vld [vmem:[%s2655 + $0x18] sm:$0xf]
  %v2663 = vld [vmem:[%s2655 + $0x1c] sm:$0xf]
  %v2664 = vld [vmem:[%s2655 + $0x20] sm:$0xf]
  %v2665 = vld [vmem:[%s2655 + $0x24] sm:$0xf]
  %v2666 = vld [vmem:[%s2655 + $0x28] sm:$0xf]
  %v2667 = vld [vmem:[%s2655 + $0x2c] sm:$0xf]
  %v2668 = vld [vmem:[%s2655 + $0x30] sm:$0xf]
  %v2669 = vld [vmem:[%s2655 + $0x34] sm:$0xf]
  %v2670 = vld [vmem:[%s2655 + $0x38] sm:$0xf]
  %v2671 = vld [vmem:[%s2655 + $0x3c] sm:$0xf]
  %s2672 = scalar_lea.vmem %s14, 1
  %v2673 = vld [vmem:[%s2672] sm:$0x1]
  %v2675 = vperm.slane %v2673, 0
  %v2693 = vunpack.c.l.b16 %v2656
  %v2694 = vunpack.c.l.b16 %v2657
  %v2695 = vunpack.c.l.b16 %v2658
  %v2696 = vunpack.c.l.b16 %v2659
  %v2697 = vunpack.c.l.b16 %v2660
  %v2698 = vunpack.c.l.b16 %v2661
  %v2699 = vunpack.c.l.b16 %v2662
  %v2700 = vunpack.c.l.b16 %v2663
  %v2701 = vunpack.c.l.b16 %v2664
  %v2702 = vunpack.c.l.b16 %v2665
  %v2703 = vunpack.c.l.b16 %v2666
  %v2704 = vunpack.c.l.b16 %v2667
  %v2705 = vunpack.c.l.b16 %v2668
  %v2706 = vunpack.c.l.b16 %v2669
  %v2707 = vunpack.c.l.b16 %v2670
  %v2708 = vunpack.c.l.b16 %v2671
  %v2709 = vpack.c.b16 %v2694, %v2693
  %v2710 = vpack.c.b16 %v2696, %v2695
  %v2711 = vpack.c.b16 %v2698, %v2697
  %v2712 = vpack.c.b16 %v2700, %v2699
  %v2713 = vpack.c.b16 %v2702, %v2701
  %v2714 = vpack.c.b16 %v2704, %v2703
  %v2715 = vpack.c.b16 %v2706, %v2705
  %v2716 = vpack.c.b16 %v2708, %v2707
  %2725 = vmatpush.bf16.msra.mxu0 %v2716
  %2726 = vmatpush.bf16.msra.mxu0 %v2715
  %2727 = vmatpush.bf16.msra.mxu0 %v2714
  %2728 = vmatpush.bf16.msra.mxu0 %v2713
  %2729 = vmatpush.bf16.msra.mxu0 %v2712
  %2730 = vmatpush.bf16.msra.mxu0 %v2711
  %2731 = vmatpush.bf16.msra.mxu0 %v2710
  %2732 = vmatpush.bf16.msra.mxu0 %v2709
  %2733 = vmatmul.bf16.gmra.mxu0 %v2654
  %v2734 = vpop.f32.mrf.mxu0
  %v2735 = vadd.f32 %v2675, %v2734
  %v2736 = vpop.f32.mrf.mxu0
  %v2737 = vadd.f32 %v2675, %v2736
  %2738 = vdwg.mxu0
  %v2739 = vadd.f32 %v2512, %v2735
  %v2740 = vadd.f32 %v2513, %v2737
  %v2741 = vld [vmem:[%s15] sm:$0x1]
  %v2742 = vld [vmem:[%s16] sm:$0x1]
  %v2743 = vsel %vm133, %v2739, 0.0
  %2744 = vadd.xlane.f32.xlu0 %v2743
  %v2745 = vpop.xlane.xlu0 %2744
  %v2746 = vsel %vm133, %v2740, 0.0
  %2747 = vadd.xlane.f32.xlu0 %v2746
  %v2748 = vpop.xlane.xlu0 %2747
  %v2749 = vmul.f32 %v2745, %v146
  %v2750 = vmul.f32 %v2748, %v146
  %v2751 = vsub.f32 %v2739, %v2749
  %v2752 = vsub.f32 %v2740, %v2750
  %v2753 = vmul.f32 %v2751, %v2751
  %v2754 = vmul.f32 %v2752, %v2752
  %v2755 = vsel %vm133, %v2753, 0.0
  %2756 = vadd.xlane.f32.xlu0 %v2755
  %v2757 = vpop.xlane.xlu0 %2756
  %v2758 = vsel %vm133, %v2754, 0.0
  %2759 = vadd.xlane.f32.xlu0 %v2758
  %v2760 = vpop.xlane.xlu0 %2759
  %v2761 = vmul.f32 %v2757, %v146
  %v2762 = vmul.f32 %v2760, %v146
  %v2763 = vadd.f32 %v2761, 1e-05
  %v2764 = vadd.f32 %v2762, 1e-05
  %v2765 = vrsqrt.pop %v2763
  %v2766 = vmul.f32 %v2765, %v2763
  %v2767 = vmul.f32 %v2766, %v2765
  %v2768 = vmul.f32 0.5, %v2767
  %v2769 = vsub.f32 1.5, %v2768
  %v2770 = vmul.f32 %v2765, %v2769
  %vm2771 = vweird.f32 %v2763
  %vm2772 = vweird.f32 %v2765
  %vm2773 = vmor %vm2771, %vm2772
  %v2774 = vsel %vm2773, %v2765, %v2770
  %v2775 = vrsqrt.pop %v2764
  %v2776 = vmul.f32 %v2775, %v2764
  %v2777 = vmul.f32 %v2776, %v2775
  %v2778 = vmul.f32 0.5, %v2777
  %v2779 = vsub.f32 1.5, %v2778
  %v2780 = vmul.f32 %v2775, %v2779
  %vm2781 = vweird.f32 %v2764
  %vm2782 = vweird.f32 %v2775
  %vm2783 = vmor %vm2781, %vm2782
  %v2784 = vsel %vm2783, %v2775, %v2780
  %v2785 = vmul.f32 %v2751, %v2774
  %v2786 = vmul.f32 %v2752, %v2784
  %v2788 = vperm.slane %v2741, 0
  %v2790 = vmul.f32 %v2785, %v2788
  %v2791 = vmul.f32 %v2786, %v2788
  %v2793 = vperm.slane %v2742, 0
  %v2795 = vadd.f32 %v2790, %v2793
  %v2796 = vadd.f32 %v2791, %v2793
  %2797 = vst.msk [vmem:[%s17] sm:$0xff] %vm133, %v2795
  %2798 = vst.msk [vmem:[%s17 + $0x8] sm:$0xff] %vm133, %v2796
  // Predicated region
  $region70: #{text_encoder_forward.1} parent=0 // pred_check
    _
  $region71: #{text_encoder_forward.1} parent=0 // pred_check_branch
    %2800 = sbr.rel (0) target = $region73
  $region72: #{text_encoder_forward.1} parent=0 // pred_region
    _
  $region73: #{text_encoder_forward.1} parent=0 // pred_fallthru
    _
  // Predicated region
  $region74: #{text_encoder_forward.1} parent=0 // pred_check
    _
  $region75: #{text_encoder_forward.1} parent=0 // pred_check_branch
    %2802 = sbr.rel (0) target = $region77
  $region76: #{text_encoder_forward.1} parent=0 // pred_region
    _
  $region77: #{text_encoder_forward.1} parent=0 // pred_fallthru
    _

</llo_original>
